<compile_context>
chip_gen: v6e
topology: v6e:2x2x1
jax: 0.10.0
libtpu: 0.0.40
codegen_flags: <defaults>
</compile_context>

<pallas_src>
import functools

import jax
import jax.numpy as jnp
from jax.experimental import pallas as pl
from jax.experimental.pallas import tpu as pltpu

_VMEM_LIMIT_BYTES = 48 * 1024 * 1024  # safe on all gens (v7x has 64 MiB physical)


def _tile_size():
    """Generation-specific adjacency tile (row-panel / K-panel) size."""
    try:
        vmem = pltpu.get_tpu_info().vmem_capacity_bytes
    except Exception:
        vmem = 64 * 1024 * 1024  # conservative (v7x)
    # v5e/v6e: 128 MiB physical VMEM -> 512-wide tiles; v7x: 64 MiB -> 256.
    return 512 if vmem >= 96 * 1024 * 1024 else 256


# --------------------------- GCN propagation layer ---------------------------
# One layer: out = maybe_relu( adj @ (h @ W) ), tiled as
#   grid = (row panel i ["parallel"], K panel k ["arbitrary", reduction last]).
# The (T, T) adj tile dominates DMA; the K-panel of h and the whole W are tiny
# and refetched per step; an f32 scratch accumulates across k.


def _gcn_layer_kernel(adj_ref, h_ref, w_ref, out_ref, acc_ref, *, active):
    k = pl.program_id(1)

    @pl.when(k == 0)
    def _():
        acc_ref[...] = jnp.zeros_like(acc_ref)

    # support for this K panel: (T, F_in) @ (F_in, F_out), f32 accumulate
    s = jnp.dot(h_ref[...], w_ref[...], preferred_element_type=jnp.float32)
    # propagate: (T, T) @ (T, F_out), bf16 MXU inputs with f32 accumulation
    acc_ref[...] += jnp.dot(adj_ref[...], s.astype(jnp.bfloat16),
                            preferred_element_type=jnp.float32)

    @pl.when(k == pl.num_programs(1) - 1)
    def _():
        r = acc_ref[...]
        if active:
            r = jnp.maximum(r, 0.0)
        out_ref[...] = r.astype(out_ref.dtype)


def _propagate(adj_b, h_b, w_b, *, active, out_dtype, tile):
    n_pad = adj_b.shape[0]
    f_in = h_b.shape[1]
    f_out = w_b.shape[1]
    grid = (n_pad // tile, n_pad // tile)
    # TODO(synk): sweep pipeline depth (pl.Buffered(3)) on the adj spec for
    # very large N if the adj DMA is exposed behind the tiny per-tile MXU work.
    return pl.pallas_call(
        functools.partial(_gcn_layer_kernel, active=active),
        out_shape=jax.ShapeDtypeStruct((n_pad, f_out), out_dtype),
        grid_spec=pltpu.PrefetchScalarGridSpec(
            num_scalar_prefetch=0,
            grid=grid,
            in_specs=[
                pl.BlockSpec((tile, tile), lambda i, k: (i, k)),    # adj tile
                pl.BlockSpec((tile, f_in), lambda i, k: (k, 0)),    # h K-panel
                pl.BlockSpec((f_in, f_out), lambda i, k: (0, 0)),   # W (whole)
            ],
            out_specs=pl.BlockSpec((tile, f_out), lambda i, k: (i, 0)),
            scratch_shapes=[pltpu.VMEM((tile, f_out), jnp.float32)],
        ),
        compiler_params=pltpu.CompilerParams(
            dimension_semantics=("parallel", "arbitrary"),
            vmem_limit_bytes=_VMEM_LIMIT_BYTES,
        ),
    )(adj_b, h_b, w_b)


# ----------------------- reconstruction: sigmoid(Z Z^T) ----------------------


def _recon_kernel(zr_ref, zc_ref, out_ref):
    zz = jax.lax.dot_general(zr_ref[...], zc_ref[...],
                             (((1,), (1,)), ((), ())),
                             preferred_element_type=jnp.float32)
    # sigmoid(x) = 0.5 * (1 + tanh(0.5 x)): one EUP op; scale/offset on VALU.
    out_ref[...] = (0.5 * (jnp.tanh(0.5 * zz) + 1.0)).astype(out_ref.dtype)


def _reconstruct(z_b, *, tile, out_dtype):
    n_pad, d = z_b.shape
    grid = (n_pad // tile, n_pad // tile)
    # TODO(synk): exploit symmetry (compute only i<=j blocks and XLU-transpose
    # the mirror) and/or bf16 writeback if downstream tolerates it.
    return pl.pallas_call(
        _recon_kernel,
        out_shape=jax.ShapeDtypeStruct((n_pad, n_pad), out_dtype),
        grid_spec=pltpu.PrefetchScalarGridSpec(
            num_scalar_prefetch=0,
            grid=grid,
            in_specs=[
                pl.BlockSpec((tile, d), lambda i, j: (i, 0)),
                pl.BlockSpec((tile, d), lambda i, j: (j, 0)),
            ],
            out_specs=pl.BlockSpec((tile, tile), lambda i, j: (i, j)),
        ),
        compiler_params=pltpu.CompilerParams(
            dimension_semantics=("parallel", "parallel"),
            vmem_limit_bytes=_VMEM_LIMIT_BYTES,
        ),
    )(z_b, z_b)


# ----------------------------------- wrapper ---------------------------------


def gcn_encoder_forward(x, adj, params):
    """z, z_adj = GCN_encoder.forward(x, adj) with a dense adjacency."""
    # TODO(synk): torch.spmm uses a sparse adjacency; treated dense here.
    w1, w2, w3 = params
    n = x.shape[0]
    tile = _tile_size()
    n_pad = ((n + tile - 1) // tile) * tile
    pad = n_pad - n

    bf16 = jnp.bfloat16
    # bf16 at the HBM boundary: halves the dominant adj stream (read 3x) and
    # halves its VMEM tile footprint; every dot accumulates in f32.
    adj_b = jnp.pad(adj.astype(bf16), ((0, pad), (0, pad)))
    x_b = jnp.pad(x.astype(bf16), ((0, pad), (0, 0)))
    w1_b, w2_b, w3_b = (w.astype(bf16) for w in (w1, w2, w3))

    # intermediates stay bf16 (tiny N x <=64 HBM round-trips between layers)
    z1 = _propagate(adj_b, x_b, w1_b, active=True, out_dtype=bf16, tile=tile)
    z2 = _propagate(adj_b, z1, w2_b, active=True, out_dtype=bf16, tile=tile)
    # TODO(synk): z's last dim of 16 gives masked vst stores; it is only N x 16.
    z_pad = _propagate(adj_b, z2, w3_b, active=False, out_dtype=jnp.float32,
                       tile=tile)

    z_adj_pad = _reconstruct(z_pad.astype(bf16), tile=tile,
                             out_dtype=jnp.float32)
    return z_pad[:n], z_adj_pad[:n, :n]


# pure-JAX f32 reference (matches the PyTorch module) for a sanity check
def gcn_encoder_reference(x, adj, params):
    w1, w2, w3 = params
    z1 = jnp.maximum(adj @ (x @ w1), 0.0)
    z2 = jnp.maximum(adj @ (z1 @ w2), 0.0)
    z = adj @ (z2 @ w3)
    z_adj = jax.nn.sigmoid(z @ z.T)
    return z, z_adj


# ------------------------------ parameter init -------------------------------


def xavier_uniform(key, fan_in, fan_out):
    bound = jnp.sqrt(6.0 / (fan_in + fan_out))
    return jax.random.uniform(key, (fan_in, fan_out), jnp.float32,
                              minval=-bound, maxval=bound)


def init_gcn_encoder(key, gae_n_enc_1, gae_n_enc_2, gae_n_enc_3, n_input):
    k1, k2, k3 = jax.random.split(key, 3)
    return (xavier_uniform(k1, n_input, gae_n_enc_1),
            xavier_uniform(k2, gae_n_enc_1, gae_n_enc_2),
            xavier_uniform(k3, gae_n_enc_2, gae_n_enc_3))


# ------------------------------------ main -----------------------------------


if __name__ == "__main__":
    N = 600              # exercises padding and a multi-tile grid
    n_input = 32
    gae_n_enc_1, gae_n_enc_2, gae_n_enc_3 = 64, 32, 16

    key = jax.random.PRNGKey(0)
    kx, kadj, kparams = jax.random.split(key, 3)

    # node features
    x = jax.random.normal(kx, (N, n_input), jnp.float32)

    # deterministic symmetric row-normalized adjacency (dense stand-in)
    a = jax.random.uniform(kadj, (N, N), jnp.float32)
    a = (a + a.T) * 0.5 + jnp.eye(N, dtype=jnp.float32)
    adj = a / jnp.sum(a, axis=1, keepdims=True)

    params = init_gcn_encoder(kparams, gae_n_enc_1, gae_n_enc_2,
                              gae_n_enc_3, n_input)

    z, z_adj = jax.jit(gcn_encoder_forward)(x, adj, params)
    jax.block_until_ready((z, z_adj))

    assert z.shape == (N, gae_n_enc_3)
    assert z_adj.shape == (N, N)

    # loose tolerance vs f32 reference (kernel uses bf16 MXU inputs)
    z_ref, z_adj_ref = gcn_encoder_reference(x, adj, params)
    assert jnp.allclose(z, z_ref, atol=2e-2), float(jnp.max(jnp.abs(z - z_ref)))
    assert jnp.allclose(z_adj, z_adj_ref, atol=2e-2), \
        float(jnp.max(jnp.abs(z_adj - z_adj_ref)))

    print("KERNEL_OK")
</pallas_src>

<mosaic_0001>
module attributes {stable_mosaic.version = 11 : i64} {
  func.func @_gcn_layer_kernel(%arg0: i32, %arg1: i32, %arg2: memref<256x256xbf16, #tpu.memory_space<vmem>>, %arg3: memref<256x32xbf16, #tpu.memory_space<vmem>>, %arg4: memref<32x64xbf16, #tpu.memory_space<vmem>>, %arg5: memref<256x64xbf16, #tpu.memory_space<vmem>>, %arg6: memref<256x64xf32, #tpu.memory_space<vmem>>) attributes {dimension_semantics = [#tpu.dimension_semantics<parallel>, #tpu.dimension_semantics<arbitrary>], iteration_bounds = array<i64: 3, 3>, scalar_prefetch = 0 : i64, scratch_operands = 1 : i64, tpu.core_type = #tpu.core_type<tc>, window_params = [{transform_indices = @transform_0, window_bounds = array<i64: 256, 256>}, {transform_indices = @transform_1, window_bounds = array<i64: 256, 32>}, {pipeline_mode = #tpu.pipeline_mode<synchronous>, transform_indices = @transform_2, window_bounds = array<i64: 32, 64>}, {transform_indices = @transform_3, window_bounds = array<i64: 256, 64>}]} {
    %c0_i32 = arith.constant 0 : i32
    %0 = arith.cmpi eq, %arg1, %c0_i32 : i32
    %1 = arith.extui %0 : i1 to i32
    %c0_i32_0 = arith.constant 0 : i32
    %2 = arith.cmpi ne, %1, %c0_i32_0 : i32
    scf.if %2 {
      %cst_12 = arith.constant 0.000000e+00 : f32
      %15 = vector.broadcast %cst_12 : f32 to vector<256x64xf32>
      %c0_13 = arith.constant 0 : index
      %c0_14 = arith.constant 0 : index
      %16 = vector.load %arg6[%c0_13, %c0_14] : memref<256x64xf32, #tpu.memory_space<vmem>>, vector<256x64xf32>
      tpu.vector_store %arg6[%c0_13, %c0_14], %15 {strides = array<i32>} : memref<256x64xf32, #tpu.memory_space<vmem>>, vector<256x64xf32>,
    } else {
    }
    %c0 = arith.constant 0 : index
    %c0_1 = arith.constant 0 : index
    %3 = vector.load %arg3[%c0, %c0_1] : memref<256x32xbf16, #tpu.memory_space<vmem>>, vector<256x32xbf16>
    %c0_2 = arith.constant 0 : index
    %c0_3 = arith.constant 0 : index
    %4 = vector.load %arg4[%c0_2, %c0_3] : memref<32x64xbf16, #tpu.memory_space<vmem>>, vector<32x64xbf16>
    %cst = arith.constant dense<0.000000e+00> : vector<256x64xf32>
    %5 = tpu.matmul %3, %4, %cst {dimension_numbers = #tpu.dot_dimension_numbers<[1], [0], [0], [1], [0, 0, 1, 1], [], []>} : vector<256x32xbf16>, vector<32x64xbf16>, vector<256x64xf32> -> vector<256x64xf32>
    %c0_4 = arith.constant 0 : index
    %c0_5 = arith.constant 0 : index
    %6 = vector.load %arg6[%c0_4, %c0_5] : memref<256x64xf32, #tpu.memory_space<vmem>>, vector<256x64xf32>
    %c0_6 = arith.constant 0 : index
    %c0_7 = arith.constant 0 : index
    %7 = vector.load %arg2[%c0_6, %c0_7] : memref<256x256xbf16, #tpu.memory_space<vmem>>, vector<256x256xbf16>
    %8 = arith.truncf %5 : vector<256x64xf32> to vector<256x64xbf16>
    %cst_8 = arith.constant dense<0.000000e+00> : vector<256x64xf32>
    %9 = tpu.matmul %7, %8, %cst_8 {dimension_numbers = #tpu.dot_dimension_numbers<[1], [0], [0], [1], [0, 0, 1, 1], [], []>} : vector<256x256xbf16>, vector<256x64xbf16>, vector<256x64xf32> -> vector<256x64xf32>
    %10 = arith.addf %6, %9 : vector<256x64xf32>
    %c0_9 = arith.constant 0 : index
    %c0_10 = arith.constant 0 : index
    %11 = vector.load %arg6[%c0_9, %c0_10] : memref<256x64xf32, #tpu.memory_space<vmem>>, vector<256x64xf32>
    tpu.vector_store %arg6[%c0_9, %c0_10], %10 {strides = array<i32>} : memref<256x64xf32, #tpu.memory_space<vmem>>, vector<256x64xf32>,
    %c2_i32 = arith.constant 2 : i32
    %12 = arith.cmpi eq, %arg1, %c2_i32 : i32
    %13 = arith.extui %12 : i1 to i32
    %c0_i32_11 = arith.constant 0 : i32
    %14 = arith.cmpi ne, %13, %c0_i32_11 : i32
    scf.if %14 {
      %c0_12 = arith.constant 0 : index
      %c0_13 = arith.constant 0 : index
      %15 = vector.load %arg6[%c0_12, %c0_13] : memref<256x64xf32, #tpu.memory_space<vmem>>, vector<256x64xf32>
      %cst_14 = arith.constant 0.000000e+00 : f32
      %16 = vector.broadcast %cst_14 : f32 to vector<256x64xf32>
      %17 = arith.maximumf %15, %16 : vector<256x64xf32>
      %18 = arith.truncf %17 : vector<256x64xf32> to vector<256x64xbf16>
      %c0_15 = arith.constant 0 : index
      %c0_16 = arith.constant 0 : index
      %19 = vector.load %arg5[%c0_15, %c0_16] : memref<256x64xbf16, #tpu.memory_space<vmem>>, vector<256x64xbf16>
      tpu.vector_store %arg5[%c0_15, %c0_16], %18 {strides = array<i32>} : memref<256x64xbf16, #tpu.memory_space<vmem>>, vector<256x64xbf16>,
    } else {
    }
    return
  }
  func.func @transform_0(%arg0: i32, %arg1: i32) -> (i32, i32) {
    %c0_i32 = arith.constant 0 : i32
    return %arg0, %arg1 : i32, i32
  }
  func.func @transform_1(%arg0: i32, %arg1: i32) -> (i32, i32) {
    %c0_i32 = arith.constant 0 : i32
    %c0_i32_0 = arith.constant 0 : i32
    return %arg1, %c0_i32 : i32, i32
  }
  func.func @transform_2(%arg0: i32, %arg1: i32) -> (i32, i32) {
    %c0_i32 = arith.constant 0 : i32
    %c0_i32_0 = arith.constant 0 : i32
    %c0_i32_1 = arith.constant 0 : i32
    return %c0_i32, %c0_i32_0 : i32, i32
  }
  func.func @transform_3(%arg0: i32, %arg1: i32) -> (i32, i32) {
    %c0_i32 = arith.constant 0 : i32
    %c0_i32_0 = arith.constant 0 : i32
    return %arg0, %c0_i32 : i32, i32
  }
}

module attributes {stable_mosaic.version = 11 : i64} {
  func.func @_gcn_layer_kernel(%arg0: i32, %arg1: i32, %arg2: memref<256x256xbf16, #tpu.memory_space<vmem>>, %arg3: memref<256x32xbf16, #tpu.memory_space<vmem>>, %arg4: memref<32x16xbf16, #tpu.memory_space<vmem>>, %arg5: memref<256x16xf32, #tpu.memory_space<vmem>>, %arg6: memref<256x16xf32, #tpu.memory_space<vmem>>) attributes {dimension_semantics = [#tpu.dimension_semantics<parallel>, #tpu.dimension_semantics<arbitrary>], iteration_bounds = array<i64: 3, 3>, scalar_prefetch = 0 : i64, scratch_operands = 1 : i64, tpu.core_type = #tpu.core_type<tc>, window_params = [{transform_indices = @transform_0, window_bounds = array<i64: 256, 256>}, {transform_indices = @transform_1, window_bounds = array<i64: 256, 32>}, {pipeline_mode = #tpu.pipeline_mode<synchronous>, transform_indices = @transform_2, window_bounds = array<i64: 32, 16>}, {transform_indices = @transform_3, window_bounds = array<i64: 256, 16>}]} {
    %c0_i32 = arith.constant 0 : i32
    %0 = arith.cmpi eq, %arg1, %c0_i32 : i32
    %1 = arith.extui %0 : i1 to i32
    %c0_i32_0 = arith.constant 0 : i32
    %2 = arith.cmpi ne, %1, %c0_i32_0 : i32
    scf.if %2 {
      %cst_12 = arith.constant 0.000000e+00 : f32
      %15 = vector.broadcast %cst_12 : f32 to vector<256x16xf32>
      %c0_13 = arith.constant 0 : index
      %c0_14 = arith.constant 0 : index
      %16 = vector.load %arg6[%c0_13, %c0_14] : memref<256x16xf32, #tpu.memory_space<vmem>>, vector<256x16xf32>
      tpu.vector_store %arg6[%c0_13, %c0_14], %15 {strides = array<i32>} : memref<256x16xf32, #tpu.memory_space<vmem>>, vector<256x16xf32>,
    } else {
    }
    %c0 = arith.constant 0 : index
    %c0_1 = arith.constant 0 : index
    %3 = vector.load %arg3[%c0, %c0_1] : memref<256x32xbf16, #tpu.memory_space<vmem>>, vector<256x32xbf16>
    %c0_2 = arith.constant 0 : index
    %c0_3 = arith.constant 0 : index
    %4 = vector.load %arg4[%c0_2, %c0_3] : memref<32x16xbf16, #tpu.memory_space<vmem>>, vector<32x16xbf16>
    %cst = arith.constant dense<0.000000e+00> : vector<256x16xf32>
    %5 = tpu.matmul %3, %4, %cst {dimension_numbers = #tpu.dot_dimension_numbers<[1], [0], [0], [1], [0, 0, 1, 1], [], []>} : vector<256x32xbf16>, vector<32x16xbf16>, vector<256x16xf32> -> vector<256x16xf32>
    %c0_4 = arith.constant 0 : index
    %c0_5 = arith.constant 0 : index
    %6 = vector.load %arg6[%c0_4, %c0_5] : memref<256x16xf32, #tpu.memory_space<vmem>>, vector<256x16xf32>
    %c0_6 = arith.constant 0 : index
    %c0_7 = arith.constant 0 : index
    %7 = vector.load %arg2[%c0_6, %c0_7] : memref<256x256xbf16, #tpu.memory_space<vmem>>, vector<256x256xbf16>
    %8 = arith.truncf %5 : vector<256x16xf32> to vector<256x16xbf16>
    %cst_8 = arith.constant dense<0.000000e+00> : vector<256x16xf32>
    %9 = tpu.matmul %7, %8, %cst_8 {dimension_numbers = #tpu.dot_dimension_numbers<[1], [0], [0], [1], [0, 0, 1, 1], [], []>} : vector<256x256xbf16>, vector<256x16xbf16>, vector<256x16xf32> -> vector<256x16xf32>
    %10 = arith.addf %6, %9 : vector<256x16xf32>
    %c0_9 = arith.constant 0 : index
    %c0_10 = arith.constant 0 : index
    %11 = vector.load %arg6[%c0_9, %c0_10] : memref<256x16xf32, #tpu.memory_space<vmem>>, vector<256x16xf32>
    tpu.vector_store %arg6[%c0_9, %c0_10], %10 {strides = array<i32>} : memref<256x16xf32, #tpu.memory_space<vmem>>, vector<256x16xf32>,
    %c2_i32 = arith.constant 2 : i32
    %12 = arith.cmpi eq, %arg1, %c2_i32 : i32
    %13 = arith.extui %12 : i1 to i32
    %c0_i32_11 = arith.constant 0 : i32
    %14 = arith.cmpi ne, %13, %c0_i32_11 : i32
    scf.if %14 {
      %c0_12 = arith.constant 0 : index
      %c0_13 = arith.constant 0 : index
      %15 = vector.load %arg6[%c0_12, %c0_13] : memref<256x16xf32, #tpu.memory_space<vmem>>, vector<256x16xf32>
      %c0_14 = arith.constant 0 : index
      %c0_15 = arith.constant 0 : index
      %16 = vector.load %arg5[%c0_14, %c0_15] : memref<256x16xf32, #tpu.memory_space<vmem>>, vector<256x16xf32>
      tpu.vector_store %arg5[%c0_14, %c0_15], %15 {strides = array<i32>} : memref<256x16xf32, #tpu.memory_space<vmem>>, vector<256x16xf32>,
    } else {
    }
    return
  }
  func.func @transform_0(%arg0: i32, %arg1: i32) -> (i32, i32) {
    %c0_i32 = arith.constant 0 : i32
    return %arg0, %arg1 : i32, i32
  }
  func.func @transform_1(%arg0: i32, %arg1: i32) -> (i32, i32) {
    %c0_i32 = arith.constant 0 : i32
    %c0_i32_0 = arith.constant 0 : i32
    return %arg1, %c0_i32 : i32, i32
  }
  func.func @transform_2(%arg0: i32, %arg1: i32) -> (i32, i32) {
    %c0_i32 = arith.constant 0 : i32
    %c0_i32_0 = arith.constant 0 : i32
    %c0_i32_1 = arith.constant 0 : i32
    return %c0_i32, %c0_i32_0 : i32, i32
  }
  func.func @transform_3(%arg0: i32, %arg1: i32) -> (i32, i32) {
    %c0_i32 = arith.constant 0 : i32
    %c0_i32_0 = arith.constant 0 : i32
    return %arg0, %c0_i32 : i32, i32
  }
}

module attributes {stable_mosaic.version = 11 : i64} {
  func.func @_gcn_layer_kernel(%arg0: i32, %arg1: i32, %arg2: memref<256x256xbf16, #tpu.memory_space<vmem>>, %arg3: memref<256x64xbf16, #tpu.memory_space<vmem>>, %arg4: memref<64x32xbf16, #tpu.memory_space<vmem>>, %arg5: memref<256x32xbf16, #tpu.memory_space<vmem>>, %arg6: memref<256x32xf32, #tpu.memory_space<vmem>>) attributes {dimension_semantics = [#tpu.dimension_semantics<parallel>, #tpu.dimension_semantics<arbitrary>], iteration_bounds = array<i64: 3, 3>, scalar_prefetch = 0 : i64, scratch_operands = 1 : i64, tpu.core_type = #tpu.core_type<tc>, window_params = [{transform_indices = @transform_0, window_bounds = array<i64: 256, 256>}, {transform_indices = @transform_1, window_bounds = array<i64: 256, 64>}, {pipeline_mode = #tpu.pipeline_mode<synchronous>, transform_indices = @transform_2, window_bounds = array<i64: 64, 32>}, {transform_indices = @transform_3, window_bounds = array<i64: 256, 32>}]} {
    %c0_i32 = arith.constant 0 : i32
    %0 = arith.cmpi eq, %arg1, %c0_i32 : i32
    %1 = arith.extui %0 : i1 to i32
    %c0_i32_0 = arith.constant 0 : i32
    %2 = arith.cmpi ne, %1, %c0_i32_0 : i32
    scf.if %2 {
      %cst_12 = arith.constant 0.000000e+00 : f32
      %15 = vector.broadcast %cst_12 : f32 to vector<256x32xf32>
      %c0_13 = arith.constant 0 : index
      %c0_14 = arith.constant 0 : index
      %16 = vector.load %arg6[%c0_13, %c0_14] : memref<256x32xf32, #tpu.memory_space<vmem>>, vector<256x32xf32>
      tpu.vector_store %arg6[%c0_13, %c0_14], %15 {strides = array<i32>} : memref<256x32xf32, #tpu.memory_space<vmem>>, vector<256x32xf32>,
    } else {
    }
    %c0 = arith.constant 0 : index
    %c0_1 = arith.constant 0 : index
    %3 = vector.load %arg3[%c0, %c0_1] : memref<256x64xbf16, #tpu.memory_space<vmem>>, vector<256x64xbf16>
    %c0_2 = arith.constant 0 : index
    %c0_3 = arith.constant 0 : index
    %4 = vector.load %arg4[%c0_2, %c0_3] : memref<64x32xbf16, #tpu.memory_space<vmem>>, vector<64x32xbf16>
    %cst = arith.constant dense<0.000000e+00> : vector<256x32xf32>
    %5 = tpu.matmul %3, %4, %cst {dimension_numbers = #tpu.dot_dimension_numbers<[1], [0], [0], [1], [0, 0, 1, 1], [], []>} : vector<256x64xbf16>, vector<64x32xbf16>, vector<256x32xf32> -> vector<256x32xf32>
    %c0_4 = arith.constant 0 : index
    %c0_5 = arith.constant 0 : index
    %6 = vector.load %arg6[%c0_4, %c0_5] : memref<256x32xf32, #tpu.memory_space<vmem>>, vector<256x32xf32>
    %c0_6 = arith.constant 0 : index
    %c0_7 = arith.constant 0 : index
    %7 = vector.load %arg2[%c0_6, %c0_7] : memref<256x256xbf16, #tpu.memory_space<vmem>>, vector<256x256xbf16>
    %8 = arith.truncf %5 : vector<256x32xf32> to vector<256x32xbf16>
    %cst_8 = arith.constant dense<0.000000e+00> : vector<256x32xf32>
    %9 = tpu.matmul %7, %8, %cst_8 {dimension_numbers = #tpu.dot_dimension_numbers<[1], [0], [0], [1], [0, 0, 1, 1], [], []>} : vector<256x256xbf16>, vector<256x32xbf16>, vector<256x32xf32> -> vector<256x32xf32>
    %10 = arith.addf %6, %9 : vector<256x32xf32>
    %c0_9 = arith.constant 0 : index
    %c0_10 = arith.constant 0 : index
    %11 = vector.load %arg6[%c0_9, %c0_10] : memref<256x32xf32, #tpu.memory_space<vmem>>, vector<256x32xf32>
    tpu.vector_store %arg6[%c0_9, %c0_10], %10 {strides = array<i32>} : memref<256x32xf32, #tpu.memory_space<vmem>>, vector<256x32xf32>,
    %c2_i32 = arith.constant 2 : i32
    %12 = arith.cmpi eq, %arg1, %c2_i32 : i32
    %13 = arith.extui %12 : i1 to i32
    %c0_i32_11 = arith.constant 0 : i32
    %14 = arith.cmpi ne, %13, %c0_i32_11 : i32
    scf.if %14 {
      %c0_12 = arith.constant 0 : index
      %c0_13 = arith.constant 0 : index
      %15 = vector.load %arg6[%c0_12, %c0_13] : memref<256x32xf32, #tpu.memory_space<vmem>>, vector<256x32xf32>
      %cst_14 = arith.constant 0.000000e+00 : f32
      %16 = vector.broadcast %cst_14 : f32 to vector<256x32xf32>
      %17 = arith.maximumf %15, %16 : vector<256x32xf32>
      %18 = arith.truncf %17 : vector<256x32xf32> to vector<256x32xbf16>
      %c0_15 = arith.constant 0 : index
      %c0_16 = arith.constant 0 : index
      %19 = vector.load %arg5[%c0_15, %c0_16] : memref<256x32xbf16, #tpu.memory_space<vmem>>, vector<256x32xbf16>
      tpu.vector_store %arg5[%c0_15, %c0_16], %18 {strides = array<i32>} : memref<256x32xbf16, #tpu.memory_space<vmem>>, vector<256x32xbf16>,
    } else {
    }
    return
  }
  func.func @transform_0(%arg0: i32, %arg1: i32) -> (i32, i32) {
    %c0_i32 = arith.constant 0 : i32
    return %arg0, %arg1 : i32, i32
  }
  func.func @transform_1(%arg0: i32, %arg1: i32) -> (i32, i32) {
    %c0_i32 = arith.constant 0 : i32
    %c0_i32_0 = arith.constant 0 : i32
    return %arg1, %c0_i32 : i32, i32
  }
  func.func @transform_2(%arg0: i32, %arg1: i32) -> (i32, i32) {
    %c0_i32 = arith.constant 0 : i32
    %c0_i32_0 = arith.constant 0 : i32
    %c0_i32_1 = arith.constant 0 : i32
    return %c0_i32, %c0_i32_0 : i32, i32
  }
  func.func @transform_3(%arg0: i32, %arg1: i32) -> (i32, i32) {
    %c0_i32 = arith.constant 0 : i32
    %c0_i32_0 = arith.constant 0 : i32
    return %arg0, %c0_i32 : i32, i32
  }
}

module attributes {stable_mosaic.version = 11 : i64} {
  func.func @_recon_kernel(%arg0: i32, %arg1: i32, %arg2: memref<256x16xbf16, #tpu.memory_space<vmem>>, %arg3: memref<256x16xbf16, #tpu.memory_space<vmem>>, %arg4: memref<256x256xf32, #tpu.memory_space<vmem>>) attributes {dimension_semantics = [#tpu.dimension_semantics<parallel>, #tpu.dimension_semantics<parallel>], iteration_bounds = array<i64: 3, 3>, scalar_prefetch = 0 : i64, scratch_operands = 0 : i64, tpu.core_type = #tpu.core_type<tc>, window_params = [{transform_indices = @transform_0, window_bounds = array<i64: 256, 16>}, {transform_indices = @transform_1, window_bounds = array<i64: 256, 16>}, {transform_indices = @transform_2, window_bounds = array<i64: 256, 256>}]} {
    %c0 = arith.constant 0 : index
    %c0_0 = arith.constant 0 : index
    %0 = vector.load %arg2[%c0, %c0_0] : memref<256x16xbf16, #tpu.memory_space<vmem>>, vector<256x16xbf16>
    %c0_1 = arith.constant 0 : index
    %c0_2 = arith.constant 0 : index
    %1 = vector.load %arg3[%c0_1, %c0_2] : memref<256x16xbf16, #tpu.memory_space<vmem>>, vector<256x16xbf16>
    %cst = arith.constant dense<0.000000e+00> : vector<256x256xf32>
    %2 = tpu.matmul %0, %1, %cst {dimension_numbers = #tpu.dot_dimension_numbers<[1], [1], [0], [0], [0, 0, 1, 0], [], []>} : vector<256x16xbf16>, vector<256x16xbf16>, vector<256x256xf32> -> vector<256x256xf32>
    %cst_3 = arith.constant 5.000000e-01 : f32
    %3 = vector.broadcast %cst_3 : f32 to vector<256x256xf32>
    %4 = arith.mulf %3, %2 : vector<256x256xf32>
    %5 = math.tanh %4 : vector<256x256xf32>
    %cst_4 = arith.constant 1.000000e+00 : f32
    %6 = vector.broadcast %cst_4 : f32 to vector<256x256xf32>
    %7 = arith.addf %5, %6 : vector<256x256xf32>
    %cst_5 = arith.constant 5.000000e-01 : f32
    %8 = vector.broadcast %cst_5 : f32 to vector<256x256xf32>
    %9 = arith.mulf %8, %7 : vector<256x256xf32>
    %c0_6 = arith.constant 0 : index
    %c0_7 = arith.constant 0 : index
    %10 = vector.load %arg4[%c0_6, %c0_7] : memref<256x256xf32, #tpu.memory_space<vmem>>, vector<256x256xf32>
    tpu.vector_store %arg4[%c0_6, %c0_7], %9 {strides = array<i32>} : memref<256x256xf32, #tpu.memory_space<vmem>>, vector<256x256xf32>,
    return
  }
  func.func @transform_0(%arg0: i32, %arg1: i32) -> (i32, i32) {
    %c0_i32 = arith.constant 0 : i32
    %c0_i32_0 = arith.constant 0 : i32
    return %arg0, %c0_i32 : i32, i32
  }
  func.func @transform_1(%arg0: i32, %arg1: i32) -> (i32, i32) {
    %c0_i32 = arith.constant 0 : i32
    %c0_i32_0 = arith.constant 0 : i32
    return %arg1, %c0_i32 : i32, i32
  }
  func.func @transform_2(%arg0: i32, %arg1: i32) -> (i32, i32) {
    %c0_i32 = arith.constant 0 : i32
    return %arg0, %arg1 : i32, i32
  }
}

</mosaic_0001>

<llo_original>
// kernel: gcn_encoder_forward.6
$region0: #{gcn_encoder_forward.6}
  #allocation0 [shape = 'u32[]', space=smem, size = 0x4, offset = 0x4, fixed_abs, tag = 'smem constant byte address 0x4 - core index']
  #allocation1 [shape = 'u32[144,128]{1,0:T(1,128)}', space=vmem, size = 0x12000, scoped, tag = 'internal scratch']
  #allocation2 [shape = 'f32[256,16]{1,0:T(8,128)}', space=vmem, size = 0x20000, scoped, tag = 'scratch operand']
  %s0 = inlined_call_operand.vmem [shape: bf16[768,768], index: 0, kind: input, shape index: {}]
  %s1 = inlined_call_operand.vmem [shape: bf16[768,32], index: 1, kind: input, shape index: {}]
  %s2 = inlined_call_operand.vmem [shape: bf16[32,16], index: 2, kind: input, shape index: {}]
  %s3 = inlined_call_operand.vmem [shape: f32[768,16], index: 3, kind: output, shape index: {}]
  %s4 = sld [smem:[#allocation0]]
  $region91: #{gcn_encoder_forward.6} parent=0
    _
  %s6 = ssub.s32 1, %s4
  %s7 = scalar_select 0, %s6, %s4
  $region1: #{gcn_encoder_forward.6} parent=0
    #allocation3 [shape = 'u8[262144]{0}', space=vmem, size = 0x40000, scoped, tag = 'input window, operand 0']
    loop: start=0, step=1, limit=11
    $region2: #{gcn_encoder_forward.6} parent=1 // loop_pre_header
      _
    $region3: #{gcn_encoder_forward.6} parent=1 // loop_header
      %s9 = sphi 0, %s13
      %p10 = scmp.ge.s32.totalorder %s9, 11
      %s16 = sphi 0, %s28
      %s17 = sphi 0, %s24
      %s18 = sphi 0, %s16
      %s19 = sphi 0, %s17
      %s20 = sphi 0, %s18
      %s21 = sphi 0, %s19
      %s33 = sphi 0, %s35
      %s36 = sphi 0, %s33
      %s37 = sphi 0, %s36
      %s53 = sphi 0, %s37
      %s59 = sphi 0, %s61
      %s62 = sphi 0, %s59
      %s63 = sphi 0, %s62
      %s79 = sphi 0, %s63
      %s83 = sphi 0, %s83
      %s85 = sphi 0, %s83
      %s86 = sphi 0, %s85
      %s100 = sphi 0, %s86
      %s106 = sphi 0, %s108
      %s109 = sphi 0, %s106
      %s110 = sphi 0, %s109
      %s126 = sphi 0, %s110
    $region4: #{gcn_encoder_forward.6} parent=1 // loop_header_branch
      %12 = sbr.rel (%p10) target = $region8
    $region5: #{gcn_encoder_forward.6} parent=1 // loop_body
      %s14 = ssub.s32 %s9, 1
      %s15 = ssub.s32 %s9, 2
      %s22 = sadd.s32 1, %s17
      %p23 = scmp.ge.s32.totalorder %s22, 3
      %s24 = scalar_select %p23, 0, %s22
      %s25 = sadd.s32 1, %s16
      %s26 = scalar_select %p23, %s25, %s16
      %p27 = scmp.ge.s32.totalorder %s26, 3
      %s28 = scalar_select %p27, 0, %s26
      %s29 = ssub.s32 %s16, %s28
      %s30 = ssub.s32 %s17, %s24
      %s31 = sor.u32 %s29, %s30
      %p32 = scmp.eq.s32.totalorder %s31, 0
      %s34 = sadd.s32 %s33, 1
      %s35 = scalar_select %p32, %s33, %s34
      %p38 = pneg %p32
      %p39 = scmp.eq.s32.totalorder %s9, 8
      %p40 = por %p38, %p39
      %p41 = scmp.ne.s32.totalorder %s33, %s36
      %p42 = scmp.eq.s32.totalorder %s9, 0
      %p43 = por %p41, %p42
      %p44 = scmp.ne.s32.totalorder %s33, %s36
      %p45 = scmp.eq.s32.totalorder %s14, 8
      %p46 = por %p44, %p45
      %p47 = scmp.ne.s32.totalorder %s36, %s37
      %p48 = scmp.eq.s32.totalorder %s14, 0
      %p49 = por %p47, %p48
      %p50 = scmp.ne.s32.totalorder %s36, %s37
      %p51 = scmp.eq.s32.totalorder %s15, 8
      %p52 = por %p50, %p51
      %p54 = scmp.ne.s32.totalorder %s37, %s53
      %p55 = scmp.eq.s32.totalorder %s15, 0
      %p56 = por %p54, %p55
      %s57 = ssub.s32 %s17, %s24
      %p58 = scmp.eq.s32.totalorder %s57, 0
      %s60 = sadd.s32 %s59, 1
      %s61 = scalar_select %p58, %s59, %s60
      %p64 = pneg %p58
      %p65 = scmp.eq.s32.totalorder %s9, 8
      %p66 = por %p64, %p65
      %p67 = scmp.ne.s32.totalorder %s59, %s62
      %p68 = scmp.eq.s32.totalorder %s9, 0
      %p69 = por %p67, %p68
      %p70 = scmp.ne.s32.totalorder %s59, %s62
      %p71 = scmp.eq.s32.totalorder %s14, 8
      %p72 = por %p70, %p71
      %p73 = scmp.ne.s32.totalorder %s62, %s63
      %p74 = scmp.eq.s32.totalorder %s14, 0
      %p75 = por %p73, %p74
      %p76 = scmp.ne.s32.totalorder %s62, %s63
      %p77 = scmp.eq.s32.totalorder %s15, 8
      %p78 = por %p76, %p77
      %p80 = scmp.ne.s32.totalorder %s63, %s79
      %p81 = scmp.eq.s32.totalorder %s15, 0
      %p82 = por %p80, %p81
      %s84 = sadd.s32 %s83, 1
      %p87 = scmp.eq.s32.totalorder %s9, 8
      %p88 = scmp.ne.s32.totalorder %s83, %s85
      %p89 = scmp.eq.s32.totalorder %s9, 0
      %p90 = por %p88, %p89
      %p91 = scmp.ne.s32.totalorder %s83, %s85
      %p92 = scmp.eq.s32.totalorder %s14, 8
      %p93 = por %p91, %p92
      %p94 = scmp.ne.s32.totalorder %s85, %s86
      %p95 = scmp.eq.s32.totalorder %s14, 0
      %p96 = por %p94, %p95
      %p97 = scmp.ne.s32.totalorder %s85, %s86
      %p98 = scmp.eq.s32.totalorder %s15, 8
      %p99 = por %p97, %p98
      %p101 = scmp.ne.s32.totalorder %s86, %s100
      %p102 = scmp.eq.s32.totalorder %s15, 0
      %p103 = por %p101, %p102
      %s104 = ssub.s32 %s16, %s28
      %p105 = scmp.eq.s32.totalorder %s104, 0
      %s107 = sadd.s32 %s106, 1
      %s108 = scalar_select %p105, %s106, %s107
      %p111 = pneg %p105
      %p112 = scmp.eq.s32.totalorder %s9, 8
      %p113 = por %p111, %p112
      %p114 = scmp.ne.s32.totalorder %s106, %s109
      %p115 = scmp.eq.s32.totalorder %s9, 0
      %p116 = por %p114, %p115
      %p117 = scmp.ne.s32.totalorder %s106, %s109
      %p118 = scmp.eq.s32.totalorder %s14, 8
      %p119 = por %p117, %p118
      %p120 = scmp.ne.s32.totalorder %s109, %s110
      %p121 = scmp.eq.s32.totalorder %s14, 0
      %p122 = por %p120, %p121
      %p123 = scmp.ne.s32.totalorder %s109, %s110
      %p124 = scmp.eq.s32.totalorder %s15, 8
      %p125 = por %p123, %p124
      %p127 = scmp.ne.s32.totalorder %s110, %s126
      %p128 = scmp.eq.s32.totalorder %s15, 0
      %p129 = por %p127, %p128
      %p130 = scmp.le.s32.totalorder 1, %s9
      %p131 = scmp.lt.s32.totalorder %s9, 10
      %p132 = pnand %p130, %p131
      %p133 = pneg %p132
      // Predicated region
      $region9: #{gcn_encoder_forward.6} parent=5 // pred_check
        _
      $region10: #{gcn_encoder_forward.6} parent=5 // pred_check_branch
        %135 = sbr.rel (%p132) target = $region12
      $region11: #{gcn_encoder_forward.6} parent=5 // pred_region
        %s136 = ssub.s32 %s9, 1
        // Predicated region
        $region13: #{gcn_encoder_forward.6} parent=11 // pred_check
          %p137 = pneg %p96
        $region14: #{gcn_encoder_forward.6} parent=11 // pred_check_branch
          %139 = sbr.rel (%p137) target = $region16
        $region15: #{gcn_encoder_forward.6} parent=11 // pred_region
          _
        $region16: #{gcn_encoder_forward.6} parent=11 // pred_fallthru
          _
      $region12: #{gcn_encoder_forward.6} parent=5 // pred_fallthru
        _
      %p140 = scmp.lt.s32.totalorder %s9, 9
      // Predicated region
      $region17: #{gcn_encoder_forward.6} parent=5 // pred_check
        %p141 = pneg %p140
      $region18: #{gcn_encoder_forward.6} parent=5 // pred_check_branch
        %143 = sbr.rel (%p141) target = $region20
      $region19: #{gcn_encoder_forward.6} parent=5 // pred_region
        // Predicated region
        $region21: #{gcn_encoder_forward.6} parent=19 // pred_check
          %p144 = pneg %p43
        $region22: #{gcn_encoder_forward.6} parent=19 // pred_check_branch
          %146 = sbr.rel (%p144) target = $region24
        $region23: #{gcn_encoder_forward.6} parent=19 // pred_region
          %s147 = sand.u32 %s33, 1
          %s148 = sand.u32 %s33, 1
          %s149 = smul.addr %s148, 256
          %s150 = scalar_lea.vmem [#allocation3], %s149
          %s151 = smul.u32 32, %s16
          %s152 = smul.u32 2, %s17
          %s153 = smul.addr %s151, 6
          %s154 = sadd.s32 %s152, %s153
          %s155 = smul.addr %s154, 4
          %s156 = scalar_lea.vmem %s0, %s155
          // Predicated region
          $region25: #{gcn_encoder_forward.6} parent=23 // pred_check
            _
          $region26: #{gcn_encoder_forward.6} parent=23 // pred_check_branch
            %158 = sbr.rel (0) target = $region28
          $region27: #{gcn_encoder_forward.6} parent=23 // pred_region
            // Predicated region
            $region29: #{gcn_encoder_forward.6} parent=27 // pred_check
              _
            $region30: #{gcn_encoder_forward.6} parent=27 // pred_check_branch
              %160 = sbr.rel (0) target = $region32
            $region31: #{gcn_encoder_forward.6} parent=27 // pred_region
              // Predicated region
              $region44: #{gcn_encoder_forward.6} parent=31 // pred_check
                _
              $region45: #{gcn_encoder_forward.6} parent=31 // pred_check_branch
                %238 = sbr.rel (0) target = $region47
              $region46: #{gcn_encoder_forward.6} parent=31 // pred_region
                loop: start=0, step=1, limit=1
                $region48: #{gcn_encoder_forward.6} parent=46 // loop_pre_header
                  _
                $region49: #{gcn_encoder_forward.6} parent=46 // loop_header
                  %s240 = sphi 0, %s244
                  %p241 = scmp.ge.s32.totalorder %s240, 1
                  %s245 = sphi %s156, %s156
                  %s246 = sphi %s150, %s150
                $region50: #{gcn_encoder_forward.6} parent=46 // loop_header_branch
                  %243 = sbr.rel (%p241) target = $region54
                $region51: #{gcn_encoder_forward.6} parent=46 // loop_body
                  %v247 = vld [vmem:[%s245] sm:$0xff]
                  %248 = vst [vmem:[%s246] sm:$0xff] %v247
                  %v249 = vld [vmem:[%s245 + $0x18] sm:$0xff]
                  %250 = vst [vmem:[%s246 + $0x8] sm:$0xff] %v249
                  %v251 = vld [vmem:[%s245 + $0x30] sm:$0xff]
                  %252 = vst [vmem:[%s246 + $0x10] sm:$0xff] %v251
                  %v253 = vld [vmem:[%s245 + $0x48] sm:$0xff]
                  %254 = vst [vmem:[%s246 + $0x18] sm:$0xff] %v253
                  %v255 = vld [vmem:[%s245 + $0x60] sm:$0xff]
                  %256 = vst [vmem:[%s246 + $0x20] sm:$0xff] %v255
                  %v257 = vld [vmem:[%s245 + $0x78] sm:$0xff]
                  %258 = vst [vmem:[%s246 + $0x28] sm:$0xff] %v257
                  %v259 = vld [vmem:[%s245 + $0x90] sm:$0xff]
                  %260 = vst [vmem:[%s246 + $0x30] sm:$0xff] %v259
                  %v261 = vld [vmem:[%s245 + $0xa8] sm:$0xff]
                  %262 = vst [vmem:[%s246 + $0x38] sm:$0xff] %v261
                  %v263 = vld [vmem:[%s245 + $0xc0] sm:$0xff]
                  %264 = vst [vmem:[%s246 + $0x40] sm:$0xff] %v263
                  %v265 = vld [vmem:[%s245 + $0xd8] sm:$0xff]
                  %266 = vst [vmem:[%s246 + $0x48] sm:$0xff] %v265
                  %v267 = vld [vmem:[%s245 + $0xf0] sm:$0xff]
                  %268 = vst [vmem:[%s246 + $0x50] sm:$0xff] %v267
                  %v269 = vld [vmem:[%s245 + $0x108] sm:$0xff]
                  %270 = vst [vmem:[%s246 + $0x58] sm:$0xff] %v269
                  %v271 = vld [vmem:[%s245 + $0x120] sm:$0xff]
                  %272 = vst [vmem:[%s246 + $0x60] sm:$0xff] %v271
                  %v273 = vld [vmem:[%s245 + $0x138] sm:$0xff]
                  %274 = vst [vmem:[%s246 + $0x68] sm:$0xff] %v273
                  %v275 = vld [vmem:[%s245 + $0x150] sm:$0xff]
                  %276 = vst [vmem:[%s246 + $0x70] sm:$0xff] %v275
                  %v277 = vld [vmem:[%s245 + $0x168] sm:$0xff]
                  %278 = vst [vmem:[%s246 + $0x78] sm:$0xff] %v277
                  %v279 = vld [vmem:[%s245 + $0x180] sm:$0xff]
                  %280 = vst [vmem:[%s246 + $0x80] sm:$0xff] %v279
                  %v281 = vld [vmem:[%s245 + $0x198] sm:$0xff]
                  %282 = vst [vmem:[%s246 + $0x88] sm:$0xff] %v281
                  %v283 = vld [vmem:[%s245 + $0x1b0] sm:$0xff]
                  %284 = vst [vmem:[%s246 + $0x90] sm:$0xff] %v283
                  %v285 = vld [vmem:[%s245 + $0x1c8] sm:$0xff]
                  %286 = vst [vmem:[%s246 + $0x98] sm:$0xff] %v285
                  %v287 = vld [vmem:[%s245 + $0x1e0] sm:$0xff]
                  %288 = vst [vmem:[%s246 + $0xa0] sm:$0xff] %v287
                  %v289 = vld [vmem:[%s245 + $0x1f8] sm:$0xff]
                  %290 = vst [vmem:[%s246 + $0xa8] sm:$0xff] %v289
                  %v291 = vld [vmem:[%s245 + $0x210] sm:$0xff]
                  %292 = vst [vmem:[%s246 + $0xb0] sm:$0xff] %v291
                  %v293 = vld [vmem:[%s245 + $0x228] sm:$0xff]
                  %294 = vst [vmem:[%s246 + $0xb8] sm:$0xff] %v293
                  %v295 = vld [vmem:[%s245 + $0x240] sm:$0xff]
                  %296 = vst [vmem:[%s246 + $0xc0] sm:$0xff] %v295
                  %v297 = vld [vmem:[%s245 + $0x258] sm:$0xff]
                  %298 = vst [vmem:[%s246 + $0xc8] sm:$0xff] %v297
                  %v299 = vld [vmem:[%s245 + $0x270] sm:$0xff]
                  %300 = vst [vmem:[%s246 + $0xd0] sm:$0xff] %v299
                  %v301 = vld [vmem:[%s245 + $0x288] sm:$0xff]
                  %302 = vst [vmem:[%s246 + $0xd8] sm:$0xff] %v301
                  %v303 = vld [vmem:[%s245 + $0x2a0] sm:$0xff]
                  %304 = vst [vmem:[%s246 + $0xe0] sm:$0xff] %v303
                  %v305 = vld [vmem:[%s245 + $0x2b8] sm:$0xff]
                  %306 = vst [vmem:[%s246 + $0xe8] sm:$0xff] %v305
                  %v307 = vld [vmem:[%s245 + $0x2d0] sm:$0xff]
                  %308 = vst [vmem:[%s246 + $0xf0] sm:$0xff] %v307
                  %v309 = vld [vmem:[%s245 + $0x2e8] sm:$0xff]
                  %310 = vst [vmem:[%s246 + $0xf8] sm:$0xff] %v309
                $region52: #{gcn_encoder_forward.6} parent=46 // loop_footer
                  %s244 = sadd.s32 1, %s240
                $region53: #{gcn_encoder_forward.6} parent=46 // loop_footer_branch
                  %239 = sbr.rel target = $region49
                $region54: #{gcn_encoder_forward.6} parent=46 // loop_exit
                  _
              $region47: #{gcn_encoder_forward.6} parent=31 // pred_fallthru
                _
              // Predicated region
              $region55: #{gcn_encoder_forward.6} parent=31 // pred_check
                _
              $region56: #{gcn_encoder_forward.6} parent=31 // pred_check_branch
                %312 = sbr.rel target = $region58
              $region57: #{gcn_encoder_forward.6} parent=31 // pred_region
                _
              $region58: #{gcn_encoder_forward.6} parent=31 // pred_fallthru
                _
            $region32: #{gcn_encoder_forward.6} parent=27 // pred_fallthru
              _
            // Predicated region
            $region33: #{gcn_encoder_forward.6} parent=27 // pred_check
              _
            $region34: #{gcn_encoder_forward.6} parent=27 // pred_check_branch
              %162 = sbr.rel target = $region36
            $region35: #{gcn_encoder_forward.6} parent=27 // pred_region
              %s164 = ssub.s32 256, 1
              loop: start=0, step=1, limit=1
              $region37: #{gcn_encoder_forward.6} parent=35 // loop_pre_header
                _
              $region38: #{gcn_encoder_forward.6} parent=35 // loop_header
                %s166 = sphi 0, %s170
                %p167 = scmp.ge.s32.totalorder %s166, 1
                %s171 = sphi %s156, %s156
                %s172 = sphi %s150, %s150
              $region39: #{gcn_encoder_forward.6} parent=35 // loop_header_branch
                %169 = sbr.rel (%p167) target = $region43
              $region40: #{gcn_encoder_forward.6} parent=35 // loop_body
                %v173 = vld [vmem:[%s171] sm:%s164]
                %174 = vst [vmem:[%s172] sm:%s164] %v173
                %v175 = vld [vmem:[%s171 + $0x18] sm:%s164]
                %176 = vst [vmem:[%s172 + $0x8] sm:%s164] %v175
                %v177 = vld [vmem:[%s171 + $0x30] sm:%s164]
                %178 = vst [vmem:[%s172 + $0x10] sm:%s164] %v177
                %v179 = vld [vmem:[%s171 + $0x48] sm:%s164]
                %180 = vst [vmem:[%s172 + $0x18] sm:%s164] %v179
                %v181 = vld [vmem:[%s171 + $0x60] sm:%s164]
                %182 = vst [vmem:[%s172 + $0x20] sm:%s164] %v181
                %v183 = vld [vmem:[%s171 + $0x78] sm:%s164]
                %184 = vst [vmem:[%s172 + $0x28] sm:%s164] %v183
                %v185 = vld [vmem:[%s171 + $0x90] sm:%s164]
                %186 = vst [vmem:[%s172 + $0x30] sm:%s164] %v185
                %v187 = vld [vmem:[%s171 + $0xa8] sm:%s164]
                %188 = vst [vmem:[%s172 + $0x38] sm:%s164] %v187
                %v189 = vld [vmem:[%s171 + $0xc0] sm:%s164]
                %190 = vst [vmem:[%s172 + $0x40] sm:%s164] %v189
                %v191 = vld [vmem:[%s171 + $0xd8] sm:%s164]
                %192 = vst [vmem:[%s172 + $0x48] sm:%s164] %v191
                %v193 = vld [vmem:[%s171 + $0xf0] sm:%s164]
                %194 = vst [vmem:[%s172 + $0x50] sm:%s164] %v193
                %v195 = vld [vmem:[%s171 + $0x108] sm:%s164]
                %196 = vst [vmem:[%s172 + $0x58] sm:%s164] %v195
                %v197 = vld [vmem:[%s171 + $0x120] sm:%s164]
                %198 = vst [vmem:[%s172 + $0x60] sm:%s164] %v197
                %v199 = vld [vmem:[%s171 + $0x138] sm:%s164]
                %200 = vst [vmem:[%s172 + $0x68] sm:%s164] %v199
                %v201 = vld [vmem:[%s171 + $0x150] sm:%s164]
                %202 = vst [vmem:[%s172 + $0x70] sm:%s164] %v201
                %v203 = vld [vmem:[%s171 + $0x168] sm:%s164]
                %204 = vst [vmem:[%s172 + $0x78] sm:%s164] %v203
                %v205 = vld [vmem:[%s171 + $0x180] sm:%s164]
                %206 = vst [vmem:[%s172 + $0x80] sm:%s164] %v205
                %v207 = vld [vmem:[%s171 + $0x198] sm:%s164]
                %208 = vst [vmem:[%s172 + $0x88] sm:%s164] %v207
                %v209 = vld [vmem:[%s171 + $0x1b0] sm:%s164]
                %210 = vst [vmem:[%s172 + $0x90] sm:%s164] %v209
                %v211 = vld [vmem:[%s171 + $0x1c8] sm:%s164]
                %212 = vst [vmem:[%s172 + $0x98] sm:%s164] %v211
                %v213 = vld [vmem:[%s171 + $0x1e0] sm:%s164]
                %214 = vst [vmem:[%s172 + $0xa0] sm:%s164] %v213
                %v215 = vld [vmem:[%s171 + $0x1f8] sm:%s164]
                %216 = vst [vmem:[%s172 + $0xa8] sm:%s164] %v215
                %v217 = vld [vmem:[%s171 + $0x210] sm:%s164]
                %218 = vst [vmem:[%s172 + $0xb0] sm:%s164] %v217
                %v219 = vld [vmem:[%s171 + $0x228] sm:%s164]
                %220 = vst [vmem:[%s172 + $0xb8] sm:%s164] %v219
                %v221 = vld [vmem:[%s171 + $0x240] sm:%s164]
                %222 = vst [vmem:[%s172 + $0xc0] sm:%s164] %v221
                %v223 = vld [vmem:[%s171 + $0x258] sm:%s164]
                %224 = vst [vmem:[%s172 + $0xc8] sm:%s164] %v223
                %v225 = vld [vmem:[%s171 + $0x270] sm:%s164]
                %226 = vst [vmem:[%s172 + $0xd0] sm:%s164] %v225
                %v227 = vld [vmem:[%s171 + $0x288] sm:%s164]
                %228 = vst [vmem:[%s172 + $0xd8] sm:%s164] %v227
                %v229 = vld [vmem:[%s171 + $0x2a0] sm:%s164]
                %230 = vst [vmem:[%s172 + $0xe0] sm:%s164] %v229
                %v231 = vld [vmem:[%s171 + $0x2b8] sm:%s164]
                %232 = vst [vmem:[%s172 + $0xe8] sm:%s164] %v231
                %v233 = vld [vmem:[%s171 + $0x2d0] sm:%s164]
                %234 = vst [vmem:[%s172 + $0xf0] sm:%s164] %v233
                %v235 = vld [vmem:[%s171 + $0x2e8] sm:%s164]
                %236 = vst [vmem:[%s172 + $0xf8] sm:%s164] %v235
              $region41: #{gcn_encoder_forward.6} parent=35 // loop_footer
                %s170 = sadd.s32 1, %s166
              $region42: #{gcn_encoder_forward.6} parent=35 // loop_footer_branch
                %165 = sbr.rel target = $region38
              $region43: #{gcn_encoder_forward.6} parent=35 // loop_exit
                _
            $region36: #{gcn_encoder_forward.6} parent=27 // pred_fallthru
              _
          $region28: #{gcn_encoder_forward.6} parent=23 // pred_fallthru
            _
          %313 = vnop
        $region24: #{gcn_encoder_forward.6} parent=19 // pred_fallthru
          _
        // Predicated region
        $region59: #{gcn_encoder_forward.6} parent=19 // pred_check
          %p314 = pneg %p69
        $region60: #{gcn_encoder_forward.6} parent=19 // pred_check_branch
          %316 = sbr.rel (%p314) target = $region62
        $region61: #{gcn_encoder_forward.6} parent=19 // pred_region
          %s317 = smul.u32 32, %s17
          %p318 = scmp.lt.s32.totalorder %s317, 95
          %s319 = scalar_select %p318, %s317, 95
          %s320 = smul.addr %s319, 4
          %s321 = scalar_lea.vmem %s1, %s320
          %s322 = smul.u32 32, %s17
        $region62: #{gcn_encoder_forward.6} parent=19 // pred_fallthru
          _
      $region20: #{gcn_encoder_forward.6} parent=5 // pred_fallthru
        _
      %p323 = scmp.le.s32.totalorder 1, %s9
      %p324 = scmp.lt.s32.totalorder %s9, 10
      %p325 = pnand %p323, %p324
      %p326 = pneg %p325
      // Predicated region
      $region63: #{gcn_encoder_forward.6} parent=5 // pred_check
        _
      $region64: #{gcn_encoder_forward.6} parent=5 // pred_check_branch
        %328 = sbr.rel (%p325) target = $region66
      $region65: #{gcn_encoder_forward.6} parent=5 // pred_region
        %s329 = ssub.s32 %s9, 1
        %s330 = sand.u32 %s36, 1
        %s331 = sand.u32 %s36, 1
        %s332 = smul.addr %s331, 256
        %s333 = scalar_lea.vmem [#allocation3], %s332
        // Predicated region
        $region67: #{gcn_encoder_forward.6} parent=65 // pred_check
          %p334 = pneg %p49
        $region68: #{gcn_encoder_forward.6} parent=65 // pred_check_branch
          %336 = sbr.rel (%p334) target = $region70
        $region69: #{gcn_encoder_forward.6} parent=65 // pred_region
          _
        $region70: #{gcn_encoder_forward.6} parent=65 // pred_fallthru
          _
        %s337 = sand.u32 %s36, 1
        %s338 = sand.u32 %s36, 1
        %s339 = smul.addr %s338, 256
        %s340 = scalar_lea.vmem [#allocation3], %s339
        %p341 = pneg %p49
        %p342 = pneg %p46
        %s343 = smul.u32 32, %s19
        %p344 = scmp.lt.s32.totalorder %s343, 95
        %s345 = scalar_select %p344, %s343, 95
        %s346 = smul.addr %s345, 4
        %s347 = scalar_lea.vmem %s1, %s346
        %p348 = pneg %p75
        %p349 = pneg %p72
        %p350 = pneg %p96
        %p351 = pneg %p93
        %p352 = pneg %p122
        %p353 = pneg %p119
        %s354 = smul.u32 32, %s18
        %p355 = scmp.lt.s32.totalorder %s354, 95
        %s356 = scalar_select %p355, %s354, 95
        %s357 = smul.addr %s356, 8
        %s358 = scalar_lea.vmem %s3, %s357
        %s359 = smul.u32 32, %s18
        %s360 = smul.u32 2, %s19
        %s361 = smul.u32 32, %s19
        %p362 = scmp.lt.s32.totalorder %s361, 95
        %s363 = scalar_select %p362, %s361, 95
        %s364 = smul.addr %s363, 4
        %s365 = scalar_lea.vmem %s1, %s364
        %s366 = smul.u32 32, %s19
        %s367 = smul.u32 32, %s18
        %p368 = scmp.lt.s32.totalorder %s367, 95
        %s369 = scalar_select %p368, %s367, 95
        %s370 = smul.addr %s369, 8
        %s371 = scalar_lea.vmem %s3, %s370
        %s372 = smul.u32 32, %s18
        %p374 = scmp.eq.s32.totalorder %s19, 0
        // Predicated region
        $region71: #{gcn_encoder_forward.6} parent=65 // pred_check
          %p375 = pneg %p374
        $region72: #{gcn_encoder_forward.6} parent=65 // pred_check_branch
          %377 = sbr.rel (%p375) target = $region74
        $region73: #{gcn_encoder_forward.6} parent=65 // pred_region
          %vm378 = vcmask 130048
          %379 = vst.msk [vmem:[#allocation2] sm:$0xff] %vm378, 0.0
          %380 = vst.msk [vmem:[#allocation2 + $0x8] sm:$0xff] %vm378, 0.0
          %381 = vst.msk [vmem:[#allocation2 + $0x10] sm:$0xff] %vm378, 0.0
          %382 = vst.msk [vmem:[#allocation2 + $0x18] sm:$0xff] %vm378, 0.0
          %383 = vst.msk [vmem:[#allocation2 + $0x20] sm:$0xff] %vm378, 0.0
          %384 = vst.msk [vmem:[#allocation2 + $0x28] sm:$0xff] %vm378, 0.0
          %385 = vst.msk [vmem:[#allocation2 + $0x30] sm:$0xff] %vm378, 0.0
          %386 = vst.msk [vmem:[#allocation2 + $0x38] sm:$0xff] %vm378, 0.0
          %387 = vst.msk [vmem:[#allocation2 + $0x40] sm:$0xff] %vm378, 0.0
          %388 = vst.msk [vmem:[#allocation2 + $0x48] sm:$0xff] %vm378, 0.0
          %389 = vst.msk [vmem:[#allocation2 + $0x50] sm:$0xff] %vm378, 0.0
          %390 = vst.msk [vmem:[#allocation2 + $0x58] sm:$0xff] %vm378, 0.0
          %391 = vst.msk [vmem:[#allocation2 + $0x60] sm:$0xff] %vm378, 0.0
          %392 = vst.msk [vmem:[#allocation2 + $0x68] sm:$0xff] %vm378, 0.0
          %393 = vst.msk [vmem:[#allocation2 + $0x70] sm:$0xff] %vm378, 0.0
          %394 = vst.msk [vmem:[#allocation2 + $0x78] sm:$0xff] %vm378, 0.0
          %395 = vst.msk [vmem:[#allocation2 + $0x80] sm:$0xff] %vm378, 0.0
          %396 = vst.msk [vmem:[#allocation2 + $0x88] sm:$0xff] %vm378, 0.0
          %397 = vst.msk [vmem:[#allocation2 + $0x90] sm:$0xff] %vm378, 0.0
          %398 = vst.msk [vmem:[#allocation2 + $0x98] sm:$0xff] %vm378, 0.0
          %399 = vst.msk [vmem:[#allocation2 + $0xa0] sm:$0xff] %vm378, 0.0
          %400 = vst.msk [vmem:[#allocation2 + $0xa8] sm:$0xff] %vm378, 0.0
          %401 = vst.msk [vmem:[#allocation2 + $0xb0] sm:$0xff] %vm378, 0.0
          %402 = vst.msk [vmem:[#allocation2 + $0xb8] sm:$0xff] %vm378, 0.0
          %403 = vst.msk [vmem:[#allocation2 + $0xc0] sm:$0xff] %vm378, 0.0
          %404 = vst.msk [vmem:[#allocation2 + $0xc8] sm:$0xff] %vm378, 0.0
          %405 = vst.msk [vmem:[#allocation2 + $0xd0] sm:$0xff] %vm378, 0.0
          %406 = vst.msk [vmem:[#allocation2 + $0xd8] sm:$0xff] %vm378, 0.0
          %407 = vst.msk [vmem:[#allocation2 + $0xe0] sm:$0xff] %vm378, 0.0
          %408 = vst.msk [vmem:[#allocation2 + $0xe8] sm:$0xff] %vm378, 0.0
          %409 = vst.msk [vmem:[#allocation2 + $0xf0] sm:$0xff] %vm378, 0.0
          %410 = vst.msk [vmem:[#allocation2 + $0xf8] sm:$0xff] %vm378, 0.0
        $region74: #{gcn_encoder_forward.6} parent=65 // pred_fallthru
          _
        %v411 = vld [vmem:[%s365] sm:$0xf]
        %v412 = vld [vmem:[%s365 + $0x4] sm:$0xf]
        %v413 = vld [vmem:[%s365 + $0x8] sm:$0xf]
        %v414 = vld [vmem:[%s365 + $0xc] sm:$0xf]
        %v415 = vld [vmem:[%s365 + $0x10] sm:$0xf]
        %v416 = vld [vmem:[%s365 + $0x14] sm:$0xf]
        %v417 = vld [vmem:[%s365 + $0x18] sm:$0xf]
        %v418 = vld [vmem:[%s365 + $0x1c] sm:$0xf]
        %v419 = vld [vmem:[%s365 + $0x20] sm:$0xf]
        %v420 = vld [vmem:[%s365 + $0x24] sm:$0xf]
        %v421 = vld [vmem:[%s365 + $0x28] sm:$0xf]
        %v422 = vld [vmem:[%s365 + $0x2c] sm:$0xf]
        %v423 = vld [vmem:[%s365 + $0x30] sm:$0xf]
        %v424 = vld [vmem:[%s365 + $0x34] sm:$0xf]
        %v425 = vld [vmem:[%s365 + $0x38] sm:$0xf]
        %v426 = vld [vmem:[%s365 + $0x3c] sm:$0xf]
        %v427 = vld [vmem:[%s365 + $0x40] sm:$0xf]
        %v428 = vld [vmem:[%s365 + $0x44] sm:$0xf]
        %v429 = vld [vmem:[%s365 + $0x48] sm:$0xf]
        %v430 = vld [vmem:[%s365 + $0x4c] sm:$0xf]
        %v431 = vld [vmem:[%s365 + $0x50] sm:$0xf]
        %v432 = vld [vmem:[%s365 + $0x54] sm:$0xf]
        %v433 = vld [vmem:[%s365 + $0x58] sm:$0xf]
        %v434 = vld [vmem:[%s365 + $0x5c] sm:$0xf]
        %v435 = vld [vmem:[%s365 + $0x60] sm:$0xf]
        %v436 = vld [vmem:[%s365 + $0x64] sm:$0xf]
        %v437 = vld [vmem:[%s365 + $0x68] sm:$0xf]
        %v438 = vld [vmem:[%s365 + $0x6c] sm:$0xf]
        %v439 = vld [vmem:[%s365 + $0x70] sm:$0xf]
        %v440 = vld [vmem:[%s365 + $0x74] sm:$0xf]
        %v441 = vld [vmem:[%s365 + $0x78] sm:$0xf]
        %v442 = vld [vmem:[%s365 + $0x7c] sm:$0xf]
        %v443 = vld [vmem:[%s2] sm:$0xf]
        %v444 = vld [vmem:[%s2 + $0x4] sm:$0xf]
        %v445 = vld [vmem:[%s2 + $0x8] sm:$0xf]
        %v446 = vld [vmem:[%s2 + $0xc] sm:$0xf]
        %v479 = vunpack.c.l.b16 %v411
        %v480 = vunpack.c.l.b16 %v412
        %v481 = vunpack.c.l.b16 %v413
        %v482 = vunpack.c.l.b16 %v414
        %v483 = vunpack.c.l.b16 %v415
        %v484 = vunpack.c.l.b16 %v416
        %v485 = vunpack.c.l.b16 %v417
        %v486 = vunpack.c.l.b16 %v418
        %v487 = vunpack.c.l.b16 %v419
        %v488 = vunpack.c.l.b16 %v420
        %v489 = vunpack.c.l.b16 %v421
        %v490 = vunpack.c.l.b16 %v422
        %v491 = vunpack.c.l.b16 %v423
        %v492 = vunpack.c.l.b16 %v424
        %v493 = vunpack.c.l.b16 %v425
        %v494 = vunpack.c.l.b16 %v426
        %v495 = vunpack.c.l.b16 %v427
        %v496 = vunpack.c.l.b16 %v428
        %v497 = vunpack.c.l.b16 %v429
        %v498 = vunpack.c.l.b16 %v430
        %v499 = vunpack.c.l.b16 %v431
        %v500 = vunpack.c.l.b16 %v432
        %v501 = vunpack.c.l.b16 %v433
        %v502 = vunpack.c.l.b16 %v434
        %v503 = vunpack.c.l.b16 %v435
        %v504 = vunpack.c.l.b16 %v436
        %v505 = vunpack.c.l.b16 %v437
        %v506 = vunpack.c.l.b16 %v438
        %v507 = vunpack.c.l.b16 %v439
        %v508 = vunpack.c.l.b16 %v440
        %v509 = vunpack.c.l.b16 %v441
        %v510 = vunpack.c.l.b16 %v442
        %v511 = vpack.c.b16 %v480, %v479
        %v512 = vpack.c.b16 %v482, %v481
        %v513 = vpack.c.b16 %v484, %v483
        %v514 = vpack.c.b16 %v486, %v485
        %v515 = vpack.c.b16 %v488, %v487
        %v516 = vpack.c.b16 %v490, %v489
        %v517 = vpack.c.b16 %v492, %v491
        %v518 = vpack.c.b16 %v494, %v493
        %v519 = vpack.c.b16 %v496, %v495
        %v520 = vpack.c.b16 %v498, %v497
        %v521 = vpack.c.b16 %v500, %v499
        %v522 = vpack.c.b16 %v502, %v501
        %v523 = vpack.c.b16 %v504, %v503
        %v524 = vpack.c.b16 %v506, %v505
        %v525 = vpack.c.b16 %v508, %v507
        %v526 = vpack.c.b16 %v510, %v509
        %v531 = vunpack.c.l.b16 %v443
        %v532 = vunpack.c.l.b16 %v444
        %v533 = vunpack.c.l.b16 %v445
        %v534 = vunpack.c.l.b16 %v446
        %v535 = vpack.c.b16 %v532, %v531
        %v536 = vpack.c.b16 %v534, %v533
        %vm539 = vcmask 261120
        %v541 = vsel %vm539, %v511, 0
        %v544 = vsel %vm539, %v512, 0
        %v547 = vsel %vm539, %v513, 0
        %v550 = vsel %vm539, %v514, 0
        %v553 = vsel %vm539, %v515, 0
        %v556 = vsel %vm539, %v516, 0
        %v559 = vsel %vm539, %v517, 0
        %v562 = vsel %vm539, %v518, 0
        %v565 = vsel %vm539, %v519, 0
        %v568 = vsel %vm539, %v520, 0
        %v571 = vsel %vm539, %v521, 0
        %v574 = vsel %vm539, %v522, 0
        %v577 = vsel %vm539, %v523, 0
        %v580 = vsel %vm539, %v524, 0
        %v583 = vsel %vm539, %v525, 0
        %v586 = vsel %vm539, %v526, 0
        %588 = vmatprep.subr.bf16.mxu0 0
        %589 = vmatpush1.bf16.msra.mxu0 0
        %590 = vmatprep.subr.bf16.mxu0 0
        %591 = vmatpush1.bf16.msra.mxu0 0
        %592 = vmatprep.subr.bf16.mxu0 0
        %593 = vmatpush1.bf16.msra.mxu0 0
        %594 = vmatprep.subr.bf16.mxu0 0
        %595 = vmatpush1.bf16.msra.mxu0 0
        %596 = vmatprep.subr.bf16.mxu0 0
        %597 = vmatpush1.bf16.msra.mxu0 0
        %598 = vmatprep.subr.bf16.mxu0 0
        %599 = vmatpush1.bf16.msra.mxu0 0
        %600 = vmatprep.subr.bf16.mxu0 0
        %601 = vmatpush1.bf16.msra.mxu0 %v536
        %602 = vmatprep.subr.bf16.mxu0 0
        %603 = vmatpush1.bf16.msra.mxu0 %v535
        %604 = vmatprep.subr.bf16.mxu0 0
        %605 = vmatpush2.bf16.msra.mxu0 0
        %606 = vmatprep.subr.bf16.mxu0 0
        %607 = vmatpush2.bf16.msra.mxu0 0
        %608 = vmatprep.subr.bf16.mxu0 0
        %609 = vmatpush2.bf16.msra.mxu0 0
        %610 = vmatprep.subr.bf16.mxu0 0
        %611 = vmatpush2.bf16.msra.mxu0 0
        %612 = vmatprep.subr.bf16.mxu0 0
        %613 = vmatpush2.bf16.msra.mxu0 0
        %614 = vmatprep.subr.bf16.mxu0 0
        %615 = vmatpush2.bf16.msra.mxu0 0
        %616 = vmatprep.subr.bf16.mxu0 0
        %617 = vmatpush2.bf16.msra.mxu0 0
        %618 = vmatprep.subr.bf16.mxu0 0
        %619 = vmatpush2.bf16.msra.mxu0 0
        %620 = vmatprep.mubr.bf16.mxu0 0
        %621 = vmatmul.mubr.bf16.gmra.mxu0 %v541
        %v622 = vpop.f32.mrf.mxu0
        %v623 = vadd.f32 0.0, %v622
        %v624 = vpop.f32.mrf.mxu0
        %v625 = vpop.f32.mrf.mxu0
        %v626 = vadd.f32 0.0, %v625
        %v627 = vpop.f32.mrf.mxu0
        %628 = vmatprep.mubr.bf16.mxu0 0
        %629 = vmatmul.mubr.bf16.gmra.mxu0 %v544
        %v630 = vpop.f32.mrf.mxu0
        %v631 = vadd.f32 0.0, %v630
        %v632 = vpop.f32.mrf.mxu0
        %v633 = vpop.f32.mrf.mxu0
        %v634 = vadd.f32 0.0, %v633
        %v635 = vpop.f32.mrf.mxu0
        %636 = vmatprep.mubr.bf16.mxu0 0
        %637 = vmatmul.mubr.bf16.gmra.mxu0 %v547
        %v638 = vpop.f32.mrf.mxu0
        %v639 = vadd.f32 0.0, %v638
        %v640 = vpop.f32.mrf.mxu0
        %v641 = vpop.f32.mrf.mxu0
        %v642 = vadd.f32 0.0, %v641
        %v643 = vpop.f32.mrf.mxu0
        %644 = vmatprep.mubr.bf16.mxu0 0
        %645 = vmatmul.mubr.bf16.gmra.mxu0 %v550
        %v646 = vpop.f32.mrf.mxu0
        %v647 = vadd.f32 0.0, %v646
        %v648 = vpop.f32.mrf.mxu0
        %v649 = vpop.f32.mrf.mxu0
        %v650 = vadd.f32 0.0, %v649
        %v651 = vpop.f32.mrf.mxu0
        %652 = vmatprep.mubr.bf16.mxu0 0
        %653 = vmatmul.mubr.bf16.gmra.mxu0 %v553
        %v654 = vpop.f32.mrf.mxu0
        %v655 = vadd.f32 0.0, %v654
        %v656 = vpop.f32.mrf.mxu0
        %v657 = vpop.f32.mrf.mxu0
        %v658 = vadd.f32 0.0, %v657
        %v659 = vpop.f32.mrf.mxu0
        %660 = vmatprep.mubr.bf16.mxu0 0
        %661 = vmatmul.mubr.bf16.gmra.mxu0 %v556
        %v662 = vpop.f32.mrf.mxu0
        %v663 = vadd.f32 0.0, %v662
        %v664 = vpop.f32.mrf.mxu0
        %v665 = vpop.f32.mrf.mxu0
        %v666 = vadd.f32 0.0, %v665
        %v667 = vpop.f32.mrf.mxu0
        %668 = vmatprep.mubr.bf16.mxu0 0
        %669 = vmatmul.mubr.bf16.gmra.mxu0 %v559
        %v670 = vpop.f32.mrf.mxu0
        %v671 = vadd.f32 0.0, %v670
        %v672 = vpop.f32.mrf.mxu0
        %v673 = vpop.f32.mrf.mxu0
        %v674 = vadd.f32 0.0, %v673
        %v675 = vpop.f32.mrf.mxu0
        %676 = vmatprep.mubr.bf16.mxu0 0
        %677 = vmatmul.mubr.bf16.gmra.mxu0 %v562
        %v678 = vpop.f32.mrf.mxu0
        %v679 = vadd.f32 0.0, %v678
        %v680 = vpop.f32.mrf.mxu0
        %v681 = vpop.f32.mrf.mxu0
        %v682 = vadd.f32 0.0, %v681
        %v683 = vpop.f32.mrf.mxu0
        %684 = vmatprep.mubr.bf16.mxu0 0
        %685 = vmatmul.mubr.bf16.gmra.mxu0 %v565
        %v686 = vpop.f32.mrf.mxu0
        %v687 = vadd.f32 0.0, %v686
        %v688 = vpop.f32.mrf.mxu0
        %v689 = vpop.f32.mrf.mxu0
        %v690 = vadd.f32 0.0, %v689
        %v691 = vpop.f32.mrf.mxu0
        %692 = vmatprep.mubr.bf16.mxu0 0
        %693 = vmatmul.mubr.bf16.gmra.mxu0 %v568
        %v694 = vpop.f32.mrf.mxu0
        %v695 = vadd.f32 0.0, %v694
        %v696 = vpop.f32.mrf.mxu0
        %v697 = vpop.f32.mrf.mxu0
        %v698 = vadd.f32 0.0, %v697
        %v699 = vpop.f32.mrf.mxu0
        %700 = vmatprep.mubr.bf16.mxu0 0
        %701 = vmatmul.mubr.bf16.gmra.mxu0 %v571
        %v702 = vpop.f32.mrf.mxu0
        %v703 = vadd.f32 0.0, %v702
        %v704 = vpop.f32.mrf.mxu0
        %v705 = vpop.f32.mrf.mxu0
        %v706 = vadd.f32 0.0, %v705
        %v707 = vpop.f32.mrf.mxu0
        %708 = vmatprep.mubr.bf16.mxu0 0
        %709 = vmatmul.mubr.bf16.gmra.mxu0 %v574
        %v710 = vpop.f32.mrf.mxu0
        %v711 = vadd.f32 0.0, %v710
        %v712 = vpop.f32.mrf.mxu0
        %v713 = vpop.f32.mrf.mxu0
        %v714 = vadd.f32 0.0, %v713
        %v715 = vpop.f32.mrf.mxu0
        %716 = vmatprep.mubr.bf16.mxu0 0
        %717 = vmatmul.mubr.bf16.gmra.mxu0 %v577
        %v718 = vpop.f32.mrf.mxu0
        %v719 = vadd.f32 0.0, %v718
        %v720 = vpop.f32.mrf.mxu0
        %v721 = vpop.f32.mrf.mxu0
        %v722 = vadd.f32 0.0, %v721
        %v723 = vpop.f32.mrf.mxu0
        %724 = vmatprep.mubr.bf16.mxu0 0
        %725 = vmatmul.mubr.bf16.gmra.mxu0 %v580
        %v726 = vpop.f32.mrf.mxu0
        %v727 = vadd.f32 0.0, %v726
        %v728 = vpop.f32.mrf.mxu0
        %v729 = vpop.f32.mrf.mxu0
        %v730 = vadd.f32 0.0, %v729
        %v731 = vpop.f32.mrf.mxu0
        %732 = vmatprep.mubr.bf16.mxu0 0
        %733 = vmatmul.mubr.bf16.gmra.mxu0 %v583
        %v734 = vpop.f32.mrf.mxu0
        %v735 = vadd.f32 0.0, %v734
        %v736 = vpop.f32.mrf.mxu0
        %v737 = vpop.f32.mrf.mxu0
        %v738 = vadd.f32 0.0, %v737
        %v739 = vpop.f32.mrf.mxu0
        %740 = vmatprep.mubr.bf16.mxu0 0
        %741 = vmatmul.mubr.bf16.gmra.mxu0 %v586
        %v742 = vpop.f32.mrf.mxu0
        %v743 = vadd.f32 0.0, %v742
        %v744 = vpop.f32.mrf.mxu0
        %v745 = vpop.f32.mrf.mxu0
        %v746 = vadd.f32 0.0, %v745
        %v747 = vpop.f32.mrf.mxu0
        %748 = vdwg.mxu0
        %v749 = vld [vmem:[#allocation2] sm:$0xff]
        %v750 = vld [vmem:[#allocation2 + $0x8] sm:$0xff]
        %v751 = vld [vmem:[#allocation2 + $0x10] sm:$0xff]
        %v752 = vld [vmem:[#allocation2 + $0x18] sm:$0xff]
        %v753 = vld [vmem:[#allocation2 + $0x20] sm:$0xff]
        %v754 = vld [vmem:[#allocation2 + $0x28] sm:$0xff]
        %v755 = vld [vmem:[#allocation2 + $0x30] sm:$0xff]
        %v756 = vld [vmem:[#allocation2 + $0x38] sm:$0xff]
        %v757 = vld [vmem:[#allocation2 + $0x40] sm:$0xff]
        %v758 = vld [vmem:[#allocation2 + $0x48] sm:$0xff]
        %v759 = vld [vmem:[#allocation2 + $0x50] sm:$0xff]
        %v760 = vld [vmem:[#allocation2 + $0x58] sm:$0xff]
        %v761 = vld [vmem:[#allocation2 + $0x60] sm:$0xff]
        %v762 = vld [vmem:[#allocation2 + $0x68] sm:$0xff]
        %v763 = vld [vmem:[#allocation2 + $0x70] sm:$0xff]
        %v764 = vld [vmem:[#allocation2 + $0x78] sm:$0xff]
        %v765 = vld [vmem:[#allocation2 + $0x80] sm:$0xff]
        %v766 = vld [vmem:[#allocation2 + $0x88] sm:$0xff]
        %v767 = vld [vmem:[#allocation2 + $0x90] sm:$0xff]
        %v768 = vld [vmem:[#allocation2 + $0x98] sm:$0xff]
        %v769 = vld [vmem:[#allocation2 + $0xa0] sm:$0xff]
        %v770 = vld [vmem:[#allocation2 + $0xa8] sm:$0xff]
        %v771 = vld [vmem:[#allocation2 + $0xb0] sm:$0xff]
        %v772 = vld [vmem:[#allocation2 + $0xb8] sm:$0xff]
        %v773 = vld [vmem:[#allocation2 + $0xc0] sm:$0xff]
        %v774 = vld [vmem:[#allocation2 + $0xc8] sm:$0xff]
        %v775 = vld [vmem:[#allocation2 + $0xd0] sm:$0xff]
        %v776 = vld [vmem:[#allocation2 + $0xd8] sm:$0xff]
        %v777 = vld [vmem:[#allocation2 + $0xe0] sm:$0xff]
        %v778 = vld [vmem:[#allocation2 + $0xe8] sm:$0xff]
        %v779 = vld [vmem:[#allocation2 + $0xf0] sm:$0xff]
        %v780 = vld [vmem:[#allocation2 + $0xf8] sm:$0xff]
        %v781 = vld [vmem:[%s333] sm:$0xff]
        %v782 = vld [vmem:[%s333 + $0x8] sm:$0xff]
        %v783 = vld [vmem:[%s333 + $0x10] sm:$0xff]
        %v784 = vld [vmem:[%s333 + $0x18] sm:$0xff]
        %v785 = vld [vmem:[%s333 + $0x20] sm:$0xff]
        %v786 = vld [vmem:[%s333 + $0x28] sm:$0xff]
        %v787 = vld [vmem:[%s333 + $0x30] sm:$0xff]
        %v788 = vld [vmem:[%s333 + $0x38] sm:$0xff]
        %v789 = vld [vmem:[%s333 + $0x40] sm:$0xff]
        %v790 = vld [vmem:[%s333 + $0x48] sm:$0xff]
        %v791 = vld [vmem:[%s333 + $0x50] sm:$0xff]
        %v792 = vld [vmem:[%s333 + $0x58] sm:$0xff]
        %v793 = vld [vmem:[%s333 + $0x60] sm:$0xff]
        %v794 = vld [vmem:[%s333 + $0x68] sm:$0xff]
        %v795 = vld [vmem:[%s333 + $0x70] sm:$0xff]
        %v796 = vld [vmem:[%s333 + $0x78] sm:$0xff]
        %v797 = vld [vmem:[%s333 + $0x80] sm:$0xff]
        %v798 = vld [vmem:[%s333 + $0x88] sm:$0xff]
        %v799 = vld [vmem:[%s333 + $0x90] sm:$0xff]
        %v800 = vld [vmem:[%s333 + $0x98] sm:$0xff]
        %v801 = vld [vmem:[%s333 + $0xa0] sm:$0xff]
        %v802 = vld [vmem:[%s333 + $0xa8] sm:$0xff]
        %v803 = vld [vmem:[%s333 + $0xb0] sm:$0xff]
        %v804 = vld [vmem:[%s333 + $0xb8] sm:$0xff]
        %v805 = vld [vmem:[%s333 + $0xc0] sm:$0xff]
        %v806 = vld [vmem:[%s333 + $0xc8] sm:$0xff]
        %v807 = vld [vmem:[%s333 + $0xd0] sm:$0xff]
        %v808 = vld [vmem:[%s333 + $0xd8] sm:$0xff]
        %v809 = vld [vmem:[%s333 + $0xe0] sm:$0xff]
        %v810 = vld [vmem:[%s333 + $0xe8] sm:$0xff]
        %v811 = vld [vmem:[%s333 + $0xf0] sm:$0xff]
        %v812 = vld [vmem:[%s333 + $0xf8] sm:$0xff]
        %v813 = vpack.c.bf16 %v626, %v623
        %v814 = vpack.c.bf16 %v634, %v631
        %v815 = vpack.c.bf16 %v642, %v639
        %v816 = vpack.c.bf16 %v650, %v647
        %v817 = vpack.c.bf16 %v658, %v655
        %v818 = vpack.c.bf16 %v666, %v663
        %v819 = vpack.c.bf16 %v674, %v671
        %v820 = vpack.c.bf16 %v682, %v679
        %v821 = vpack.c.bf16 %v690, %v687
        %v822 = vpack.c.bf16 %v698, %v695
        %v823 = vpack.c.bf16 %v706, %v703
        %v824 = vpack.c.bf16 %v714, %v711
        %v825 = vpack.c.bf16 %v722, %v719
        %v826 = vpack.c.bf16 %v730, %v727
        %v827 = vpack.c.bf16 %v738, %v735
        %v828 = vpack.c.bf16 %v746, %v743
        %v861 = vunpack.c.l.b16 %v781
        %v862 = vunpack.c.h.b16 %v781
        %v863 = vunpack.c.l.b16 %v782
        %v864 = vunpack.c.h.b16 %v782
        %v865 = vunpack.c.l.b16 %v783
        %v866 = vunpack.c.h.b16 %v783
        %v867 = vunpack.c.l.b16 %v784
        %v868 = vunpack.c.h.b16 %v784
        %v869 = vunpack.c.l.b16 %v785
        %v870 = vunpack.c.h.b16 %v785
        %v871 = vunpack.c.l.b16 %v786
        %v872 = vunpack.c.h.b16 %v786
        %v873 = vunpack.c.l.b16 %v787
        %v874 = vunpack.c.h.b16 %v787
        %v875 = vunpack.c.l.b16 %v788
        %v876 = vunpack.c.h.b16 %v788
        %v877 = vunpack.c.l.b16 %v789
        %v878 = vunpack.c.h.b16 %v789
        %v879 = vunpack.c.l.b16 %v790
        %v880 = vunpack.c.h.b16 %v790
        %v881 = vunpack.c.l.b16 %v791
        %v882 = vunpack.c.h.b16 %v791
        %v883 = vunpack.c.l.b16 %v792
        %v884 = vunpack.c.h.b16 %v792
        %v885 = vunpack.c.l.b16 %v793
        %v886 = vunpack.c.h.b16 %v793
        %v887 = vunpack.c.l.b16 %v794
        %v888 = vunpack.c.h.b16 %v794
        %v889 = vunpack.c.l.b16 %v795
        %v890 = vunpack.c.h.b16 %v795
        %v891 = vunpack.c.l.b16 %v796
        %v892 = vunpack.c.h.b16 %v796
        %v893 = vunpack.c.l.b16 %v797
        %v894 = vunpack.c.h.b16 %v797
        %v895 = vunpack.c.l.b16 %v798
        %v896 = vunpack.c.h.b16 %v798
        %v897 = vunpack.c.l.b16 %v799
        %v898 = vunpack.c.h.b16 %v799
        %v899 = vunpack.c.l.b16 %v800
        %v900 = vunpack.c.h.b16 %v800
        %v901 = vunpack.c.l.b16 %v801
        %v902 = vunpack.c.h.b16 %v801
        %v903 = vunpack.c.l.b16 %v802
        %v904 = vunpack.c.h.b16 %v802
        %v905 = vunpack.c.l.b16 %v803
        %v906 = vunpack.c.h.b16 %v803
        %v907 = vunpack.c.l.b16 %v804
        %v908 = vunpack.c.h.b16 %v804
        %v909 = vunpack.c.l.b16 %v805
        %v910 = vunpack.c.h.b16 %v805
        %v911 = vunpack.c.l.b16 %v806
        %v912 = vunpack.c.h.b16 %v806
        %v913 = vunpack.c.l.b16 %v807
        %v914 = vunpack.c.h.b16 %v807
        %v915 = vunpack.c.l.b16 %v808
        %v916 = vunpack.c.h.b16 %v808
        %v917 = vunpack.c.l.b16 %v809
        %v918 = vunpack.c.h.b16 %v809
        %v919 = vunpack.c.l.b16 %v810
        %v920 = vunpack.c.h.b16 %v810
        %v921 = vunpack.c.l.b16 %v811
        %v922 = vunpack.c.h.b16 %v811
        %v923 = vunpack.c.l.b16 %v812
        %v924 = vunpack.c.h.b16 %v812
        %v925 = vpack.c.b16 %v863, %v861
        %v926 = vpack.c.b16 %v864, %v862
        %v927 = vpack.c.b16 %v867, %v865
        %v928 = vpack.c.b16 %v868, %v866
        %v929 = vpack.c.b16 %v871, %v869
        %v930 = vpack.c.b16 %v872, %v870
        %v931 = vpack.c.b16 %v875, %v873
        %v932 = vpack.c.b16 %v876, %v874
        %v933 = vpack.c.b16 %v879, %v877
        %v934 = vpack.c.b16 %v880, %v878
        %v935 = vpack.c.b16 %v883, %v881
        %v936 = vpack.c.b16 %v884, %v882
        %v937 = vpack.c.b16 %v887, %v885
        %v938 = vpack.c.b16 %v888, %v886
        %v939 = vpack.c.b16 %v891, %v889
        %v940 = vpack.c.b16 %v892, %v890
        %v941 = vpack.c.b16 %v895, %v893
        %v942 = vpack.c.b16 %v896, %v894
        %v943 = vpack.c.b16 %v899, %v897
        %v944 = vpack.c.b16 %v900, %v898
        %v945 = vpack.c.b16 %v903, %v901
        %v946 = vpack.c.b16 %v904, %v902
        %v947 = vpack.c.b16 %v907, %v905
        %v948 = vpack.c.b16 %v908, %v906
        %v949 = vpack.c.b16 %v911, %v909
        %v950 = vpack.c.b16 %v912, %v910
        %v951 = vpack.c.b16 %v915, %v913
        %v952 = vpack.c.b16 %v916, %v914
        %v953 = vpack.c.b16 %v919, %v917
        %v954 = vpack.c.b16 %v920, %v918
        %v955 = vpack.c.b16 %v923, %v921
        %v956 = vpack.c.b16 %v924, %v922
        %989 = vmatprep.subr.bf16.mxu0 0
        %990 = vmatpush1.bf16.msra.mxu0 %v820
        %991 = vmatprep.subr.bf16.mxu0 0
        %992 = vmatpush1.bf16.msra.mxu0 %v819
        %993 = vmatprep.subr.bf16.mxu0 0
        %994 = vmatpush1.bf16.msra.mxu0 %v818
        %995 = vmatprep.subr.bf16.mxu0 0
        %996 = vmatpush1.bf16.msra.mxu0 %v817
        %997 = vmatprep.subr.bf16.mxu0 0
        %998 = vmatpush1.bf16.msra.mxu0 %v816
        %999 = vmatprep.subr.bf16.mxu0 0
        %1000 = vmatpush1.bf16.msra.mxu0 %v815
        %1001 = vmatprep.subr.bf16.mxu0 0
        %1002 = vmatpush1.bf16.msra.mxu0 %v814
        %1003 = vmatprep.subr.bf16.mxu0 0
        %1004 = vmatpush1.bf16.msra.mxu0 %v813
        %1005 = vmatprep.subr.bf16.mxu0 0
        %1006 = vmatpush2.bf16.msra.mxu0 %v828
        %1007 = vmatprep.subr.bf16.mxu0 0
        %1008 = vmatpush2.bf16.msra.mxu0 %v827
        %1009 = vmatprep.subr.bf16.mxu0 0
        %1010 = vmatpush2.bf16.msra.mxu0 %v826
        %1011 = vmatprep.subr.bf16.mxu0 0
        %1012 = vmatpush2.bf16.msra.mxu0 %v825
        %1013 = vmatprep.subr.bf16.mxu0 0
        %1014 = vmatpush2.bf16.msra.mxu0 %v824
        %1015 = vmatprep.subr.bf16.mxu0 0
        %1016 = vmatpush2.bf16.msra.mxu0 %v823
        %1017 = vmatprep.subr.bf16.mxu0 0
        %1018 = vmatpush2.bf16.msra.mxu0 %v822
        %1019 = vmatprep.subr.bf16.mxu0 0
        %1020 = vmatpush2.bf16.msra.mxu0 %v821
        %1021 = vmatprep.mubr.bf16.mxu0 %v926
        %1022 = vmatmul.mubr.bf16.gmra.mxu0 %v925
        %v1023 = vpop.f32.mrf.mxu0
        %v1024 = vadd.f32 0.0, %v1023
        %v1025 = vpop.f32.mrf.mxu0
        %v1026 = vpop.f32.mrf.mxu0
        %v1027 = vadd.f32 0.0, %v1026
        %v1028 = vpop.f32.mrf.mxu0
        %1029 = vmatprep.mubr.bf16.mxu0 %v928
        %1030 = vmatmul.mubr.bf16.gmra.mxu0 %v927
        %v1031 = vpop.f32.mrf.mxu0
        %v1032 = vadd.f32 0.0, %v1031
        %v1033 = vpop.f32.mrf.mxu0
        %v1034 = vpop.f32.mrf.mxu0
        %v1035 = vadd.f32 0.0, %v1034
        %v1036 = vpop.f32.mrf.mxu0
        %1037 = vmatprep.mubr.bf16.mxu0 %v930
        %1038 = vmatmul.mubr.bf16.gmra.mxu0 %v929
        %v1039 = vpop.f32.mrf.mxu0
        %v1040 = vadd.f32 0.0, %v1039
        %v1041 = vpop.f32.mrf.mxu0
        %v1042 = vpop.f32.mrf.mxu0
        %v1043 = vadd.f32 0.0, %v1042
        %v1044 = vpop.f32.mrf.mxu0
        %1045 = vmatprep.mubr.bf16.mxu0 %v932
        %1046 = vmatmul.mubr.bf16.gmra.mxu0 %v931
        %v1047 = vpop.f32.mrf.mxu0
        %v1048 = vadd.f32 0.0, %v1047
        %v1049 = vpop.f32.mrf.mxu0
        %v1050 = vpop.f32.mrf.mxu0
        %v1051 = vadd.f32 0.0, %v1050
        %v1052 = vpop.f32.mrf.mxu0
        %1053 = vmatprep.mubr.bf16.mxu0 %v934
        %1054 = vmatmul.mubr.bf16.gmra.mxu0 %v933
        %v1055 = vpop.f32.mrf.mxu0
        %v1056 = vadd.f32 0.0, %v1055
        %v1057 = vpop.f32.mrf.mxu0
        %v1058 = vpop.f32.mrf.mxu0
        %v1059 = vadd.f32 0.0, %v1058
        %v1060 = vpop.f32.mrf.mxu0
        %1061 = vmatprep.mubr.bf16.mxu0 %v936
        %1062 = vmatmul.mubr.bf16.gmra.mxu0 %v935
        %v1063 = vpop.f32.mrf.mxu0
        %v1064 = vadd.f32 0.0, %v1063
        %v1065 = vpop.f32.mrf.mxu0
        %v1066 = vpop.f32.mrf.mxu0
        %v1067 = vadd.f32 0.0, %v1066
        %v1068 = vpop.f32.mrf.mxu0
        %1069 = vmatprep.mubr.bf16.mxu0 %v938
        %1070 = vmatmul.mubr.bf16.gmra.mxu0 %v937
        %v1071 = vpop.f32.mrf.mxu0
        %v1072 = vadd.f32 0.0, %v1071
        %v1073 = vpop.f32.mrf.mxu0
        %v1074 = vpop.f32.mrf.mxu0
        %v1075 = vadd.f32 0.0, %v1074
        %v1076 = vpop.f32.mrf.mxu0
        %1077 = vmatprep.mubr.bf16.mxu0 %v940
        %1078 = vmatmul.mubr.bf16.gmra.mxu0 %v939
        %v1079 = vpop.f32.mrf.mxu0
        %v1080 = vadd.f32 0.0, %v1079
        %v1081 = vpop.f32.mrf.mxu0
        %v1082 = vpop.f32.mrf.mxu0
        %v1083 = vadd.f32 0.0, %v1082
        %v1084 = vpop.f32.mrf.mxu0
        %1085 = vmatprep.mubr.bf16.mxu0 %v942
        %1086 = vmatmul.mubr.bf16.gmra.mxu0 %v941
        %v1087 = vpop.f32.mrf.mxu0
        %v1088 = vadd.f32 0.0, %v1087
        %v1089 = vpop.f32.mrf.mxu0
        %v1090 = vpop.f32.mrf.mxu0
        %v1091 = vadd.f32 0.0, %v1090
        %v1092 = vpop.f32.mrf.mxu0
        %1093 = vmatprep.mubr.bf16.mxu0 %v944
        %1094 = vmatmul.mubr.bf16.gmra.mxu0 %v943
        %v1095 = vpop.f32.mrf.mxu0
        %v1096 = vadd.f32 0.0, %v1095
        %v1097 = vpop.f32.mrf.mxu0
        %v1098 = vpop.f32.mrf.mxu0
        %v1099 = vadd.f32 0.0, %v1098
        %v1100 = vpop.f32.mrf.mxu0
        %1101 = vmatprep.mubr.bf16.mxu0 %v946
        %1102 = vmatmul.mubr.bf16.gmra.mxu0 %v945
        %v1103 = vpop.f32.mrf.mxu0
        %v1104 = vadd.f32 0.0, %v1103
        %v1105 = vpop.f32.mrf.mxu0
        %v1106 = vpop.f32.mrf.mxu0
        %v1107 = vadd.f32 0.0, %v1106
        %v1108 = vpop.f32.mrf.mxu0
        %1109 = vmatprep.mubr.bf16.mxu0 %v948
        %1110 = vmatmul.mubr.bf16.gmra.mxu0 %v947
        %v1111 = vpop.f32.mrf.mxu0
        %v1112 = vadd.f32 0.0, %v1111
        %v1113 = vpop.f32.mrf.mxu0
        %v1114 = vpop.f32.mrf.mxu0
        %v1115 = vadd.f32 0.0, %v1114
        %v1116 = vpop.f32.mrf.mxu0
        %1117 = vmatprep.mubr.bf16.mxu0 %v950
        %1118 = vmatmul.mubr.bf16.gmra.mxu0 %v949
        %v1119 = vpop.f32.mrf.mxu0
        %v1120 = vadd.f32 0.0, %v1119
        %v1121 = vpop.f32.mrf.mxu0
        %v1122 = vpop.f32.mrf.mxu0
        %v1123 = vadd.f32 0.0, %v1122
        %v1124 = vpop.f32.mrf.mxu0
        %1125 = vmatprep.mubr.bf16.mxu0 %v952
        %1126 = vmatmul.mubr.bf16.gmra.mxu0 %v951
        %v1127 = vpop.f32.mrf.mxu0
        %v1128 = vadd.f32 0.0, %v1127
        %v1129 = vpop.f32.mrf.mxu0
        %v1130 = vpop.f32.mrf.mxu0
        %v1131 = vadd.f32 0.0, %v1130
        %v1132 = vpop.f32.mrf.mxu0
        %1133 = vmatprep.mubr.bf16.mxu0 %v954
        %1134 = vmatmul.mubr.bf16.gmra.mxu0 %v953
        %v1135 = vpop.f32.mrf.mxu0
        %v1136 = vadd.f32 0.0, %v1135
        %v1137 = vpop.f32.mrf.mxu0
        %v1138 = vpop.f32.mrf.mxu0
        %v1139 = vadd.f32 0.0, %v1138
        %v1140 = vpop.f32.mrf.mxu0
        %1141 = vmatprep.mubr.bf16.mxu0 %v956
        %1142 = vmatmul.mubr.bf16.gmra.mxu0 %v955
        %v1143 = vpop.f32.mrf.mxu0
        %v1144 = vadd.f32 0.0, %v1143
        %v1145 = vpop.f32.mrf.mxu0
        %v1146 = vpop.f32.mrf.mxu0
        %v1147 = vadd.f32 0.0, %v1146
        %v1148 = vpop.f32.mrf.mxu0
        %1149 = vdwg.mxu0
        %v1150 = vadd.f32 %v749, %v1024
        %v1151 = vadd.f32 %v750, %v1027
        %v1152 = vadd.f32 %v751, %v1032
        %v1153 = vadd.f32 %v752, %v1035
        %v1154 = vadd.f32 %v753, %v1040
        %v1155 = vadd.f32 %v754, %v1043
        %v1156 = vadd.f32 %v755, %v1048
        %v1157 = vadd.f32 %v756, %v1051
        %v1158 = vadd.f32 %v757, %v1056
        %v1159 = vadd.f32 %v758, %v1059
        %v1160 = vadd.f32 %v759, %v1064
        %v1161 = vadd.f32 %v760, %v1067
        %v1162 = vadd.f32 %v761, %v1072
        %v1163 = vadd.f32 %v762, %v1075
        %v1164 = vadd.f32 %v763, %v1080
        %v1165 = vadd.f32 %v764, %v1083
        %v1166 = vadd.f32 %v765, %v1088
        %v1167 = vadd.f32 %v766, %v1091
        %v1168 = vadd.f32 %v767, %v1096
        %v1169 = vadd.f32 %v768, %v1099
        %v1170 = vadd.f32 %v769, %v1104
        %v1171 = vadd.f32 %v770, %v1107
        %v1172 = vadd.f32 %v771, %v1112
        %v1173 = vadd.f32 %v772, %v1115
        %v1174 = vadd.f32 %v773, %v1120
        %v1175 = vadd.f32 %v774, %v1123
        %v1176 = vadd.f32 %v775, %v1128
        %v1177 = vadd.f32 %v776, %v1131
        %v1178 = vadd.f32 %v777, %v1136
        %v1179 = vadd.f32 %v778, %v1139
        %v1180 = vadd.f32 %v779, %v1144
        %v1181 = vadd.f32 %v780, %v1147
        %vm1182 = vcmask 130048
        %1183 = vst.msk [vmem:[#allocation2] sm:$0xff] %vm1182, %v1150
        %1184 = vst.msk [vmem:[#allocation2 + $0x8] sm:$0xff] %vm1182, %v1151
        %1185 = vst.msk [vmem:[#allocation2 + $0x10] sm:$0xff] %vm1182, %v1152
        %1186 = vst.msk [vmem:[#allocation2 + $0x18] sm:$0xff] %vm1182, %v1153
        %1187 = vst.msk [vmem:[#allocation2 + $0x20] sm:$0xff] %vm1182, %v1154
        %1188 = vst.msk [vmem:[#allocation2 + $0x28] sm:$0xff] %vm1182, %v1155
        %1189 = vst.msk [vmem:[#allocation2 + $0x30] sm:$0xff] %vm1182, %v1156
        %1190 = vst.msk [vmem:[#allocation2 + $0x38] sm:$0xff] %vm1182, %v1157
        %1191 = vst.msk [vmem:[#allocation2 + $0x40] sm:$0xff] %vm1182, %v1158
        %1192 = vst.msk [vmem:[#allocation2 + $0x48] sm:$0xff] %vm1182, %v1159
        %1193 = vst.msk [vmem:[#allocation2 + $0x50] sm:$0xff] %vm1182, %v1160
        %1194 = vst.msk [vmem:[#allocation2 + $0x58] sm:$0xff] %vm1182, %v1161
        %1195 = vst.msk [vmem:[#allocation2 + $0x60] sm:$0xff] %vm1182, %v1162
        %1196 = vst.msk [vmem:[#allocation2 + $0x68] sm:$0xff] %vm1182, %v1163
        %1197 = vst.msk [vmem:[#allocation2 + $0x70] sm:$0xff] %vm1182, %v1164
        %1198 = vst.msk [vmem:[#allocation2 + $0x78] sm:$0xff] %vm1182, %v1165
        %1199 = vst.msk [vmem:[#allocation2 + $0x80] sm:$0xff] %vm1182, %v1166
        %1200 = vst.msk [vmem:[#allocation2 + $0x88] sm:$0xff] %vm1182, %v1167
        %1201 = vst.msk [vmem:[#allocation2 + $0x90] sm:$0xff] %vm1182, %v1168
        %1202 = vst.msk [vmem:[#allocation2 + $0x98] sm:$0xff] %vm1182, %v1169
        %1203 = vst.msk [vmem:[#allocation2 + $0xa0] sm:$0xff] %vm1182, %v1170
        %1204 = vst.msk [vmem:[#allocation2 + $0xa8] sm:$0xff] %vm1182, %v1171
        %1205 = vst.msk [vmem:[#allocation2 + $0xb0] sm:$0xff] %vm1182, %v1172
        %1206 = vst.msk [vmem:[#allocation2 + $0xb8] sm:$0xff] %vm1182, %v1173
        %1207 = vst.msk [vmem:[#allocation2 + $0xc0] sm:$0xff] %vm1182, %v1174
        %1208 = vst.msk [vmem:[#allocation2 + $0xc8] sm:$0xff] %vm1182, %v1175
        %1209 = vst.msk [vmem:[#allocation2 + $0xd0] sm:$0xff] %vm1182, %v1176
        %1210 = vst.msk [vmem:[#allocation2 + $0xd8] sm:$0xff] %vm1182, %v1177
        %1211 = vst.msk [vmem:[#allocation2 + $0xe0] sm:$0xff] %vm1182, %v1178
        %1212 = vst.msk [vmem:[#allocation2 + $0xe8] sm:$0xff] %vm1182, %v1179
        %1213 = vst.msk [vmem:[#allocation2 + $0xf0] sm:$0xff] %vm1182, %v1180
        %1214 = vst.msk [vmem:[#allocation2 + $0xf8] sm:$0xff] %vm1182, %v1181
        %p1215 = scmp.eq.s32.totalorder %s19, 2
        // Predicated region
        $region75: #{gcn_encoder_forward.6} parent=65 // pred_check
          %p1216 = pneg %p1215
        $region76: #{gcn_encoder_forward.6} parent=65 // pred_check_branch
          %1218 = sbr.rel (%p1216) target = $region78
        $region77: #{gcn_encoder_forward.6} parent=65 // pred_region
          %v1219 = vld [vmem:[#allocation2] sm:$0xff]
          %v1220 = vld [vmem:[#allocation2 + $0x8] sm:$0xff]
          %v1221 = vld [vmem:[#allocation2 + $0x10] sm:$0xff]
          %v1222 = vld [vmem:[#allocation2 + $0x18] sm:$0xff]
          %v1223 = vld [vmem:[#allocation2 + $0x20] sm:$0xff]
          %v1224 = vld [vmem:[#allocation2 + $0x28] sm:$0xff]
          %v1225 = vld [vmem:[#allocation2 + $0x30] sm:$0xff]
          %v1226 = vld [vmem:[#allocation2 + $0x38] sm:$0xff]
          %v1227 = vld [vmem:[#allocation2 + $0x40] sm:$0xff]
          %v1228 = vld [vmem:[#allocation2 + $0x48] sm:$0xff]
          %v1229 = vld [vmem:[#allocation2 + $0x50] sm:$0xff]
          %v1230 = vld [vmem:[#allocation2 + $0x58] sm:$0xff]
          %v1231 = vld [vmem:[#allocation2 + $0x60] sm:$0xff]
          %v1232 = vld [vmem:[#allocation2 + $0x68] sm:$0xff]
          %v1233 = vld [vmem:[#allocation2 + $0x70] sm:$0xff]
          %v1234 = vld [vmem:[#allocation2 + $0x78] sm:$0xff]
          %v1235 = vld [vmem:[#allocation2 + $0x80] sm:$0xff]
          %v1236 = vld [vmem:[#allocation2 + $0x88] sm:$0xff]
          %v1237 = vld [vmem:[#allocation2 + $0x90] sm:$0xff]
          %v1238 = vld [vmem:[#allocation2 + $0x98] sm:$0xff]
          %v1239 = vld [vmem:[#allocation2 + $0xa0] sm:$0xff]
          %v1240 = vld [vmem:[#allocation2 + $0xa8] sm:$0xff]
          %v1241 = vld [vmem:[#allocation2 + $0xb0] sm:$0xff]
          %v1242 = vld [vmem:[#allocation2 + $0xb8] sm:$0xff]
          %v1243 = vld [vmem:[#allocation2 + $0xc0] sm:$0xff]
          %v1244 = vld [vmem:[#allocation2 + $0xc8] sm:$0xff]
          %v1245 = vld [vmem:[#allocation2 + $0xd0] sm:$0xff]
          %v1246 = vld [vmem:[#allocation2 + $0xd8] sm:$0xff]
          %v1247 = vld [vmem:[#allocation2 + $0xe0] sm:$0xff]
          %v1248 = vld [vmem:[#allocation2 + $0xe8] sm:$0xff]
          %v1249 = vld [vmem:[#allocation2 + $0xf0] sm:$0xff]
          %v1250 = vld [vmem:[#allocation2 + $0xf8] sm:$0xff]
          %1251 = vst.msk [vmem:[%s371] sm:$0xff] %vm1182, %v1219
          %1252 = vst.msk [vmem:[%s371 + $0x8] sm:$0xff] %vm1182, %v1220
          %1253 = vst.msk [vmem:[%s371 + $0x10] sm:$0xff] %vm1182, %v1221
          %1254 = vst.msk [vmem:[%s371 + $0x18] sm:$0xff] %vm1182, %v1222
          %1255 = vst.msk [vmem:[%s371 + $0x20] sm:$0xff] %vm1182, %v1223
          %1256 = vst.msk [vmem:[%s371 + $0x28] sm:$0xff] %vm1182, %v1224
          %1257 = vst.msk [vmem:[%s371 + $0x30] sm:$0xff] %vm1182, %v1225
          %1258 = vst.msk [vmem:[%s371 + $0x38] sm:$0xff] %vm1182, %v1226
          %1259 = vst.msk [vmem:[%s371 + $0x40] sm:$0xff] %vm1182, %v1227
          %1260 = vst.msk [vmem:[%s371 + $0x48] sm:$0xff] %vm1182, %v1228
          %1261 = vst.msk [vmem:[%s371 + $0x50] sm:$0xff] %vm1182, %v1229
          %1262 = vst.msk [vmem:[%s371 + $0x58] sm:$0xff] %vm1182, %v1230
          %1263 = vst.msk [vmem:[%s371 + $0x60] sm:$0xff] %vm1182, %v1231
          %1264 = vst.msk [vmem:[%s371 + $0x68] sm:$0xff] %vm1182, %v1232
          %1265 = vst.msk [vmem:[%s371 + $0x70] sm:$0xff] %vm1182, %v1233
          %1266 = vst.msk [vmem:[%s371 + $0x78] sm:$0xff] %vm1182, %v1234
          %1267 = vst.msk [vmem:[%s371 + $0x80] sm:$0xff] %vm1182, %v1235
          %1268 = vst.msk [vmem:[%s371 + $0x88] sm:$0xff] %vm1182, %v1236
          %1269 = vst.msk [vmem:[%s371 + $0x90] sm:$0xff] %vm1182, %v1237
          %1270 = vst.msk [vmem:[%s371 + $0x98] sm:$0xff] %vm1182, %v1238
          %1271 = vst.msk [vmem:[%s371 + $0xa0] sm:$0xff] %vm1182, %v1239
          %1272 = vst.msk [vmem:[%s371 + $0xa8] sm:$0xff] %vm1182, %v1240
          %1273 = vst.msk [vmem:[%s371 + $0xb0] sm:$0xff] %vm1182, %v1241
          %1274 = vst.msk [vmem:[%s371 + $0xb8] sm:$0xff] %vm1182, %v1242
          %1275 = vst.msk [vmem:[%s371 + $0xc0] sm:$0xff] %vm1182, %v1243
          %1276 = vst.msk [vmem:[%s371 + $0xc8] sm:$0xff] %vm1182, %v1244
          %1277 = vst.msk [vmem:[%s371 + $0xd0] sm:$0xff] %vm1182, %v1245
          %1278 = vst.msk [vmem:[%s371 + $0xd8] sm:$0xff] %vm1182, %v1246
          %1279 = vst.msk [vmem:[%s371 + $0xe0] sm:$0xff] %vm1182, %v1247
          %1280 = vst.msk [vmem:[%s371 + $0xe8] sm:$0xff] %vm1182, %v1248
          %1281 = vst.msk [vmem:[%s371 + $0xf0] sm:$0xff] %vm1182, %v1249
          %1282 = vst.msk [vmem:[%s371 + $0xf8] sm:$0xff] %vm1182, %v1250
        $region78: #{gcn_encoder_forward.6} parent=65 // pred_fallthru
          _
        %s1283 = smul.u32 32, %s18
        %p1284 = scmp.lt.s32.totalorder %s1283, 95
        %s1285 = scalar_select %p1284, %s1283, 95
        %s1286 = smul.addr %s1285, 8
        %s1287 = scalar_lea.vmem %s3, %s1286
        // Predicated region
        $region79: #{gcn_encoder_forward.6} parent=65 // pred_check
          %p1288 = pneg %p119
        $region80: #{gcn_encoder_forward.6} parent=65 // pred_check_branch
          %1290 = sbr.rel (%p1288) target = $region82
        $region81: #{gcn_encoder_forward.6} parent=65 // pred_region
          %s1291 = smul.u32 32, %s18
        $region82: #{gcn_encoder_forward.6} parent=65 // pred_fallthru
          _
      $region66: #{gcn_encoder_forward.6} parent=5 // pred_fallthru
        _
      %p1292 = scmp.le.s32.totalorder 2, %s9
      // Predicated region
      $region83: #{gcn_encoder_forward.6} parent=5 // pred_check
        %p1293 = pneg %p1292
      $region84: #{gcn_encoder_forward.6} parent=5 // pred_check_branch
        %1295 = sbr.rel (%p1293) target = $region86
      $region85: #{gcn_encoder_forward.6} parent=5 // pred_region
        %s1296 = ssub.s32 %s9, 2
        // Predicated region
        $region87: #{gcn_encoder_forward.6} parent=85 // pred_check
          %p1297 = pneg %p125
        $region88: #{gcn_encoder_forward.6} parent=85 // pred_check_branch
          %1299 = sbr.rel (%p1297) target = $region90
        $region89: #{gcn_encoder_forward.6} parent=85 // pred_region
          %s1300 = smul.u32 32, %s20
          %p1301 = scmp.lt.s32.totalorder %s1300, 95
          %s1302 = scalar_select %p1301, %s1300, 95
          %s1303 = smul.addr %s1302, 8
          %s1304 = scalar_lea.vmem %s3, %s1303
        $region90: #{gcn_encoder_forward.6} parent=85 // pred_fallthru
          _
      $region86: #{gcn_encoder_forward.6} parent=5 // pred_fallthru
        _
    $region6: #{gcn_encoder_forward.6} parent=1 // loop_footer
      %s13 = sadd.s32 1, %s9
    $region7: #{gcn_encoder_forward.6} parent=1 // loop_footer_branch
      %8 = sbr.rel target = $region3
    $region8: #{gcn_encoder_forward.6} parent=1 // loop_exit
      _

// kernel: gcn_encoder_forward.4
$region0: #{gcn_encoder_forward.4}
  #allocation0 [shape = 'u32[]', space=smem, size = 0x4, offset = 0x4, fixed_abs, tag = 'smem constant byte address 0x4 - core index']
  #allocation1 [shape = 'u32[144,128]{1,0:T(1,128)}', space=vmem, size = 0x12000, scoped, tag = 'internal scratch']
  #allocation2 [shape = 'f32[256,64]{1,0:T(8,128)}', space=vmem, size = 0x20000, scoped, tag = 'scratch operand']
  %s0 = inlined_call_operand.vmem [shape: bf16[768,768], index: 0, kind: input, shape index: {}]
  %s1 = inlined_call_operand.vmem [shape: bf16[768,32], index: 1, kind: input, shape index: {}]
  %s2 = inlined_call_operand.vmem [shape: bf16[32,64], index: 2, kind: input, shape index: {}]
  %s3 = inlined_call_operand.vmem [shape: bf16[768,64], index: 3, kind: output, shape index: {}]
  %s4 = sld [smem:[#allocation0]]
  $region91: #{gcn_encoder_forward.4} parent=0
    _
  %s6 = ssub.s32 1, %s4
  %s7 = scalar_select 0, %s6, %s4
  $region1: #{gcn_encoder_forward.4} parent=0
    #allocation3 [shape = 'u8[262144]{0}', space=vmem, size = 0x40000, scoped, tag = 'input window, operand 0']
    loop: start=0, step=1, limit=11
    $region2: #{gcn_encoder_forward.4} parent=1 // loop_pre_header
      _
    $region3: #{gcn_encoder_forward.4} parent=1 // loop_header
      %s9 = sphi 0, %s13
      %p10 = scmp.ge.s32.totalorder %s9, 11
      %s16 = sphi 0, %s28
      %s17 = sphi 0, %s24
      %s18 = sphi 0, %s16
      %s19 = sphi 0, %s17
      %s20 = sphi 0, %s18
      %s21 = sphi 0, %s19
      %s33 = sphi 0, %s35
      %s36 = sphi 0, %s33
      %s37 = sphi 0, %s36
      %s53 = sphi 0, %s37
      %s59 = sphi 0, %s61
      %s62 = sphi 0, %s59
      %s63 = sphi 0, %s62
      %s79 = sphi 0, %s63
      %s83 = sphi 0, %s83
      %s85 = sphi 0, %s83
      %s86 = sphi 0, %s85
      %s100 = sphi 0, %s86
      %s106 = sphi 0, %s108
      %s109 = sphi 0, %s106
      %s110 = sphi 0, %s109
      %s126 = sphi 0, %s110
    $region4: #{gcn_encoder_forward.4} parent=1 // loop_header_branch
      %12 = sbr.rel (%p10) target = $region8
    $region5: #{gcn_encoder_forward.4} parent=1 // loop_body
      %s14 = ssub.s32 %s9, 1
      %s15 = ssub.s32 %s9, 2
      %s22 = sadd.s32 1, %s17
      %p23 = scmp.ge.s32.totalorder %s22, 3
      %s24 = scalar_select %p23, 0, %s22
      %s25 = sadd.s32 1, %s16
      %s26 = scalar_select %p23, %s25, %s16
      %p27 = scmp.ge.s32.totalorder %s26, 3
      %s28 = scalar_select %p27, 0, %s26
      %s29 = ssub.s32 %s16, %s28
      %s30 = ssub.s32 %s17, %s24
      %s31 = sor.u32 %s29, %s30
      %p32 = scmp.eq.s32.totalorder %s31, 0
      %s34 = sadd.s32 %s33, 1
      %s35 = scalar_select %p32, %s33, %s34
      %p38 = pneg %p32
      %p39 = scmp.eq.s32.totalorder %s9, 8
      %p40 = por %p38, %p39
      %p41 = scmp.ne.s32.totalorder %s33, %s36
      %p42 = scmp.eq.s32.totalorder %s9, 0
      %p43 = por %p41, %p42
      %p44 = scmp.ne.s32.totalorder %s33, %s36
      %p45 = scmp.eq.s32.totalorder %s14, 8
      %p46 = por %p44, %p45
      %p47 = scmp.ne.s32.totalorder %s36, %s37
      %p48 = scmp.eq.s32.totalorder %s14, 0
      %p49 = por %p47, %p48
      %p50 = scmp.ne.s32.totalorder %s36, %s37
      %p51 = scmp.eq.s32.totalorder %s15, 8
      %p52 = por %p50, %p51
      %p54 = scmp.ne.s32.totalorder %s37, %s53
      %p55 = scmp.eq.s32.totalorder %s15, 0
      %p56 = por %p54, %p55
      %s57 = ssub.s32 %s17, %s24
      %p58 = scmp.eq.s32.totalorder %s57, 0
      %s60 = sadd.s32 %s59, 1
      %s61 = scalar_select %p58, %s59, %s60
      %p64 = pneg %p58
      %p65 = scmp.eq.s32.totalorder %s9, 8
      %p66 = por %p64, %p65
      %p67 = scmp.ne.s32.totalorder %s59, %s62
      %p68 = scmp.eq.s32.totalorder %s9, 0
      %p69 = por %p67, %p68
      %p70 = scmp.ne.s32.totalorder %s59, %s62
      %p71 = scmp.eq.s32.totalorder %s14, 8
      %p72 = por %p70, %p71
      %p73 = scmp.ne.s32.totalorder %s62, %s63
      %p74 = scmp.eq.s32.totalorder %s14, 0
      %p75 = por %p73, %p74
      %p76 = scmp.ne.s32.totalorder %s62, %s63
      %p77 = scmp.eq.s32.totalorder %s15, 8
      %p78 = por %p76, %p77
      %p80 = scmp.ne.s32.totalorder %s63, %s79
      %p81 = scmp.eq.s32.totalorder %s15, 0
      %p82 = por %p80, %p81
      %s84 = sadd.s32 %s83, 1
      %p87 = scmp.eq.s32.totalorder %s9, 8
      %p88 = scmp.ne.s32.totalorder %s83, %s85
      %p89 = scmp.eq.s32.totalorder %s9, 0
      %p90 = por %p88, %p89
      %p91 = scmp.ne.s32.totalorder %s83, %s85
      %p92 = scmp.eq.s32.totalorder %s14, 8
      %p93 = por %p91, %p92
      %p94 = scmp.ne.s32.totalorder %s85, %s86
      %p95 = scmp.eq.s32.totalorder %s14, 0
      %p96 = por %p94, %p95
      %p97 = scmp.ne.s32.totalorder %s85, %s86
      %p98 = scmp.eq.s32.totalorder %s15, 8
      %p99 = por %p97, %p98
      %p101 = scmp.ne.s32.totalorder %s86, %s100
      %p102 = scmp.eq.s32.totalorder %s15, 0
      %p103 = por %p101, %p102
      %s104 = ssub.s32 %s16, %s28
      %p105 = scmp.eq.s32.totalorder %s104, 0
      %s107 = sadd.s32 %s106, 1
      %s108 = scalar_select %p105, %s106, %s107
      %p111 = pneg %p105
      %p112 = scmp.eq.s32.totalorder %s9, 8
      %p113 = por %p111, %p112
      %p114 = scmp.ne.s32.totalorder %s106, %s109
      %p115 = scmp.eq.s32.totalorder %s9, 0
      %p116 = por %p114, %p115
      %p117 = scmp.ne.s32.totalorder %s106, %s109
      %p118 = scmp.eq.s32.totalorder %s14, 8
      %p119 = por %p117, %p118
      %p120 = scmp.ne.s32.totalorder %s109, %s110
      %p121 = scmp.eq.s32.totalorder %s14, 0
      %p122 = por %p120, %p121
      %p123 = scmp.ne.s32.totalorder %s109, %s110
      %p124 = scmp.eq.s32.totalorder %s15, 8
      %p125 = por %p123, %p124
      %p127 = scmp.ne.s32.totalorder %s110, %s126
      %p128 = scmp.eq.s32.totalorder %s15, 0
      %p129 = por %p127, %p128
      %p130 = scmp.le.s32.totalorder 1, %s9
      %p131 = scmp.lt.s32.totalorder %s9, 10
      %p132 = pnand %p130, %p131
      %p133 = pneg %p132
      // Predicated region
      $region9: #{gcn_encoder_forward.4} parent=5 // pred_check
        _
      $region10: #{gcn_encoder_forward.4} parent=5 // pred_check_branch
        %135 = sbr.rel (%p132) target = $region12
      $region11: #{gcn_encoder_forward.4} parent=5 // pred_region
        %s136 = ssub.s32 %s9, 1
        // Predicated region
        $region13: #{gcn_encoder_forward.4} parent=11 // pred_check
          %p137 = pneg %p96
        $region14: #{gcn_encoder_forward.4} parent=11 // pred_check_branch
          %139 = sbr.rel (%p137) target = $region16
        $region15: #{gcn_encoder_forward.4} parent=11 // pred_region
          _
        $region16: #{gcn_encoder_forward.4} parent=11 // pred_fallthru
          _
      $region12: #{gcn_encoder_forward.4} parent=5 // pred_fallthru
        _
      %p140 = scmp.lt.s32.totalorder %s9, 9
      // Predicated region
      $region17: #{gcn_encoder_forward.4} parent=5 // pred_check
        %p141 = pneg %p140
      $region18: #{gcn_encoder_forward.4} parent=5 // pred_check_branch
        %143 = sbr.rel (%p141) target = $region20
      $region19: #{gcn_encoder_forward.4} parent=5 // pred_region
        // Predicated region
        $region21: #{gcn_encoder_forward.4} parent=19 // pred_check
          %p144 = pneg %p43
        $region22: #{gcn_encoder_forward.4} parent=19 // pred_check_branch
          %146 = sbr.rel (%p144) target = $region24
        $region23: #{gcn_encoder_forward.4} parent=19 // pred_region
          %s147 = sand.u32 %s33, 1
          %s148 = sand.u32 %s33, 1
          %s149 = smul.addr %s148, 256
          %s150 = scalar_lea.vmem [#allocation3], %s149
          %s151 = smul.u32 32, %s16
          %s152 = smul.u32 2, %s17
          %s153 = smul.addr %s151, 6
          %s154 = sadd.s32 %s152, %s153
          %s155 = smul.addr %s154, 4
          %s156 = scalar_lea.vmem %s0, %s155
          // Predicated region
          $region25: #{gcn_encoder_forward.4} parent=23 // pred_check
            _
          $region26: #{gcn_encoder_forward.4} parent=23 // pred_check_branch
            %158 = sbr.rel (0) target = $region28
          $region27: #{gcn_encoder_forward.4} parent=23 // pred_region
            // Predicated region
            $region29: #{gcn_encoder_forward.4} parent=27 // pred_check
              _
            $region30: #{gcn_encoder_forward.4} parent=27 // pred_check_branch
              %160 = sbr.rel (0) target = $region32
            $region31: #{gcn_encoder_forward.4} parent=27 // pred_region
              // Predicated region
              $region44: #{gcn_encoder_forward.4} parent=31 // pred_check
                _
              $region45: #{gcn_encoder_forward.4} parent=31 // pred_check_branch
                %238 = sbr.rel (0) target = $region47
              $region46: #{gcn_encoder_forward.4} parent=31 // pred_region
                loop: start=0, step=1, limit=1
                $region48: #{gcn_encoder_forward.4} parent=46 // loop_pre_header
                  _
                $region49: #{gcn_encoder_forward.4} parent=46 // loop_header
                  %s240 = sphi 0, %s244
                  %p241 = scmp.ge.s32.totalorder %s240, 1
                  %s245 = sphi %s156, %s156
                  %s246 = sphi %s150, %s150
                $region50: #{gcn_encoder_forward.4} parent=46 // loop_header_branch
                  %243 = sbr.rel (%p241) target = $region54
                $region51: #{gcn_encoder_forward.4} parent=46 // loop_body
                  %v247 = vld [vmem:[%s245] sm:$0xff]
                  %248 = vst [vmem:[%s246] sm:$0xff] %v247
                  %v249 = vld [vmem:[%s245 + $0x18] sm:$0xff]
                  %250 = vst [vmem:[%s246 + $0x8] sm:$0xff] %v249
                  %v251 = vld [vmem:[%s245 + $0x30] sm:$0xff]
                  %252 = vst [vmem:[%s246 + $0x10] sm:$0xff] %v251
                  %v253 = vld [vmem:[%s245 + $0x48] sm:$0xff]
                  %254 = vst [vmem:[%s246 + $0x18] sm:$0xff] %v253
                  %v255 = vld [vmem:[%s245 + $0x60] sm:$0xff]
                  %256 = vst [vmem:[%s246 + $0x20] sm:$0xff] %v255
                  %v257 = vld [vmem:[%s245 + $0x78] sm:$0xff]
                  %258 = vst [vmem:[%s246 + $0x28] sm:$0xff] %v257
                  %v259 = vld [vmem:[%s245 + $0x90] sm:$0xff]
                  %260 = vst [vmem:[%s246 + $0x30] sm:$0xff] %v259
                  %v261 = vld [vmem:[%s245 + $0xa8] sm:$0xff]
                  %262 = vst [vmem:[%s246 + $0x38] sm:$0xff] %v261
                  %v263 = vld [vmem:[%s245 + $0xc0] sm:$0xff]
                  %264 = vst [vmem:[%s246 + $0x40] sm:$0xff] %v263
                  %v265 = vld [vmem:[%s245 + $0xd8] sm:$0xff]
                  %266 = vst [vmem:[%s246 + $0x48] sm:$0xff] %v265
                  %v267 = vld [vmem:[%s245 + $0xf0] sm:$0xff]
                  %268 = vst [vmem:[%s246 + $0x50] sm:$0xff] %v267
                  %v269 = vld [vmem:[%s245 + $0x108] sm:$0xff]
                  %270 = vst [vmem:[%s246 + $0x58] sm:$0xff] %v269
                  %v271 = vld [vmem:[%s245 + $0x120] sm:$0xff]
                  %272 = vst [vmem:[%s246 + $0x60] sm:$0xff] %v271
                  %v273 = vld [vmem:[%s245 + $0x138] sm:$0xff]
                  %274 = vst [vmem:[%s246 + $0x68] sm:$0xff] %v273
                  %v275 = vld [vmem:[%s245 + $0x150] sm:$0xff]
                  %276 = vst [vmem:[%s246 + $0x70] sm:$0xff] %v275
                  %v277 = vld [vmem:[%s245 + $0x168] sm:$0xff]
                  %278 = vst [vmem:[%s246 + $0x78] sm:$0xff] %v277
                  %v279 = vld [vmem:[%s245 + $0x180] sm:$0xff]
                  %280 = vst [vmem:[%s246 + $0x80] sm:$0xff] %v279
                  %v281 = vld [vmem:[%s245 + $0x198] sm:$0xff]
                  %282 = vst [vmem:[%s246 + $0x88] sm:$0xff] %v281
                  %v283 = vld [vmem:[%s245 + $0x1b0] sm:$0xff]
                  %284 = vst [vmem:[%s246 + $0x90] sm:$0xff] %v283
                  %v285 = vld [vmem:[%s245 + $0x1c8] sm:$0xff]
                  %286 = vst [vmem:[%s246 + $0x98] sm:$0xff] %v285
                  %v287 = vld [vmem:[%s245 + $0x1e0] sm:$0xff]
                  %288 = vst [vmem:[%s246 + $0xa0] sm:$0xff] %v287
                  %v289 = vld [vmem:[%s245 + $0x1f8] sm:$0xff]
                  %290 = vst [vmem:[%s246 + $0xa8] sm:$0xff] %v289
                  %v291 = vld [vmem:[%s245 + $0x210] sm:$0xff]
                  %292 = vst [vmem:[%s246 + $0xb0] sm:$0xff] %v291
                  %v293 = vld [vmem:[%s245 + $0x228] sm:$0xff]
                  %294 = vst [vmem:[%s246 + $0xb8] sm:$0xff] %v293
                  %v295 = vld [vmem:[%s245 + $0x240] sm:$0xff]
                  %296 = vst [vmem:[%s246 + $0xc0] sm:$0xff] %v295
                  %v297 = vld [vmem:[%s245 + $0x258] sm:$0xff]
                  %298 = vst [vmem:[%s246 + $0xc8] sm:$0xff] %v297
                  %v299 = vld [vmem:[%s245 + $0x270] sm:$0xff]
                  %300 = vst [vmem:[%s246 + $0xd0] sm:$0xff] %v299
                  %v301 = vld [vmem:[%s245 + $0x288] sm:$0xff]
                  %302 = vst [vmem:[%s246 + $0xd8] sm:$0xff] %v301
                  %v303 = vld [vmem:[%s245 + $0x2a0] sm:$0xff]
                  %304 = vst [vmem:[%s246 + $0xe0] sm:$0xff] %v303
                  %v305 = vld [vmem:[%s245 + $0x2b8] sm:$0xff]
                  %306 = vst [vmem:[%s246 + $0xe8] sm:$0xff] %v305
                  %v307 = vld [vmem:[%s245 + $0x2d0] sm:$0xff]
                  %308 = vst [vmem:[%s246 + $0xf0] sm:$0xff] %v307
                  %v309 = vld [vmem:[%s245 + $0x2e8] sm:$0xff]
                  %310 = vst [vmem:[%s246 + $0xf8] sm:$0xff] %v309
                $region52: #{gcn_encoder_forward.4} parent=46 // loop_footer
                  %s244 = sadd.s32 1, %s240
                $region53: #{gcn_encoder_forward.4} parent=46 // loop_footer_branch
                  %239 = sbr.rel target = $region49
                $region54: #{gcn_encoder_forward.4} parent=46 // loop_exit
                  _
              $region47: #{gcn_encoder_forward.4} parent=31 // pred_fallthru
                _
              // Predicated region
              $region55: #{gcn_encoder_forward.4} parent=31 // pred_check
                _
              $region56: #{gcn_encoder_forward.4} parent=31 // pred_check_branch
                %312 = sbr.rel target = $region58
              $region57: #{gcn_encoder_forward.4} parent=31 // pred_region
                _
              $region58: #{gcn_encoder_forward.4} parent=31 // pred_fallthru
                _
            $region32: #{gcn_encoder_forward.4} parent=27 // pred_fallthru
              _
            // Predicated region
            $region33: #{gcn_encoder_forward.4} parent=27 // pred_check
              _
            $region34: #{gcn_encoder_forward.4} parent=27 // pred_check_branch
              %162 = sbr.rel target = $region36
            $region35: #{gcn_encoder_forward.4} parent=27 // pred_region
              %s164 = ssub.s32 256, 1
              loop: start=0, step=1, limit=1
              $region37: #{gcn_encoder_forward.4} parent=35 // loop_pre_header
                _
              $region38: #{gcn_encoder_forward.4} parent=35 // loop_header
                %s166 = sphi 0, %s170
                %p167 = scmp.ge.s32.totalorder %s166, 1
                %s171 = sphi %s156, %s156
                %s172 = sphi %s150, %s150
              $region39: #{gcn_encoder_forward.4} parent=35 // loop_header_branch
                %169 = sbr.rel (%p167) target = $region43
              $region40: #{gcn_encoder_forward.4} parent=35 // loop_body
                %v173 = vld [vmem:[%s171] sm:%s164]
                %174 = vst [vmem:[%s172] sm:%s164] %v173
                %v175 = vld [vmem:[%s171 + $0x18] sm:%s164]
                %176 = vst [vmem:[%s172 + $0x8] sm:%s164] %v175
                %v177 = vld [vmem:[%s171 + $0x30] sm:%s164]
                %178 = vst [vmem:[%s172 + $0x10] sm:%s164] %v177
                %v179 = vld [vmem:[%s171 + $0x48] sm:%s164]
                %180 = vst [vmem:[%s172 + $0x18] sm:%s164] %v179
                %v181 = vld [vmem:[%s171 + $0x60] sm:%s164]
                %182 = vst [vmem:[%s172 + $0x20] sm:%s164] %v181
                %v183 = vld [vmem:[%s171 + $0x78] sm:%s164]
                %184 = vst [vmem:[%s172 + $0x28] sm:%s164] %v183
                %v185 = vld [vmem:[%s171 + $0x90] sm:%s164]
                %186 = vst [vmem:[%s172 + $0x30] sm:%s164] %v185
                %v187 = vld [vmem:[%s171 + $0xa8] sm:%s164]
                %188 = vst [vmem:[%s172 + $0x38] sm:%s164] %v187
                %v189 = vld [vmem:[%s171 + $0xc0] sm:%s164]
                %190 = vst [vmem:[%s172 + $0x40] sm:%s164] %v189
                %v191 = vld [vmem:[%s171 + $0xd8] sm:%s164]
                %192 = vst [vmem:[%s172 + $0x48] sm:%s164] %v191
                %v193 = vld [vmem:[%s171 + $0xf0] sm:%s164]
                %194 = vst [vmem:[%s172 + $0x50] sm:%s164] %v193
                %v195 = vld [vmem:[%s171 + $0x108] sm:%s164]
                %196 = vst [vmem:[%s172 + $0x58] sm:%s164] %v195
                %v197 = vld [vmem:[%s171 + $0x120] sm:%s164]
                %198 = vst [vmem:[%s172 + $0x60] sm:%s164] %v197
                %v199 = vld [vmem:[%s171 + $0x138] sm:%s164]
                %200 = vst [vmem:[%s172 + $0x68] sm:%s164] %v199
                %v201 = vld [vmem:[%s171 + $0x150] sm:%s164]
                %202 = vst [vmem:[%s172 + $0x70] sm:%s164] %v201
                %v203 = vld [vmem:[%s171 + $0x168] sm:%s164]
                %204 = vst [vmem:[%s172 + $0x78] sm:%s164] %v203
                %v205 = vld [vmem:[%s171 + $0x180] sm:%s164]
                %206 = vst [vmem:[%s172 + $0x80] sm:%s164] %v205
                %v207 = vld [vmem:[%s171 + $0x198] sm:%s164]
                %208 = vst [vmem:[%s172 + $0x88] sm:%s164] %v207
                %v209 = vld [vmem:[%s171 + $0x1b0] sm:%s164]
                %210 = vst [vmem:[%s172 + $0x90] sm:%s164] %v209
                %v211 = vld [vmem:[%s171 + $0x1c8] sm:%s164]
                %212 = vst [vmem:[%s172 + $0x98] sm:%s164] %v211
                %v213 = vld [vmem:[%s171 + $0x1e0] sm:%s164]
                %214 = vst [vmem:[%s172 + $0xa0] sm:%s164] %v213
                %v215 = vld [vmem:[%s171 + $0x1f8] sm:%s164]
                %216 = vst [vmem:[%s172 + $0xa8] sm:%s164] %v215
                %v217 = vld [vmem:[%s171 + $0x210] sm:%s164]
                %218 = vst [vmem:[%s172 + $0xb0] sm:%s164] %v217
                %v219 = vld [vmem:[%s171 + $0x228] sm:%s164]
                %220 = vst [vmem:[%s172 + $0xb8] sm:%s164] %v219
                %v221 = vld [vmem:[%s171 + $0x240] sm:%s164]
                %222 = vst [vmem:[%s172 + $0xc0] sm:%s164] %v221
                %v223 = vld [vmem:[%s171 + $0x258] sm:%s164]
                %224 = vst [vmem:[%s172 + $0xc8] sm:%s164] %v223
                %v225 = vld [vmem:[%s171 + $0x270] sm:%s164]
                %226 = vst [vmem:[%s172 + $0xd0] sm:%s164] %v225
                %v227 = vld [vmem:[%s171 + $0x288] sm:%s164]
                %228 = vst [vmem:[%s172 + $0xd8] sm:%s164] %v227
                %v229 = vld [vmem:[%s171 + $0x2a0] sm:%s164]
                %230 = vst [vmem:[%s172 + $0xe0] sm:%s164] %v229
                %v231 = vld [vmem:[%s171 + $0x2b8] sm:%s164]
                %232 = vst [vmem:[%s172 + $0xe8] sm:%s164] %v231
                %v233 = vld [vmem:[%s171 + $0x2d0] sm:%s164]
                %234 = vst [vmem:[%s172 + $0xf0] sm:%s164] %v233
                %v235 = vld [vmem:[%s171 + $0x2e8] sm:%s164]
                %236 = vst [vmem:[%s172 + $0xf8] sm:%s164] %v235
              $region41: #{gcn_encoder_forward.4} parent=35 // loop_footer
                %s170 = sadd.s32 1, %s166
              $region42: #{gcn_encoder_forward.4} parent=35 // loop_footer_branch
                %165 = sbr.rel target = $region38
              $region43: #{gcn_encoder_forward.4} parent=35 // loop_exit
                _
            $region36: #{gcn_encoder_forward.4} parent=27 // pred_fallthru
              _
          $region28: #{gcn_encoder_forward.4} parent=23 // pred_fallthru
            _
          %313 = vnop
        $region24: #{gcn_encoder_forward.4} parent=19 // pred_fallthru
          _
        // Predicated region
        $region59: #{gcn_encoder_forward.4} parent=19 // pred_check
          %p314 = pneg %p69
        $region60: #{gcn_encoder_forward.4} parent=19 // pred_check_branch
          %316 = sbr.rel (%p314) target = $region62
        $region61: #{gcn_encoder_forward.4} parent=19 // pred_region
          %s317 = smul.u32 32, %s17
          %p318 = scmp.lt.s32.totalorder %s317, 95
          %s319 = scalar_select %p318, %s317, 95
          %s320 = smul.addr %s319, 4
          %s321 = scalar_lea.vmem %s1, %s320
          %s322 = smul.u32 32, %s17
        $region62: #{gcn_encoder_forward.4} parent=19 // pred_fallthru
          _
      $region20: #{gcn_encoder_forward.4} parent=5 // pred_fallthru
        _
      %p323 = scmp.le.s32.totalorder 1, %s9
      %p324 = scmp.lt.s32.totalorder %s9, 10
      %p325 = pnand %p323, %p324
      %p326 = pneg %p325
      // Predicated region
      $region63: #{gcn_encoder_forward.4} parent=5 // pred_check
        _
      $region64: #{gcn_encoder_forward.4} parent=5 // pred_check_branch
        %328 = sbr.rel (%p325) target = $region66
      $region65: #{gcn_encoder_forward.4} parent=5 // pred_region
        %s329 = ssub.s32 %s9, 1
        %s330 = sand.u32 %s36, 1
        %s331 = sand.u32 %s36, 1
        %s332 = smul.addr %s331, 256
        %s333 = scalar_lea.vmem [#allocation3], %s332
        // Predicated region
        $region67: #{gcn_encoder_forward.4} parent=65 // pred_check
          %p334 = pneg %p49
        $region68: #{gcn_encoder_forward.4} parent=65 // pred_check_branch
          %336 = sbr.rel (%p334) target = $region70
        $region69: #{gcn_encoder_forward.4} parent=65 // pred_region
          _
        $region70: #{gcn_encoder_forward.4} parent=65 // pred_fallthru
          _
        %s337 = sand.u32 %s36, 1
        %s338 = sand.u32 %s36, 1
        %s339 = smul.addr %s338, 256
        %s340 = scalar_lea.vmem [#allocation3], %s339
        %p341 = pneg %p49
        %p342 = pneg %p46
        %s343 = smul.u32 32, %s19
        %p344 = scmp.lt.s32.totalorder %s343, 95
        %s345 = scalar_select %p344, %s343, 95
        %s346 = smul.addr %s345, 4
        %s347 = scalar_lea.vmem %s1, %s346
        %p348 = pneg %p75
        %p349 = pneg %p72
        %p350 = pneg %p96
        %p351 = pneg %p93
        %p352 = pneg %p122
        %p353 = pneg %p119
        %s354 = smul.u32 32, %s18
        %p355 = scmp.lt.s32.totalorder %s354, 95
        %s356 = scalar_select %p355, %s354, 95
        %s357 = smul.addr %s356, 4
        %s358 = scalar_lea.vmem %s3, %s357
        %s359 = smul.u32 32, %s18
        %s360 = smul.u32 2, %s19
        %s361 = smul.u32 32, %s19
        %p362 = scmp.lt.s32.totalorder %s361, 95
        %s363 = scalar_select %p362, %s361, 95
        %s364 = smul.addr %s363, 4
        %s365 = scalar_lea.vmem %s1, %s364
        %s366 = smul.u32 32, %s19
        %s367 = smul.u32 32, %s18
        %p368 = scmp.lt.s32.totalorder %s367, 95
        %s369 = scalar_select %p368, %s367, 95
        %s370 = smul.addr %s369, 4
        %s371 = scalar_lea.vmem %s3, %s370
        %s372 = smul.u32 32, %s18
        %p374 = scmp.eq.s32.totalorder %s19, 0
        // Predicated region
        $region71: #{gcn_encoder_forward.4} parent=65 // pred_check
          %p375 = pneg %p374
        $region72: #{gcn_encoder_forward.4} parent=65 // pred_check_branch
          %377 = sbr.rel (%p375) target = $region74
        $region73: #{gcn_encoder_forward.4} parent=65 // pred_region
          %vm378 = vcmask 523264
          %379 = vst.msk [vmem:[#allocation2] sm:$0xff] %vm378, 0.0
          %380 = vst.msk [vmem:[#allocation2 + $0x8] sm:$0xff] %vm378, 0.0
          %381 = vst.msk [vmem:[#allocation2 + $0x10] sm:$0xff] %vm378, 0.0
          %382 = vst.msk [vmem:[#allocation2 + $0x18] sm:$0xff] %vm378, 0.0
          %383 = vst.msk [vmem:[#allocation2 + $0x20] sm:$0xff] %vm378, 0.0
          %384 = vst.msk [vmem:[#allocation2 + $0x28] sm:$0xff] %vm378, 0.0
          %385 = vst.msk [vmem:[#allocation2 + $0x30] sm:$0xff] %vm378, 0.0
          %386 = vst.msk [vmem:[#allocation2 + $0x38] sm:$0xff] %vm378, 0.0
          %387 = vst.msk [vmem:[#allocation2 + $0x40] sm:$0xff] %vm378, 0.0
          %388 = vst.msk [vmem:[#allocation2 + $0x48] sm:$0xff] %vm378, 0.0
          %389 = vst.msk [vmem:[#allocation2 + $0x50] sm:$0xff] %vm378, 0.0
          %390 = vst.msk [vmem:[#allocation2 + $0x58] sm:$0xff] %vm378, 0.0
          %391 = vst.msk [vmem:[#allocation2 + $0x60] sm:$0xff] %vm378, 0.0
          %392 = vst.msk [vmem:[#allocation2 + $0x68] sm:$0xff] %vm378, 0.0
          %393 = vst.msk [vmem:[#allocation2 + $0x70] sm:$0xff] %vm378, 0.0
          %394 = vst.msk [vmem:[#allocation2 + $0x78] sm:$0xff] %vm378, 0.0
          %395 = vst.msk [vmem:[#allocation2 + $0x80] sm:$0xff] %vm378, 0.0
          %396 = vst.msk [vmem:[#allocation2 + $0x88] sm:$0xff] %vm378, 0.0
          %397 = vst.msk [vmem:[#allocation2 + $0x90] sm:$0xff] %vm378, 0.0
          %398 = vst.msk [vmem:[#allocation2 + $0x98] sm:$0xff] %vm378, 0.0
          %399 = vst.msk [vmem:[#allocation2 + $0xa0] sm:$0xff] %vm378, 0.0
          %400 = vst.msk [vmem:[#allocation2 + $0xa8] sm:$0xff] %vm378, 0.0
          %401 = vst.msk [vmem:[#allocation2 + $0xb0] sm:$0xff] %vm378, 0.0
          %402 = vst.msk [vmem:[#allocation2 + $0xb8] sm:$0xff] %vm378, 0.0
          %403 = vst.msk [vmem:[#allocation2 + $0xc0] sm:$0xff] %vm378, 0.0
          %404 = vst.msk [vmem:[#allocation2 + $0xc8] sm:$0xff] %vm378, 0.0
          %405 = vst.msk [vmem:[#allocation2 + $0xd0] sm:$0xff] %vm378, 0.0
          %406 = vst.msk [vmem:[#allocation2 + $0xd8] sm:$0xff] %vm378, 0.0
          %407 = vst.msk [vmem:[#allocation2 + $0xe0] sm:$0xff] %vm378, 0.0
          %408 = vst.msk [vmem:[#allocation2 + $0xe8] sm:$0xff] %vm378, 0.0
          %409 = vst.msk [vmem:[#allocation2 + $0xf0] sm:$0xff] %vm378, 0.0
          %410 = vst.msk [vmem:[#allocation2 + $0xf8] sm:$0xff] %vm378, 0.0
        $region74: #{gcn_encoder_forward.4} parent=65 // pred_fallthru
          _
        %v411 = vld [vmem:[%s365] sm:$0xf]
        %v412 = vld [vmem:[%s365 + $0x4] sm:$0xf]
        %v413 = vld [vmem:[%s365 + $0x8] sm:$0xf]
        %v414 = vld [vmem:[%s365 + $0xc] sm:$0xf]
        %v415 = vld [vmem:[%s365 + $0x10] sm:$0xf]
        %v416 = vld [vmem:[%s365 + $0x14] sm:$0xf]
        %v417 = vld [vmem:[%s365 + $0x18] sm:$0xf]
        %v418 = vld [vmem:[%s365 + $0x1c] sm:$0xf]
        %v419 = vld [vmem:[%s365 + $0x20] sm:$0xf]
        %v420 = vld [vmem:[%s365 + $0x24] sm:$0xf]
        %v421 = vld [vmem:[%s365 + $0x28] sm:$0xf]
        %v422 = vld [vmem:[%s365 + $0x2c] sm:$0xf]
        %v423 = vld [vmem:[%s365 + $0x30] sm:$0xf]
        %v424 = vld [vmem:[%s365 + $0x34] sm:$0xf]
        %v425 = vld [vmem:[%s365 + $0x38] sm:$0xf]
        %v426 = vld [vmem:[%s365 + $0x3c] sm:$0xf]
        %v427 = vld [vmem:[%s365 + $0x40] sm:$0xf]
        %v428 = vld [vmem:[%s365 + $0x44] sm:$0xf]
        %v429 = vld [vmem:[%s365 + $0x48] sm:$0xf]
        %v430 = vld [vmem:[%s365 + $0x4c] sm:$0xf]
        %v431 = vld [vmem:[%s365 + $0x50] sm:$0xf]
        %v432 = vld [vmem:[%s365 + $0x54] sm:$0xf]
        %v433 = vld [vmem:[%s365 + $0x58] sm:$0xf]
        %v434 = vld [vmem:[%s365 + $0x5c] sm:$0xf]
        %v435 = vld [vmem:[%s365 + $0x60] sm:$0xf]
        %v436 = vld [vmem:[%s365 + $0x64] sm:$0xf]
        %v437 = vld [vmem:[%s365 + $0x68] sm:$0xf]
        %v438 = vld [vmem:[%s365 + $0x6c] sm:$0xf]
        %v439 = vld [vmem:[%s365 + $0x70] sm:$0xf]
        %v440 = vld [vmem:[%s365 + $0x74] sm:$0xf]
        %v441 = vld [vmem:[%s365 + $0x78] sm:$0xf]
        %v442 = vld [vmem:[%s365 + $0x7c] sm:$0xf]
        %v443 = vld [vmem:[%s2] sm:$0xf]
        %v444 = vld [vmem:[%s2 + $0x4] sm:$0xf]
        %v445 = vld [vmem:[%s2 + $0x8] sm:$0xf]
        %v446 = vld [vmem:[%s2 + $0xc] sm:$0xf]
        %v479 = vunpack.c.l.b16 %v411
        %v480 = vunpack.c.l.b16 %v412
        %v481 = vunpack.c.l.b16 %v413
        %v482 = vunpack.c.l.b16 %v414
        %v483 = vunpack.c.l.b16 %v415
        %v484 = vunpack.c.l.b16 %v416
        %v485 = vunpack.c.l.b16 %v417
        %v486 = vunpack.c.l.b16 %v418
        %v487 = vunpack.c.l.b16 %v419
        %v488 = vunpack.c.l.b16 %v420
        %v489 = vunpack.c.l.b16 %v421
        %v490 = vunpack.c.l.b16 %v422
        %v491 = vunpack.c.l.b16 %v423
        %v492 = vunpack.c.l.b16 %v424
        %v493 = vunpack.c.l.b16 %v425
        %v494 = vunpack.c.l.b16 %v426
        %v495 = vunpack.c.l.b16 %v427
        %v496 = vunpack.c.l.b16 %v428
        %v497 = vunpack.c.l.b16 %v429
        %v498 = vunpack.c.l.b16 %v430
        %v499 = vunpack.c.l.b16 %v431
        %v500 = vunpack.c.l.b16 %v432
        %v501 = vunpack.c.l.b16 %v433
        %v502 = vunpack.c.l.b16 %v434
        %v503 = vunpack.c.l.b16 %v435
        %v504 = vunpack.c.l.b16 %v436
        %v505 = vunpack.c.l.b16 %v437
        %v506 = vunpack.c.l.b16 %v438
        %v507 = vunpack.c.l.b16 %v439
        %v508 = vunpack.c.l.b16 %v440
        %v509 = vunpack.c.l.b16 %v441
        %v510 = vunpack.c.l.b16 %v442
        %v511 = vpack.c.b16 %v480, %v479
        %v512 = vpack.c.b16 %v482, %v481
        %v513 = vpack.c.b16 %v484, %v483
        %v514 = vpack.c.b16 %v486, %v485
        %v515 = vpack.c.b16 %v488, %v487
        %v516 = vpack.c.b16 %v490, %v489
        %v517 = vpack.c.b16 %v492, %v491
        %v518 = vpack.c.b16 %v494, %v493
        %v519 = vpack.c.b16 %v496, %v495
        %v520 = vpack.c.b16 %v498, %v497
        %v521 = vpack.c.b16 %v500, %v499
        %v522 = vpack.c.b16 %v502, %v501
        %v523 = vpack.c.b16 %v504, %v503
        %v524 = vpack.c.b16 %v506, %v505
        %v525 = vpack.c.b16 %v508, %v507
        %v526 = vpack.c.b16 %v510, %v509
        %v531 = vunpack.c.l.b16 %v443
        %v532 = vunpack.c.l.b16 %v444
        %v533 = vunpack.c.l.b16 %v445
        %v534 = vunpack.c.l.b16 %v446
        %v535 = vpack.c.b16 %v532, %v531
        %v536 = vpack.c.b16 %v534, %v533
        %vm539 = vcmask 261120
        %v541 = vsel %vm539, %v511, 0
        %v544 = vsel %vm539, %v512, 0
        %v547 = vsel %vm539, %v513, 0
        %v550 = vsel %vm539, %v514, 0
        %v553 = vsel %vm539, %v515, 0
        %v556 = vsel %vm539, %v516, 0
        %v559 = vsel %vm539, %v517, 0
        %v562 = vsel %vm539, %v518, 0
        %v565 = vsel %vm539, %v519, 0
        %v568 = vsel %vm539, %v520, 0
        %v571 = vsel %vm539, %v521, 0
        %v574 = vsel %vm539, %v522, 0
        %v577 = vsel %vm539, %v523, 0
        %v580 = vsel %vm539, %v524, 0
        %v583 = vsel %vm539, %v525, 0
        %v586 = vsel %vm539, %v526, 0
        %588 = vmatprep.subr.bf16.mxu0 0
        %589 = vmatpush1.bf16.msra.mxu0 0
        %590 = vmatprep.subr.bf16.mxu0 0
        %591 = vmatpush1.bf16.msra.mxu0 0
        %592 = vmatprep.subr.bf16.mxu0 0
        %593 = vmatpush1.bf16.msra.mxu0 0
        %594 = vmatprep.subr.bf16.mxu0 0
        %595 = vmatpush1.bf16.msra.mxu0 0
        %596 = vmatprep.subr.bf16.mxu0 0
        %597 = vmatpush1.bf16.msra.mxu0 0
        %598 = vmatprep.subr.bf16.mxu0 0
        %599 = vmatpush1.bf16.msra.mxu0 0
        %600 = vmatprep.subr.bf16.mxu0 0
        %601 = vmatpush1.bf16.msra.mxu0 %v536
        %602 = vmatprep.subr.bf16.mxu0 0
        %603 = vmatpush1.bf16.msra.mxu0 %v535
        %604 = vmatprep.subr.bf16.mxu0 0
        %605 = vmatpush2.bf16.msra.mxu0 0
        %606 = vmatprep.subr.bf16.mxu0 0
        %607 = vmatpush2.bf16.msra.mxu0 0
        %608 = vmatprep.subr.bf16.mxu0 0
        %609 = vmatpush2.bf16.msra.mxu0 0
        %610 = vmatprep.subr.bf16.mxu0 0
        %611 = vmatpush2.bf16.msra.mxu0 0
        %612 = vmatprep.subr.bf16.mxu0 0
        %613 = vmatpush2.bf16.msra.mxu0 0
        %614 = vmatprep.subr.bf16.mxu0 0
        %615 = vmatpush2.bf16.msra.mxu0 0
        %616 = vmatprep.subr.bf16.mxu0 0
        %617 = vmatpush2.bf16.msra.mxu0 0
        %618 = vmatprep.subr.bf16.mxu0 0
        %619 = vmatpush2.bf16.msra.mxu0 0
        %620 = vmatprep.mubr.bf16.mxu0 0
        %621 = vmatmul.mubr.bf16.gmra.mxu0 %v541
        %v622 = vpop.f32.mrf.mxu0
        %v623 = vadd.f32 0.0, %v622
        %v624 = vpop.f32.mrf.mxu0
        %v625 = vpop.f32.mrf.mxu0
        %v626 = vadd.f32 0.0, %v625
        %v627 = vpop.f32.mrf.mxu0
        %628 = vmatprep.mubr.bf16.mxu0 0
        %629 = vmatmul.mubr.bf16.gmra.mxu0 %v544
        %v630 = vpop.f32.mrf.mxu0
        %v631 = vadd.f32 0.0, %v630
        %v632 = vpop.f32.mrf.mxu0
        %v633 = vpop.f32.mrf.mxu0
        %v634 = vadd.f32 0.0, %v633
        %v635 = vpop.f32.mrf.mxu0
        %636 = vmatprep.mubr.bf16.mxu0 0
        %637 = vmatmul.mubr.bf16.gmra.mxu0 %v547
        %v638 = vpop.f32.mrf.mxu0
        %v639 = vadd.f32 0.0, %v638
        %v640 = vpop.f32.mrf.mxu0
        %v641 = vpop.f32.mrf.mxu0
        %v642 = vadd.f32 0.0, %v641
        %v643 = vpop.f32.mrf.mxu0
        %644 = vmatprep.mubr.bf16.mxu0 0
        %645 = vmatmul.mubr.bf16.gmra.mxu0 %v550
        %v646 = vpop.f32.mrf.mxu0
        %v647 = vadd.f32 0.0, %v646
        %v648 = vpop.f32.mrf.mxu0
        %v649 = vpop.f32.mrf.mxu0
        %v650 = vadd.f32 0.0, %v649
        %v651 = vpop.f32.mrf.mxu0
        %652 = vmatprep.mubr.bf16.mxu0 0
        %653 = vmatmul.mubr.bf16.gmra.mxu0 %v553
        %v654 = vpop.f32.mrf.mxu0
        %v655 = vadd.f32 0.0, %v654
        %v656 = vpop.f32.mrf.mxu0
        %v657 = vpop.f32.mrf.mxu0
        %v658 = vadd.f32 0.0, %v657
        %v659 = vpop.f32.mrf.mxu0
        %660 = vmatprep.mubr.bf16.mxu0 0
        %661 = vmatmul.mubr.bf16.gmra.mxu0 %v556
        %v662 = vpop.f32.mrf.mxu0
        %v663 = vadd.f32 0.0, %v662
        %v664 = vpop.f32.mrf.mxu0
        %v665 = vpop.f32.mrf.mxu0
        %v666 = vadd.f32 0.0, %v665
        %v667 = vpop.f32.mrf.mxu0
        %668 = vmatprep.mubr.bf16.mxu0 0
        %669 = vmatmul.mubr.bf16.gmra.mxu0 %v559
        %v670 = vpop.f32.mrf.mxu0
        %v671 = vadd.f32 0.0, %v670
        %v672 = vpop.f32.mrf.mxu0
        %v673 = vpop.f32.mrf.mxu0
        %v674 = vadd.f32 0.0, %v673
        %v675 = vpop.f32.mrf.mxu0
        %676 = vmatprep.mubr.bf16.mxu0 0
        %677 = vmatmul.mubr.bf16.gmra.mxu0 %v562
        %v678 = vpop.f32.mrf.mxu0
        %v679 = vadd.f32 0.0, %v678
        %v680 = vpop.f32.mrf.mxu0
        %v681 = vpop.f32.mrf.mxu0
        %v682 = vadd.f32 0.0, %v681
        %v683 = vpop.f32.mrf.mxu0
        %684 = vmatprep.mubr.bf16.mxu0 0
        %685 = vmatmul.mubr.bf16.gmra.mxu0 %v565
        %v686 = vpop.f32.mrf.mxu0
        %v687 = vadd.f32 0.0, %v686
        %v688 = vpop.f32.mrf.mxu0
        %v689 = vpop.f32.mrf.mxu0
        %v690 = vadd.f32 0.0, %v689
        %v691 = vpop.f32.mrf.mxu0
        %692 = vmatprep.mubr.bf16.mxu0 0
        %693 = vmatmul.mubr.bf16.gmra.mxu0 %v568
        %v694 = vpop.f32.mrf.mxu0
        %v695 = vadd.f32 0.0, %v694
        %v696 = vpop.f32.mrf.mxu0
        %v697 = vpop.f32.mrf.mxu0
        %v698 = vadd.f32 0.0, %v697
        %v699 = vpop.f32.mrf.mxu0
        %700 = vmatprep.mubr.bf16.mxu0 0
        %701 = vmatmul.mubr.bf16.gmra.mxu0 %v571
        %v702 = vpop.f32.mrf.mxu0
        %v703 = vadd.f32 0.0, %v702
        %v704 = vpop.f32.mrf.mxu0
        %v705 = vpop.f32.mrf.mxu0
        %v706 = vadd.f32 0.0, %v705
        %v707 = vpop.f32.mrf.mxu0
        %708 = vmatprep.mubr.bf16.mxu0 0
        %709 = vmatmul.mubr.bf16.gmra.mxu0 %v574
        %v710 = vpop.f32.mrf.mxu0
        %v711 = vadd.f32 0.0, %v710
        %v712 = vpop.f32.mrf.mxu0
        %v713 = vpop.f32.mrf.mxu0
        %v714 = vadd.f32 0.0, %v713
        %v715 = vpop.f32.mrf.mxu0
        %716 = vmatprep.mubr.bf16.mxu0 0
        %717 = vmatmul.mubr.bf16.gmra.mxu0 %v577
        %v718 = vpop.f32.mrf.mxu0
        %v719 = vadd.f32 0.0, %v718
        %v720 = vpop.f32.mrf.mxu0
        %v721 = vpop.f32.mrf.mxu0
        %v722 = vadd.f32 0.0, %v721
        %v723 = vpop.f32.mrf.mxu0
        %724 = vmatprep.mubr.bf16.mxu0 0
        %725 = vmatmul.mubr.bf16.gmra.mxu0 %v580
        %v726 = vpop.f32.mrf.mxu0
        %v727 = vadd.f32 0.0, %v726
        %v728 = vpop.f32.mrf.mxu0
        %v729 = vpop.f32.mrf.mxu0
        %v730 = vadd.f32 0.0, %v729
        %v731 = vpop.f32.mrf.mxu0
        %732 = vmatprep.mubr.bf16.mxu0 0
        %733 = vmatmul.mubr.bf16.gmra.mxu0 %v583
        %v734 = vpop.f32.mrf.mxu0
        %v735 = vadd.f32 0.0, %v734
        %v736 = vpop.f32.mrf.mxu0
        %v737 = vpop.f32.mrf.mxu0
        %v738 = vadd.f32 0.0, %v737
        %v739 = vpop.f32.mrf.mxu0
        %740 = vmatprep.mubr.bf16.mxu0 0
        %741 = vmatmul.mubr.bf16.gmra.mxu0 %v586
        %v742 = vpop.f32.mrf.mxu0
        %v743 = vadd.f32 0.0, %v742
        %v744 = vpop.f32.mrf.mxu0
        %v745 = vpop.f32.mrf.mxu0
        %v746 = vadd.f32 0.0, %v745
        %v747 = vpop.f32.mrf.mxu0
        %748 = vdwg.mxu0
        %v749 = vld [vmem:[#allocation2] sm:$0xff]
        %v750 = vld [vmem:[#allocation2 + $0x8] sm:$0xff]
        %v751 = vld [vmem:[#allocation2 + $0x10] sm:$0xff]
        %v752 = vld [vmem:[#allocation2 + $0x18] sm:$0xff]
        %v753 = vld [vmem:[#allocation2 + $0x20] sm:$0xff]
        %v754 = vld [vmem:[#allocation2 + $0x28] sm:$0xff]
        %v755 = vld [vmem:[#allocation2 + $0x30] sm:$0xff]
        %v756 = vld [vmem:[#allocation2 + $0x38] sm:$0xff]
        %v757 = vld [vmem:[#allocation2 + $0x40] sm:$0xff]
        %v758 = vld [vmem:[#allocation2 + $0x48] sm:$0xff]
        %v759 = vld [vmem:[#allocation2 + $0x50] sm:$0xff]
        %v760 = vld [vmem:[#allocation2 + $0x58] sm:$0xff]
        %v761 = vld [vmem:[#allocation2 + $0x60] sm:$0xff]
        %v762 = vld [vmem:[#allocation2 + $0x68] sm:$0xff]
        %v763 = vld [vmem:[#allocation2 + $0x70] sm:$0xff]
        %v764 = vld [vmem:[#allocation2 + $0x78] sm:$0xff]
        %v765 = vld [vmem:[#allocation2 + $0x80] sm:$0xff]
        %v766 = vld [vmem:[#allocation2 + $0x88] sm:$0xff]
        %v767 = vld [vmem:[#allocation2 + $0x90] sm:$0xff]
        %v768 = vld [vmem:[#allocation2 + $0x98] sm:$0xff]
        %v769 = vld [vmem:[#allocation2 + $0xa0] sm:$0xff]
        %v770 = vld [vmem:[#allocation2 + $0xa8] sm:$0xff]
        %v771 = vld [vmem:[#allocation2 + $0xb0] sm:$0xff]
        %v772 = vld [vmem:[#allocation2 + $0xb8] sm:$0xff]
        %v773 = vld [vmem:[#allocation2 + $0xc0] sm:$0xff]
        %v774 = vld [vmem:[#allocation2 + $0xc8] sm:$0xff]
        %v775 = vld [vmem:[#allocation2 + $0xd0] sm:$0xff]
        %v776 = vld [vmem:[#allocation2 + $0xd8] sm:$0xff]
        %v777 = vld [vmem:[#allocation2 + $0xe0] sm:$0xff]
        %v778 = vld [vmem:[#allocation2 + $0xe8] sm:$0xff]
        %v779 = vld [vmem:[#allocation2 + $0xf0] sm:$0xff]
        %v780 = vld [vmem:[#allocation2 + $0xf8] sm:$0xff]
        %v781 = vld [vmem:[%s333] sm:$0xff]
        %v782 = vld [vmem:[%s333 + $0x8] sm:$0xff]
        %v783 = vld [vmem:[%s333 + $0x10] sm:$0xff]
        %v784 = vld [vmem:[%s333 + $0x18] sm:$0xff]
        %v785 = vld [vmem:[%s333 + $0x20] sm:$0xff]
        %v786 = vld [vmem:[%s333 + $0x28] sm:$0xff]
        %v787 = vld [vmem:[%s333 + $0x30] sm:$0xff]
        %v788 = vld [vmem:[%s333 + $0x38] sm:$0xff]
        %v789 = vld [vmem:[%s333 + $0x40] sm:$0xff]
        %v790 = vld [vmem:[%s333 + $0x48] sm:$0xff]
        %v791 = vld [vmem:[%s333 + $0x50] sm:$0xff]
        %v792 = vld [vmem:[%s333 + $0x58] sm:$0xff]
        %v793 = vld [vmem:[%s333 + $0x60] sm:$0xff]
        %v794 = vld [vmem:[%s333 + $0x68] sm:$0xff]
        %v795 = vld [vmem:[%s333 + $0x70] sm:$0xff]
        %v796 = vld [vmem:[%s333 + $0x78] sm:$0xff]
        %v797 = vld [vmem:[%s333 + $0x80] sm:$0xff]
        %v798 = vld [vmem:[%s333 + $0x88] sm:$0xff]
        %v799 = vld [vmem:[%s333 + $0x90] sm:$0xff]
        %v800 = vld [vmem:[%s333 + $0x98] sm:$0xff]
        %v801 = vld [vmem:[%s333 + $0xa0] sm:$0xff]
        %v802 = vld [vmem:[%s333 + $0xa8] sm:$0xff]
        %v803 = vld [vmem:[%s333 + $0xb0] sm:$0xff]
        %v804 = vld [vmem:[%s333 + $0xb8] sm:$0xff]
        %v805 = vld [vmem:[%s333 + $0xc0] sm:$0xff]
        %v806 = vld [vmem:[%s333 + $0xc8] sm:$0xff]
        %v807 = vld [vmem:[%s333 + $0xd0] sm:$0xff]
        %v808 = vld [vmem:[%s333 + $0xd8] sm:$0xff]
        %v809 = vld [vmem:[%s333 + $0xe0] sm:$0xff]
        %v810 = vld [vmem:[%s333 + $0xe8] sm:$0xff]
        %v811 = vld [vmem:[%s333 + $0xf0] sm:$0xff]
        %v812 = vld [vmem:[%s333 + $0xf8] sm:$0xff]
        %v813 = vpack.c.bf16 %v626, %v623
        %v814 = vpack.c.bf16 %v634, %v631
        %v815 = vpack.c.bf16 %v642, %v639
        %v816 = vpack.c.bf16 %v650, %v647
        %v817 = vpack.c.bf16 %v658, %v655
        %v818 = vpack.c.bf16 %v666, %v663
        %v819 = vpack.c.bf16 %v674, %v671
        %v820 = vpack.c.bf16 %v682, %v679
        %v821 = vpack.c.bf16 %v690, %v687
        %v822 = vpack.c.bf16 %v698, %v695
        %v823 = vpack.c.bf16 %v706, %v703
        %v824 = vpack.c.bf16 %v714, %v711
        %v825 = vpack.c.bf16 %v722, %v719
        %v826 = vpack.c.bf16 %v730, %v727
        %v827 = vpack.c.bf16 %v738, %v735
        %v828 = vpack.c.bf16 %v746, %v743
        %v861 = vunpack.c.l.b16 %v781
        %v862 = vunpack.c.h.b16 %v781
        %v863 = vunpack.c.l.b16 %v782
        %v864 = vunpack.c.h.b16 %v782
        %v865 = vunpack.c.l.b16 %v783
        %v866 = vunpack.c.h.b16 %v783
        %v867 = vunpack.c.l.b16 %v784
        %v868 = vunpack.c.h.b16 %v784
        %v869 = vunpack.c.l.b16 %v785
        %v870 = vunpack.c.h.b16 %v785
        %v871 = vunpack.c.l.b16 %v786
        %v872 = vunpack.c.h.b16 %v786
        %v873 = vunpack.c.l.b16 %v787
        %v874 = vunpack.c.h.b16 %v787
        %v875 = vunpack.c.l.b16 %v788
        %v876 = vunpack.c.h.b16 %v788
        %v877 = vunpack.c.l.b16 %v789
        %v878 = vunpack.c.h.b16 %v789
        %v879 = vunpack.c.l.b16 %v790
        %v880 = vunpack.c.h.b16 %v790
        %v881 = vunpack.c.l.b16 %v791
        %v882 = vunpack.c.h.b16 %v791
        %v883 = vunpack.c.l.b16 %v792
        %v884 = vunpack.c.h.b16 %v792
        %v885 = vunpack.c.l.b16 %v793
        %v886 = vunpack.c.h.b16 %v793
        %v887 = vunpack.c.l.b16 %v794
        %v888 = vunpack.c.h.b16 %v794
        %v889 = vunpack.c.l.b16 %v795
        %v890 = vunpack.c.h.b16 %v795
        %v891 = vunpack.c.l.b16 %v796
        %v892 = vunpack.c.h.b16 %v796
        %v893 = vunpack.c.l.b16 %v797
        %v894 = vunpack.c.h.b16 %v797
        %v895 = vunpack.c.l.b16 %v798
        %v896 = vunpack.c.h.b16 %v798
        %v897 = vunpack.c.l.b16 %v799
        %v898 = vunpack.c.h.b16 %v799
        %v899 = vunpack.c.l.b16 %v800
        %v900 = vunpack.c.h.b16 %v800
        %v901 = vunpack.c.l.b16 %v801
        %v902 = vunpack.c.h.b16 %v801
        %v903 = vunpack.c.l.b16 %v802
        %v904 = vunpack.c.h.b16 %v802
        %v905 = vunpack.c.l.b16 %v803
        %v906 = vunpack.c.h.b16 %v803
        %v907 = vunpack.c.l.b16 %v804
        %v908 = vunpack.c.h.b16 %v804
        %v909 = vunpack.c.l.b16 %v805
        %v910 = vunpack.c.h.b16 %v805
        %v911 = vunpack.c.l.b16 %v806
        %v912 = vunpack.c.h.b16 %v806
        %v913 = vunpack.c.l.b16 %v807
        %v914 = vunpack.c.h.b16 %v807
        %v915 = vunpack.c.l.b16 %v808
        %v916 = vunpack.c.h.b16 %v808
        %v917 = vunpack.c.l.b16 %v809
        %v918 = vunpack.c.h.b16 %v809
        %v919 = vunpack.c.l.b16 %v810
        %v920 = vunpack.c.h.b16 %v810
        %v921 = vunpack.c.l.b16 %v811
        %v922 = vunpack.c.h.b16 %v811
        %v923 = vunpack.c.l.b16 %v812
        %v924 = vunpack.c.h.b16 %v812
        %v925 = vpack.c.b16 %v863, %v861
        %v926 = vpack.c.b16 %v864, %v862
        %v927 = vpack.c.b16 %v867, %v865
        %v928 = vpack.c.b16 %v868, %v866
        %v929 = vpack.c.b16 %v871, %v869
        %v930 = vpack.c.b16 %v872, %v870
        %v931 = vpack.c.b16 %v875, %v873
        %v932 = vpack.c.b16 %v876, %v874
        %v933 = vpack.c.b16 %v879, %v877
        %v934 = vpack.c.b16 %v880, %v878
        %v935 = vpack.c.b16 %v883, %v881
        %v936 = vpack.c.b16 %v884, %v882
        %v937 = vpack.c.b16 %v887, %v885
        %v938 = vpack.c.b16 %v888, %v886
        %v939 = vpack.c.b16 %v891, %v889
        %v940 = vpack.c.b16 %v892, %v890
        %v941 = vpack.c.b16 %v895, %v893
        %v942 = vpack.c.b16 %v896, %v894
        %v943 = vpack.c.b16 %v899, %v897
        %v944 = vpack.c.b16 %v900, %v898
        %v945 = vpack.c.b16 %v903, %v901
        %v946 = vpack.c.b16 %v904, %v902
        %v947 = vpack.c.b16 %v907, %v905
        %v948 = vpack.c.b16 %v908, %v906
        %v949 = vpack.c.b16 %v911, %v909
        %v950 = vpack.c.b16 %v912, %v910
        %v951 = vpack.c.b16 %v915, %v913
        %v952 = vpack.c.b16 %v916, %v914
        %v953 = vpack.c.b16 %v919, %v917
        %v954 = vpack.c.b16 %v920, %v918
        %v955 = vpack.c.b16 %v923, %v921
        %v956 = vpack.c.b16 %v924, %v922
        %989 = vmatprep.subr.bf16.mxu0 0
        %990 = vmatpush1.bf16.msra.mxu0 %v820
        %991 = vmatprep.subr.bf16.mxu0 0
        %992 = vmatpush1.bf16.msra.mxu0 %v819
        %993 = vmatprep.subr.bf16.mxu0 0
        %994 = vmatpush1.bf16.msra.mxu0 %v818
        %995 = vmatprep.subr.bf16.mxu0 0
        %996 = vmatpush1.bf16.msra.mxu0 %v817
        %997 = vmatprep.subr.bf16.mxu0 0
        %998 = vmatpush1.bf16.msra.mxu0 %v816
        %999 = vmatprep.subr.bf16.mxu0 0
        %1000 = vmatpush1.bf16.msra.mxu0 %v815
        %1001 = vmatprep.subr.bf16.mxu0 0
        %1002 = vmatpush1.bf16.msra.mxu0 %v814
        %1003 = vmatprep.subr.bf16.mxu0 0
        %1004 = vmatpush1.bf16.msra.mxu0 %v813
        %1005 = vmatprep.subr.bf16.mxu0 0
        %1006 = vmatpush2.bf16.msra.mxu0 %v828
        %1007 = vmatprep.subr.bf16.mxu0 0
        %1008 = vmatpush2.bf16.msra.mxu0 %v827
        %1009 = vmatprep.subr.bf16.mxu0 0
        %1010 = vmatpush2.bf16.msra.mxu0 %v826
        %1011 = vmatprep.subr.bf16.mxu0 0
        %1012 = vmatpush2.bf16.msra.mxu0 %v825
        %1013 = vmatprep.subr.bf16.mxu0 0
        %1014 = vmatpush2.bf16.msra.mxu0 %v824
        %1015 = vmatprep.subr.bf16.mxu0 0
        %1016 = vmatpush2.bf16.msra.mxu0 %v823
        %1017 = vmatprep.subr.bf16.mxu0 0
        %1018 = vmatpush2.bf16.msra.mxu0 %v822
        %1019 = vmatprep.subr.bf16.mxu0 0
        %1020 = vmatpush2.bf16.msra.mxu0 %v821
        %1021 = vmatprep.mubr.bf16.mxu0 %v926
        %1022 = vmatmul.mubr.bf16.gmra.mxu0 %v925
        %v1023 = vpop.f32.mrf.mxu0
        %v1024 = vadd.f32 0.0, %v1023
        %v1025 = vpop.f32.mrf.mxu0
        %v1026 = vpop.f32.mrf.mxu0
        %v1027 = vadd.f32 0.0, %v1026
        %v1028 = vpop.f32.mrf.mxu0
        %1029 = vmatprep.mubr.bf16.mxu0 %v928
        %1030 = vmatmul.mubr.bf16.gmra.mxu0 %v927
        %v1031 = vpop.f32.mrf.mxu0
        %v1032 = vadd.f32 0.0, %v1031
        %v1033 = vpop.f32.mrf.mxu0
        %v1034 = vpop.f32.mrf.mxu0
        %v1035 = vadd.f32 0.0, %v1034
        %v1036 = vpop.f32.mrf.mxu0
        %1037 = vmatprep.mubr.bf16.mxu0 %v930
        %1038 = vmatmul.mubr.bf16.gmra.mxu0 %v929
        %v1039 = vpop.f32.mrf.mxu0
        %v1040 = vadd.f32 0.0, %v1039
        %v1041 = vpop.f32.mrf.mxu0
        %v1042 = vpop.f32.mrf.mxu0
        %v1043 = vadd.f32 0.0, %v1042
        %v1044 = vpop.f32.mrf.mxu0
        %1045 = vmatprep.mubr.bf16.mxu0 %v932
        %1046 = vmatmul.mubr.bf16.gmra.mxu0 %v931
        %v1047 = vpop.f32.mrf.mxu0
        %v1048 = vadd.f32 0.0, %v1047
        %v1049 = vpop.f32.mrf.mxu0
        %v1050 = vpop.f32.mrf.mxu0
        %v1051 = vadd.f32 0.0, %v1050
        %v1052 = vpop.f32.mrf.mxu0
        %1053 = vmatprep.mubr.bf16.mxu0 %v934
        %1054 = vmatmul.mubr.bf16.gmra.mxu0 %v933
        %v1055 = vpop.f32.mrf.mxu0
        %v1056 = vadd.f32 0.0, %v1055
        %v1057 = vpop.f32.mrf.mxu0
        %v1058 = vpop.f32.mrf.mxu0
        %v1059 = vadd.f32 0.0, %v1058
        %v1060 = vpop.f32.mrf.mxu0
        %1061 = vmatprep.mubr.bf16.mxu0 %v936
        %1062 = vmatmul.mubr.bf16.gmra.mxu0 %v935
        %v1063 = vpop.f32.mrf.mxu0
        %v1064 = vadd.f32 0.0, %v1063
        %v1065 = vpop.f32.mrf.mxu0
        %v1066 = vpop.f32.mrf.mxu0
        %v1067 = vadd.f32 0.0, %v1066
        %v1068 = vpop.f32.mrf.mxu0
        %1069 = vmatprep.mubr.bf16.mxu0 %v938
        %1070 = vmatmul.mubr.bf16.gmra.mxu0 %v937
        %v1071 = vpop.f32.mrf.mxu0
        %v1072 = vadd.f32 0.0, %v1071
        %v1073 = vpop.f32.mrf.mxu0
        %v1074 = vpop.f32.mrf.mxu0
        %v1075 = vadd.f32 0.0, %v1074
        %v1076 = vpop.f32.mrf.mxu0
        %1077 = vmatprep.mubr.bf16.mxu0 %v940
        %1078 = vmatmul.mubr.bf16.gmra.mxu0 %v939
        %v1079 = vpop.f32.mrf.mxu0
        %v1080 = vadd.f32 0.0, %v1079
        %v1081 = vpop.f32.mrf.mxu0
        %v1082 = vpop.f32.mrf.mxu0
        %v1083 = vadd.f32 0.0, %v1082
        %v1084 = vpop.f32.mrf.mxu0
        %1085 = vmatprep.mubr.bf16.mxu0 %v942
        %1086 = vmatmul.mubr.bf16.gmra.mxu0 %v941
        %v1087 = vpop.f32.mrf.mxu0
        %v1088 = vadd.f32 0.0, %v1087
        %v1089 = vpop.f32.mrf.mxu0
        %v1090 = vpop.f32.mrf.mxu0
        %v1091 = vadd.f32 0.0, %v1090
        %v1092 = vpop.f32.mrf.mxu0
        %1093 = vmatprep.mubr.bf16.mxu0 %v944
        %1094 = vmatmul.mubr.bf16.gmra.mxu0 %v943
        %v1095 = vpop.f32.mrf.mxu0
        %v1096 = vadd.f32 0.0, %v1095
        %v1097 = vpop.f32.mrf.mxu0
        %v1098 = vpop.f32.mrf.mxu0
        %v1099 = vadd.f32 0.0, %v1098
        %v1100 = vpop.f32.mrf.mxu0
        %1101 = vmatprep.mubr.bf16.mxu0 %v946
        %1102 = vmatmul.mubr.bf16.gmra.mxu0 %v945
        %v1103 = vpop.f32.mrf.mxu0
        %v1104 = vadd.f32 0.0, %v1103
        %v1105 = vpop.f32.mrf.mxu0
        %v1106 = vpop.f32.mrf.mxu0
        %v1107 = vadd.f32 0.0, %v1106
        %v1108 = vpop.f32.mrf.mxu0
        %1109 = vmatprep.mubr.bf16.mxu0 %v948
        %1110 = vmatmul.mubr.bf16.gmra.mxu0 %v947
        %v1111 = vpop.f32.mrf.mxu0
        %v1112 = vadd.f32 0.0, %v1111
        %v1113 = vpop.f32.mrf.mxu0
        %v1114 = vpop.f32.mrf.mxu0
        %v1115 = vadd.f32 0.0, %v1114
        %v1116 = vpop.f32.mrf.mxu0
        %1117 = vmatprep.mubr.bf16.mxu0 %v950
        %1118 = vmatmul.mubr.bf16.gmra.mxu0 %v949
        %v1119 = vpop.f32.mrf.mxu0
        %v1120 = vadd.f32 0.0, %v1119
        %v1121 = vpop.f32.mrf.mxu0
        %v1122 = vpop.f32.mrf.mxu0
        %v1123 = vadd.f32 0.0, %v1122
        %v1124 = vpop.f32.mrf.mxu0
        %1125 = vmatprep.mubr.bf16.mxu0 %v952
        %1126 = vmatmul.mubr.bf16.gmra.mxu0 %v951
        %v1127 = vpop.f32.mrf.mxu0
        %v1128 = vadd.f32 0.0, %v1127
        %v1129 = vpop.f32.mrf.mxu0
        %v1130 = vpop.f32.mrf.mxu0
        %v1131 = vadd.f32 0.0, %v1130
        %v1132 = vpop.f32.mrf.mxu0
        %1133 = vmatprep.mubr.bf16.mxu0 %v954
        %1134 = vmatmul.mubr.bf16.gmra.mxu0 %v953
        %v1135 = vpop.f32.mrf.mxu0
        %v1136 = vadd.f32 0.0, %v1135
        %v1137 = vpop.f32.mrf.mxu0
        %v1138 = vpop.f32.mrf.mxu0
        %v1139 = vadd.f32 0.0, %v1138
        %v1140 = vpop.f32.mrf.mxu0
        %1141 = vmatprep.mubr.bf16.mxu0 %v956
        %1142 = vmatmul.mubr.bf16.gmra.mxu0 %v955
        %v1143 = vpop.f32.mrf.mxu0
        %v1144 = vadd.f32 0.0, %v1143
        %v1145 = vpop.f32.mrf.mxu0
        %v1146 = vpop.f32.mrf.mxu0
        %v1147 = vadd.f32 0.0, %v1146
        %v1148 = vpop.f32.mrf.mxu0
        %1149 = vdwg.mxu0
        %v1150 = vadd.f32 %v749, %v1024
        %v1151 = vadd.f32 %v750, %v1027
        %v1152 = vadd.f32 %v751, %v1032
        %v1153 = vadd.f32 %v752, %v1035
        %v1154 = vadd.f32 %v753, %v1040
        %v1155 = vadd.f32 %v754, %v1043
        %v1156 = vadd.f32 %v755, %v1048
        %v1157 = vadd.f32 %v756, %v1051
        %v1158 = vadd.f32 %v757, %v1056
        %v1159 = vadd.f32 %v758, %v1059
        %v1160 = vadd.f32 %v759, %v1064
        %v1161 = vadd.f32 %v760, %v1067
        %v1162 = vadd.f32 %v761, %v1072
        %v1163 = vadd.f32 %v762, %v1075
        %v1164 = vadd.f32 %v763, %v1080
        %v1165 = vadd.f32 %v764, %v1083
        %v1166 = vadd.f32 %v765, %v1088
        %v1167 = vadd.f32 %v766, %v1091
        %v1168 = vadd.f32 %v767, %v1096
        %v1169 = vadd.f32 %v768, %v1099
        %v1170 = vadd.f32 %v769, %v1104
        %v1171 = vadd.f32 %v770, %v1107
        %v1172 = vadd.f32 %v771, %v1112
        %v1173 = vadd.f32 %v772, %v1115
        %v1174 = vadd.f32 %v773, %v1120
        %v1175 = vadd.f32 %v774, %v1123
        %v1176 = vadd.f32 %v775, %v1128
        %v1177 = vadd.f32 %v776, %v1131
        %v1178 = vadd.f32 %v777, %v1136
        %v1179 = vadd.f32 %v778, %v1139
        %v1180 = vadd.f32 %v779, %v1144
        %v1181 = vadd.f32 %v780, %v1147
        %vm1182 = vcmask 523264
        %1183 = vst.msk [vmem:[#allocation2] sm:$0xff] %vm1182, %v1150
        %1184 = vst.msk [vmem:[#allocation2 + $0x8] sm:$0xff] %vm1182, %v1151
        %1185 = vst.msk [vmem:[#allocation2 + $0x10] sm:$0xff] %vm1182, %v1152
        %1186 = vst.msk [vmem:[#allocation2 + $0x18] sm:$0xff] %vm1182, %v1153
        %1187 = vst.msk [vmem:[#allocation2 + $0x20] sm:$0xff] %vm1182, %v1154
        %1188 = vst.msk [vmem:[#allocation2 + $0x28] sm:$0xff] %vm1182, %v1155
        %1189 = vst.msk [vmem:[#allocation2 + $0x30] sm:$0xff] %vm1182, %v1156
        %1190 = vst.msk [vmem:[#allocation2 + $0x38] sm:$0xff] %vm1182, %v1157
        %1191 = vst.msk [vmem:[#allocation2 + $0x40] sm:$0xff] %vm1182, %v1158
        %1192 = vst.msk [vmem:[#allocation2 + $0x48] sm:$0xff] %vm1182, %v1159
        %1193 = vst.msk [vmem:[#allocation2 + $0x50] sm:$0xff] %vm1182, %v1160
        %1194 = vst.msk [vmem:[#allocation2 + $0x58] sm:$0xff] %vm1182, %v1161
        %1195 = vst.msk [vmem:[#allocation2 + $0x60] sm:$0xff] %vm1182, %v1162
        %1196 = vst.msk [vmem:[#allocation2 + $0x68] sm:$0xff] %vm1182, %v1163
        %1197 = vst.msk [vmem:[#allocation2 + $0x70] sm:$0xff] %vm1182, %v1164
        %1198 = vst.msk [vmem:[#allocation2 + $0x78] sm:$0xff] %vm1182, %v1165
        %1199 = vst.msk [vmem:[#allocation2 + $0x80] sm:$0xff] %vm1182, %v1166
        %1200 = vst.msk [vmem:[#allocation2 + $0x88] sm:$0xff] %vm1182, %v1167
        %1201 = vst.msk [vmem:[#allocation2 + $0x90] sm:$0xff] %vm1182, %v1168
        %1202 = vst.msk [vmem:[#allocation2 + $0x98] sm:$0xff] %vm1182, %v1169
        %1203 = vst.msk [vmem:[#allocation2 + $0xa0] sm:$0xff] %vm1182, %v1170
        %1204 = vst.msk [vmem:[#allocation2 + $0xa8] sm:$0xff] %vm1182, %v1171
        %1205 = vst.msk [vmem:[#allocation2 + $0xb0] sm:$0xff] %vm1182, %v1172
        %1206 = vst.msk [vmem:[#allocation2 + $0xb8] sm:$0xff] %vm1182, %v1173
        %1207 = vst.msk [vmem:[#allocation2 + $0xc0] sm:$0xff] %vm1182, %v1174
        %1208 = vst.msk [vmem:[#allocation2 + $0xc8] sm:$0xff] %vm1182, %v1175
        %1209 = vst.msk [vmem:[#allocation2 + $0xd0] sm:$0xff] %vm1182, %v1176
        %1210 = vst.msk [vmem:[#allocation2 + $0xd8] sm:$0xff] %vm1182, %v1177
        %1211 = vst.msk [vmem:[#allocation2 + $0xe0] sm:$0xff] %vm1182, %v1178
        %1212 = vst.msk [vmem:[#allocation2 + $0xe8] sm:$0xff] %vm1182, %v1179
        %1213 = vst.msk [vmem:[#allocation2 + $0xf0] sm:$0xff] %vm1182, %v1180
        %1214 = vst.msk [vmem:[#allocation2 + $0xf8] sm:$0xff] %vm1182, %v1181
        %p1215 = scmp.eq.s32.totalorder %s19, 2
        // Predicated region
        $region75: #{gcn_encoder_forward.4} parent=65 // pred_check
          %p1216 = pneg %p1215
        $region76: #{gcn_encoder_forward.4} parent=65 // pred_check_branch
          %1218 = sbr.rel (%p1216) target = $region78
        $region77: #{gcn_encoder_forward.4} parent=65 // pred_region
          %v1219 = vld [vmem:[#allocation2] sm:$0xff]
          %v1220 = vld [vmem:[#allocation2 + $0x8] sm:$0xff]
          %v1221 = vld [vmem:[#allocation2 + $0x10] sm:$0xff]
          %v1222 = vld [vmem:[#allocation2 + $0x18] sm:$0xff]
          %v1223 = vld [vmem:[#allocation2 + $0x20] sm:$0xff]
          %v1224 = vld [vmem:[#allocation2 + $0x28] sm:$0xff]
          %v1225 = vld [vmem:[#allocation2 + $0x30] sm:$0xff]
          %v1226 = vld [vmem:[#allocation2 + $0x38] sm:$0xff]
          %v1227 = vld [vmem:[#allocation2 + $0x40] sm:$0xff]
          %v1228 = vld [vmem:[#allocation2 + $0x48] sm:$0xff]
          %v1229 = vld [vmem:[#allocation2 + $0x50] sm:$0xff]
          %v1230 = vld [vmem:[#allocation2 + $0x58] sm:$0xff]
          %v1231 = vld [vmem:[#allocation2 + $0x60] sm:$0xff]
          %v1232 = vld [vmem:[#allocation2 + $0x68] sm:$0xff]
          %v1233 = vld [vmem:[#allocation2 + $0x70] sm:$0xff]
          %v1234 = vld [vmem:[#allocation2 + $0x78] sm:$0xff]
          %v1235 = vld [vmem:[#allocation2 + $0x80] sm:$0xff]
          %v1236 = vld [vmem:[#allocation2 + $0x88] sm:$0xff]
          %v1237 = vld [vmem:[#allocation2 + $0x90] sm:$0xff]
          %v1238 = vld [vmem:[#allocation2 + $0x98] sm:$0xff]
          %v1239 = vld [vmem:[#allocation2 + $0xa0] sm:$0xff]
          %v1240 = vld [vmem:[#allocation2 + $0xa8] sm:$0xff]
          %v1241 = vld [vmem:[#allocation2 + $0xb0] sm:$0xff]
          %v1242 = vld [vmem:[#allocation2 + $0xb8] sm:$0xff]
          %v1243 = vld [vmem:[#allocation2 + $0xc0] sm:$0xff]
          %v1244 = vld [vmem:[#allocation2 + $0xc8] sm:$0xff]
          %v1245 = vld [vmem:[#allocation2 + $0xd0] sm:$0xff]
          %v1246 = vld [vmem:[#allocation2 + $0xd8] sm:$0xff]
          %v1247 = vld [vmem:[#allocation2 + $0xe0] sm:$0xff]
          %v1248 = vld [vmem:[#allocation2 + $0xe8] sm:$0xff]
          %v1249 = vld [vmem:[#allocation2 + $0xf0] sm:$0xff]
          %v1250 = vld [vmem:[#allocation2 + $0xf8] sm:$0xff]
          %v1251 = vmax.f32 %v1219, 0.0
          %v1252 = vmax.f32 %v1220, 0.0
          %v1253 = vmax.f32 %v1221, 0.0
          %v1254 = vmax.f32 %v1222, 0.0
          %v1255 = vmax.f32 %v1223, 0.0
          %v1256 = vmax.f32 %v1224, 0.0
          %v1257 = vmax.f32 %v1225, 0.0
          %v1258 = vmax.f32 %v1226, 0.0
          %v1259 = vmax.f32 %v1227, 0.0
          %v1260 = vmax.f32 %v1228, 0.0
          %v1261 = vmax.f32 %v1229, 0.0
          %v1262 = vmax.f32 %v1230, 0.0
          %v1263 = vmax.f32 %v1231, 0.0
          %v1264 = vmax.f32 %v1232, 0.0
          %v1265 = vmax.f32 %v1233, 0.0
          %v1266 = vmax.f32 %v1234, 0.0
          %v1267 = vmax.f32 %v1235, 0.0
          %v1268 = vmax.f32 %v1236, 0.0
          %v1269 = vmax.f32 %v1237, 0.0
          %v1270 = vmax.f32 %v1238, 0.0
          %v1271 = vmax.f32 %v1239, 0.0
          %v1272 = vmax.f32 %v1240, 0.0
          %v1273 = vmax.f32 %v1241, 0.0
          %v1274 = vmax.f32 %v1242, 0.0
          %v1275 = vmax.f32 %v1243, 0.0
          %v1276 = vmax.f32 %v1244, 0.0
          %v1277 = vmax.f32 %v1245, 0.0
          %v1278 = vmax.f32 %v1246, 0.0
          %v1279 = vmax.f32 %v1247, 0.0
          %v1280 = vmax.f32 %v1248, 0.0
          %v1281 = vmax.f32 %v1249, 0.0
          %v1282 = vmax.f32 %v1250, 0.0
          %v1283 = vpack.c.bf16 %v1252, %v1251
          %v1284 = vpack.c.bf16 %v1254, %v1253
          %v1285 = vpack.c.bf16 %v1256, %v1255
          %v1286 = vpack.c.bf16 %v1258, %v1257
          %v1287 = vpack.c.bf16 %v1260, %v1259
          %v1288 = vpack.c.bf16 %v1262, %v1261
          %v1289 = vpack.c.bf16 %v1264, %v1263
          %v1290 = vpack.c.bf16 %v1266, %v1265
          %v1291 = vpack.c.bf16 %v1268, %v1267
          %v1292 = vpack.c.bf16 %v1270, %v1269
          %v1293 = vpack.c.bf16 %v1272, %v1271
          %v1294 = vpack.c.bf16 %v1274, %v1273
          %v1295 = vpack.c.bf16 %v1276, %v1275
          %v1296 = vpack.c.bf16 %v1278, %v1277
          %v1297 = vpack.c.bf16 %v1280, %v1279
          %v1298 = vpack.c.bf16 %v1282, %v1281
          %v1315 = vunpack.c.l.b16 %v1283
          %v1316 = vunpack.c.h.b16 %v1283
          %v1317 = vunpack.c.l.b16 %v1284
          %v1318 = vunpack.c.h.b16 %v1284
          %v1319 = vunpack.c.l.b16 %v1285
          %v1320 = vunpack.c.h.b16 %v1285
          %v1321 = vunpack.c.l.b16 %v1286
          %v1322 = vunpack.c.h.b16 %v1286
          %v1323 = vunpack.c.l.b16 %v1287
          %v1324 = vunpack.c.h.b16 %v1287
          %v1325 = vunpack.c.l.b16 %v1288
          %v1326 = vunpack.c.h.b16 %v1288
          %v1327 = vunpack.c.l.b16 %v1289
          %v1328 = vunpack.c.h.b16 %v1289
          %v1329 = vunpack.c.l.b16 %v1290
          %v1330 = vunpack.c.h.b16 %v1290
          %v1331 = vunpack.c.l.b16 %v1291
          %v1332 = vunpack.c.h.b16 %v1291
          %v1333 = vunpack.c.l.b16 %v1292
          %v1334 = vunpack.c.h.b16 %v1292
          %v1335 = vunpack.c.l.b16 %v1293
          %v1336 = vunpack.c.h.b16 %v1293
          %v1337 = vunpack.c.l.b16 %v1294
          %v1338 = vunpack.c.h.b16 %v1294
          %v1339 = vunpack.c.l.b16 %v1295
          %v1340 = vunpack.c.h.b16 %v1295
          %v1341 = vunpack.c.l.b16 %v1296
          %v1342 = vunpack.c.h.b16 %v1296
          %v1343 = vunpack.c.l.b16 %v1297
          %v1344 = vunpack.c.h.b16 %v1297
          %v1345 = vunpack.c.l.b16 %v1298
          %v1346 = vunpack.c.h.b16 %v1298
          %v1347 = vpack.c.b16 %v1315, %v1315
          %v1348 = vpack.c.b16 %v1316, %v1316
          %v1349 = vpack.c.b16 %v1317, %v1317
          %v1350 = vpack.c.b16 %v1318, %v1318
          %v1351 = vpack.c.b16 %v1319, %v1319
          %v1352 = vpack.c.b16 %v1320, %v1320
          %v1353 = vpack.c.b16 %v1321, %v1321
          %v1354 = vpack.c.b16 %v1322, %v1322
          %v1355 = vpack.c.b16 %v1323, %v1323
          %v1356 = vpack.c.b16 %v1324, %v1324
          %v1357 = vpack.c.b16 %v1325, %v1325
          %v1358 = vpack.c.b16 %v1326, %v1326
          %v1359 = vpack.c.b16 %v1327, %v1327
          %v1360 = vpack.c.b16 %v1328, %v1328
          %v1361 = vpack.c.b16 %v1329, %v1329
          %v1362 = vpack.c.b16 %v1330, %v1330
          %v1363 = vpack.c.b16 %v1331, %v1331
          %v1364 = vpack.c.b16 %v1332, %v1332
          %v1365 = vpack.c.b16 %v1333, %v1333
          %v1366 = vpack.c.b16 %v1334, %v1334
          %v1367 = vpack.c.b16 %v1335, %v1335
          %v1368 = vpack.c.b16 %v1336, %v1336
          %v1369 = vpack.c.b16 %v1337, %v1337
          %v1370 = vpack.c.b16 %v1338, %v1338
          %v1371 = vpack.c.b16 %v1339, %v1339
          %v1372 = vpack.c.b16 %v1340, %v1340
          %v1373 = vpack.c.b16 %v1341, %v1341
          %v1374 = vpack.c.b16 %v1342, %v1342
          %v1375 = vpack.c.b16 %v1343, %v1343
          %v1376 = vpack.c.b16 %v1344, %v1344
          %v1377 = vpack.c.b16 %v1345, %v1345
          %v1378 = vpack.c.b16 %v1346, %v1346
          %vm1411 = vcmask 519168
          %1412 = vst.msk [vmem:[%s371] sm:$0xf] %vm1411, %v1347
          %1413 = vst.msk [vmem:[%s371 + $0x4] sm:$0xf] %vm1411, %v1348
          %1414 = vst.msk [vmem:[%s371 + $0x8] sm:$0xf] %vm1411, %v1349
          %1415 = vst.msk [vmem:[%s371 + $0xc] sm:$0xf] %vm1411, %v1350
          %1416 = vst.msk [vmem:[%s371 + $0x10] sm:$0xf] %vm1411, %v1351
          %1417 = vst.msk [vmem:[%s371 + $0x14] sm:$0xf] %vm1411, %v1352
          %1418 = vst.msk [vmem:[%s371 + $0x18] sm:$0xf] %vm1411, %v1353
          %1419 = vst.msk [vmem:[%s371 + $0x1c] sm:$0xf] %vm1411, %v1354
          %1420 = vst.msk [vmem:[%s371 + $0x20] sm:$0xf] %vm1411, %v1355
          %1421 = vst.msk [vmem:[%s371 + $0x24] sm:$0xf] %vm1411, %v1356
          %1422 = vst.msk [vmem:[%s371 + $0x28] sm:$0xf] %vm1411, %v1357
          %1423 = vst.msk [vmem:[%s371 + $0x2c] sm:$0xf] %vm1411, %v1358
          %1424 = vst.msk [vmem:[%s371 + $0x30] sm:$0xf] %vm1411, %v1359
          %1425 = vst.msk [vmem:[%s371 + $0x34] sm:$0xf] %vm1411, %v1360
          %1426 = vst.msk [vmem:[%s371 + $0x38] sm:$0xf] %vm1411, %v1361
          %1427 = vst.msk [vmem:[%s371 + $0x3c] sm:$0xf] %vm1411, %v1362
          %1428 = vst.msk [vmem:[%s371 + $0x40] sm:$0xf] %vm1411, %v1363
          %1429 = vst.msk [vmem:[%s371 + $0x44] sm:$0xf] %vm1411, %v1364
          %1430 = vst.msk [vmem:[%s371 + $0x48] sm:$0xf] %vm1411, %v1365
          %1431 = vst.msk [vmem:[%s371 + $0x4c] sm:$0xf] %vm1411, %v1366
          %1432 = vst.msk [vmem:[%s371 + $0x50] sm:$0xf] %vm1411, %v1367
          %1433 = vst.msk [vmem:[%s371 + $0x54] sm:$0xf] %vm1411, %v1368
          %1434 = vst.msk [vmem:[%s371 + $0x58] sm:$0xf] %vm1411, %v1369
          %1435 = vst.msk [vmem:[%s371 + $0x5c] sm:$0xf] %vm1411, %v1370
          %1436 = vst.msk [vmem:[%s371 + $0x60] sm:$0xf] %vm1411, %v1371
          %1437 = vst.msk [vmem:[%s371 + $0x64] sm:$0xf] %vm1411, %v1372
          %1438 = vst.msk [vmem:[%s371 + $0x68] sm:$0xf] %vm1411, %v1373
          %1439 = vst.msk [vmem:[%s371 + $0x6c] sm:$0xf] %vm1411, %v1374
          %1440 = vst.msk [vmem:[%s371 + $0x70] sm:$0xf] %vm1411, %v1375
          %1441 = vst.msk [vmem:[%s371 + $0x74] sm:$0xf] %vm1411, %v1376
          %1442 = vst.msk [vmem:[%s371 + $0x78] sm:$0xf] %vm1411, %v1377
          %1443 = vst.msk [vmem:[%s371 + $0x7c] sm:$0xf] %vm1411, %v1378
        $region78: #{gcn_encoder_forward.4} parent=65 // pred_fallthru
          _
        %s1444 = smul.u32 32, %s18
        %p1445 = scmp.lt.s32.totalorder %s1444, 95
        %s1446 = scalar_select %p1445, %s1444, 95
        %s1447 = smul.addr %s1446, 4
        %s1448 = scalar_lea.vmem %s3, %s1447
        // Predicated region
        $region79: #{gcn_encoder_forward.4} parent=65 // pred_check
          %p1449 = pneg %p119
        $region80: #{gcn_encoder_forward.4} parent=65 // pred_check_branch
          %1451 = sbr.rel (%p1449) target = $region82
        $region81: #{gcn_encoder_forward.4} parent=65 // pred_region
          %s1452 = smul.u32 32, %s18
        $region82: #{gcn_encoder_forward.4} parent=65 // pred_fallthru
          _
      $region66: #{gcn_encoder_forward.4} parent=5 // pred_fallthru
        _
      %p1453 = scmp.le.s32.totalorder 2, %s9
      // Predicated region
      $region83: #{gcn_encoder_forward.4} parent=5 // pred_check
        %p1454 = pneg %p1453
      $region84: #{gcn_encoder_forward.4} parent=5 // pred_check_branch
        %1456 = sbr.rel (%p1454) target = $region86
      $region85: #{gcn_encoder_forward.4} parent=5 // pred_region
        %s1457 = ssub.s32 %s9, 2
        // Predicated region
        $region87: #{gcn_encoder_forward.4} parent=85 // pred_check
          %p1458 = pneg %p125
        $region88: #{gcn_encoder_forward.4} parent=85 // pred_check_branch
          %1460 = sbr.rel (%p1458) target = $region90
        $region89: #{gcn_encoder_forward.4} parent=85 // pred_region
          %s1461 = smul.u32 32, %s20
          %p1462 = scmp.lt.s32.totalorder %s1461, 95
          %s1463 = scalar_select %p1462, %s1461, 95
          %s1464 = smul.addr %s1463, 4
          %s1465 = scalar_lea.vmem %s3, %s1464
        $region90: #{gcn_encoder_forward.4} parent=85 // pred_fallthru
          _
      $region86: #{gcn_encoder_forward.4} parent=5 // pred_fallthru
        _
    $region6: #{gcn_encoder_forward.4} parent=1 // loop_footer
      %s13 = sadd.s32 1, %s9
    $region7: #{gcn_encoder_forward.4} parent=1 // loop_footer_branch
      %8 = sbr.rel target = $region3
    $region8: #{gcn_encoder_forward.4} parent=1 // loop_exit
      _

// kernel: gcn_encoder_forward.5
$region0: #{gcn_encoder_forward.5}
  #allocation0 [shape = 'u32[]', space=smem, size = 0x4, offset = 0x4, fixed_abs, tag = 'smem constant byte address 0x4 - core index']
  #allocation1 [shape = 'u32[144,128]{1,0:T(1,128)}', space=vmem, size = 0x12000, scoped, tag = 'internal scratch']
  #allocation2 [shape = 'f32[256,32]{1,0:T(8,128)}', space=vmem, size = 0x20000, scoped, tag = 'scratch operand']
  %s0 = inlined_call_operand.vmem [shape: bf16[768,768], index: 0, kind: input, shape index: {}]
  %s1 = inlined_call_operand.vmem [shape: bf16[768,64], index: 1, kind: input, shape index: {}]
  %s2 = inlined_call_operand.vmem [shape: bf16[64,32], index: 2, kind: input, shape index: {}]
  %s3 = inlined_call_operand.vmem [shape: bf16[768,32], index: 3, kind: output, shape index: {}]
  %s4 = sld [smem:[#allocation0]]
  $region91: #{gcn_encoder_forward.5} parent=0
    _
  %s6 = ssub.s32 1, %s4
  %s7 = scalar_select 0, %s6, %s4
  $region1: #{gcn_encoder_forward.5} parent=0
    #allocation3 [shape = 'u8[262144]{0}', space=vmem, size = 0x40000, scoped, tag = 'input window, operand 0']
    loop: start=0, step=1, limit=11
    $region2: #{gcn_encoder_forward.5} parent=1 // loop_pre_header
      _
    $region3: #{gcn_encoder_forward.5} parent=1 // loop_header
      %s9 = sphi 0, %s13
      %p10 = scmp.ge.s32.totalorder %s9, 11
      %s16 = sphi 0, %s28
      %s17 = sphi 0, %s24
      %s18 = sphi 0, %s16
      %s19 = sphi 0, %s17
      %s20 = sphi 0, %s18
      %s21 = sphi 0, %s19
      %s33 = sphi 0, %s35
      %s36 = sphi 0, %s33
      %s37 = sphi 0, %s36
      %s53 = sphi 0, %s37
      %s59 = sphi 0, %s61
      %s62 = sphi 0, %s59
      %s63 = sphi 0, %s62
      %s79 = sphi 0, %s63
      %s83 = sphi 0, %s83
      %s85 = sphi 0, %s83
      %s86 = sphi 0, %s85
      %s100 = sphi 0, %s86
      %s106 = sphi 0, %s108
      %s109 = sphi 0, %s106
      %s110 = sphi 0, %s109
      %s126 = sphi 0, %s110
    $region4: #{gcn_encoder_forward.5} parent=1 // loop_header_branch
      %12 = sbr.rel (%p10) target = $region8
    $region5: #{gcn_encoder_forward.5} parent=1 // loop_body
      %s14 = ssub.s32 %s9, 1
      %s15 = ssub.s32 %s9, 2
      %s22 = sadd.s32 1, %s17
      %p23 = scmp.ge.s32.totalorder %s22, 3
      %s24 = scalar_select %p23, 0, %s22
      %s25 = sadd.s32 1, %s16
      %s26 = scalar_select %p23, %s25, %s16
      %p27 = scmp.ge.s32.totalorder %s26, 3
      %s28 = scalar_select %p27, 0, %s26
      %s29 = ssub.s32 %s16, %s28
      %s30 = ssub.s32 %s17, %s24
      %s31 = sor.u32 %s29, %s30
      %p32 = scmp.eq.s32.totalorder %s31, 0
      %s34 = sadd.s32 %s33, 1
      %s35 = scalar_select %p32, %s33, %s34
      %p38 = pneg %p32
      %p39 = scmp.eq.s32.totalorder %s9, 8
      %p40 = por %p38, %p39
      %p41 = scmp.ne.s32.totalorder %s33, %s36
      %p42 = scmp.eq.s32.totalorder %s9, 0
      %p43 = por %p41, %p42
      %p44 = scmp.ne.s32.totalorder %s33, %s36
      %p45 = scmp.eq.s32.totalorder %s14, 8
      %p46 = por %p44, %p45
      %p47 = scmp.ne.s32.totalorder %s36, %s37
      %p48 = scmp.eq.s32.totalorder %s14, 0
      %p49 = por %p47, %p48
      %p50 = scmp.ne.s32.totalorder %s36, %s37
      %p51 = scmp.eq.s32.totalorder %s15, 8
      %p52 = por %p50, %p51
      %p54 = scmp.ne.s32.totalorder %s37, %s53
      %p55 = scmp.eq.s32.totalorder %s15, 0
      %p56 = por %p54, %p55
      %s57 = ssub.s32 %s17, %s24
      %p58 = scmp.eq.s32.totalorder %s57, 0
      %s60 = sadd.s32 %s59, 1
      %s61 = scalar_select %p58, %s59, %s60
      %p64 = pneg %p58
      %p65 = scmp.eq.s32.totalorder %s9, 8
      %p66 = por %p64, %p65
      %p67 = scmp.ne.s32.totalorder %s59, %s62
      %p68 = scmp.eq.s32.totalorder %s9, 0
      %p69 = por %p67, %p68
      %p70 = scmp.ne.s32.totalorder %s59, %s62
      %p71 = scmp.eq.s32.totalorder %s14, 8
      %p72 = por %p70, %p71
      %p73 = scmp.ne.s32.totalorder %s62, %s63
      %p74 = scmp.eq.s32.totalorder %s14, 0
      %p75 = por %p73, %p74
      %p76 = scmp.ne.s32.totalorder %s62, %s63
      %p77 = scmp.eq.s32.totalorder %s15, 8
      %p78 = por %p76, %p77
      %p80 = scmp.ne.s32.totalorder %s63, %s79
      %p81 = scmp.eq.s32.totalorder %s15, 0
      %p82 = por %p80, %p81
      %s84 = sadd.s32 %s83, 1
      %p87 = scmp.eq.s32.totalorder %s9, 8
      %p88 = scmp.ne.s32.totalorder %s83, %s85
      %p89 = scmp.eq.s32.totalorder %s9, 0
      %p90 = por %p88, %p89
      %p91 = scmp.ne.s32.totalorder %s83, %s85
      %p92 = scmp.eq.s32.totalorder %s14, 8
      %p93 = por %p91, %p92
      %p94 = scmp.ne.s32.totalorder %s85, %s86
      %p95 = scmp.eq.s32.totalorder %s14, 0
      %p96 = por %p94, %p95
      %p97 = scmp.ne.s32.totalorder %s85, %s86
      %p98 = scmp.eq.s32.totalorder %s15, 8
      %p99 = por %p97, %p98
      %p101 = scmp.ne.s32.totalorder %s86, %s100
      %p102 = scmp.eq.s32.totalorder %s15, 0
      %p103 = por %p101, %p102
      %s104 = ssub.s32 %s16, %s28
      %p105 = scmp.eq.s32.totalorder %s104, 0
      %s107 = sadd.s32 %s106, 1
      %s108 = scalar_select %p105, %s106, %s107
      %p111 = pneg %p105
      %p112 = scmp.eq.s32.totalorder %s9, 8
      %p113 = por %p111, %p112
      %p114 = scmp.ne.s32.totalorder %s106, %s109
      %p115 = scmp.eq.s32.totalorder %s9, 0
      %p116 = por %p114, %p115
      %p117 = scmp.ne.s32.totalorder %s106, %s109
      %p118 = scmp.eq.s32.totalorder %s14, 8
      %p119 = por %p117, %p118
      %p120 = scmp.ne.s32.totalorder %s109, %s110
      %p121 = scmp.eq.s32.totalorder %s14, 0
      %p122 = por %p120, %p121
      %p123 = scmp.ne.s32.totalorder %s109, %s110
      %p124 = scmp.eq.s32.totalorder %s15, 8
      %p125 = por %p123, %p124
      %p127 = scmp.ne.s32.totalorder %s110, %s126
      %p128 = scmp.eq.s32.totalorder %s15, 0
      %p129 = por %p127, %p128
      %p130 = scmp.le.s32.totalorder 1, %s9
      %p131 = scmp.lt.s32.totalorder %s9, 10
      %p132 = pnand %p130, %p131
      %p133 = pneg %p132
      // Predicated region
      $region9: #{gcn_encoder_forward.5} parent=5 // pred_check
        _
      $region10: #{gcn_encoder_forward.5} parent=5 // pred_check_branch
        %135 = sbr.rel (%p132) target = $region12
      $region11: #{gcn_encoder_forward.5} parent=5 // pred_region
        %s136 = ssub.s32 %s9, 1
        // Predicated region
        $region13: #{gcn_encoder_forward.5} parent=11 // pred_check
          %p137 = pneg %p96
        $region14: #{gcn_encoder_forward.5} parent=11 // pred_check_branch
          %139 = sbr.rel (%p137) target = $region16
        $region15: #{gcn_encoder_forward.5} parent=11 // pred_region
          _
        $region16: #{gcn_encoder_forward.5} parent=11 // pred_fallthru
          _
      $region12: #{gcn_encoder_forward.5} parent=5 // pred_fallthru
        _
      %p140 = scmp.lt.s32.totalorder %s9, 9
      // Predicated region
      $region17: #{gcn_encoder_forward.5} parent=5 // pred_check
        %p141 = pneg %p140
      $region18: #{gcn_encoder_forward.5} parent=5 // pred_check_branch
        %143 = sbr.rel (%p141) target = $region20
      $region19: #{gcn_encoder_forward.5} parent=5 // pred_region
        // Predicated region
        $region21: #{gcn_encoder_forward.5} parent=19 // pred_check
          %p144 = pneg %p43
        $region22: #{gcn_encoder_forward.5} parent=19 // pred_check_branch
          %146 = sbr.rel (%p144) target = $region24
        $region23: #{gcn_encoder_forward.5} parent=19 // pred_region
          %s147 = sand.u32 %s33, 1
          %s148 = sand.u32 %s33, 1
          %s149 = smul.addr %s148, 256
          %s150 = scalar_lea.vmem [#allocation3], %s149
          %s151 = smul.u32 32, %s16
          %s152 = smul.u32 2, %s17
          %s153 = smul.addr %s151, 6
          %s154 = sadd.s32 %s152, %s153
          %s155 = smul.addr %s154, 4
          %s156 = scalar_lea.vmem %s0, %s155
          // Predicated region
          $region25: #{gcn_encoder_forward.5} parent=23 // pred_check
            _
          $region26: #{gcn_encoder_forward.5} parent=23 // pred_check_branch
            %158 = sbr.rel (0) target = $region28
          $region27: #{gcn_encoder_forward.5} parent=23 // pred_region
            // Predicated region
            $region29: #{gcn_encoder_forward.5} parent=27 // pred_check
              _
            $region30: #{gcn_encoder_forward.5} parent=27 // pred_check_branch
              %160 = sbr.rel (0) target = $region32
            $region31: #{gcn_encoder_forward.5} parent=27 // pred_region
              // Predicated region
              $region44: #{gcn_encoder_forward.5} parent=31 // pred_check
                _
              $region45: #{gcn_encoder_forward.5} parent=31 // pred_check_branch
                %238 = sbr.rel (0) target = $region47
              $region46: #{gcn_encoder_forward.5} parent=31 // pred_region
                loop: start=0, step=1, limit=1
                $region48: #{gcn_encoder_forward.5} parent=46 // loop_pre_header
                  _
                $region49: #{gcn_encoder_forward.5} parent=46 // loop_header
                  %s240 = sphi 0, %s244
                  %p241 = scmp.ge.s32.totalorder %s240, 1
                  %s245 = sphi %s156, %s156
                  %s246 = sphi %s150, %s150
                $region50: #{gcn_encoder_forward.5} parent=46 // loop_header_branch
                  %243 = sbr.rel (%p241) target = $region54
                $region51: #{gcn_encoder_forward.5} parent=46 // loop_body
                  %v247 = vld [vmem:[%s245] sm:$0xff]
                  %248 = vst [vmem:[%s246] sm:$0xff] %v247
                  %v249 = vld [vmem:[%s245 + $0x18] sm:$0xff]
                  %250 = vst [vmem:[%s246 + $0x8] sm:$0xff] %v249
                  %v251 = vld [vmem:[%s245 + $0x30] sm:$0xff]
                  %252 = vst [vmem:[%s246 + $0x10] sm:$0xff] %v251
                  %v253 = vld [vmem:[%s245 + $0x48] sm:$0xff]
                  %254 = vst [vmem:[%s246 + $0x18] sm:$0xff] %v253
                  %v255 = vld [vmem:[%s245 + $0x60] sm:$0xff]
                  %256 = vst [vmem:[%s246 + $0x20] sm:$0xff] %v255
                  %v257 = vld [vmem:[%s245 + $0x78] sm:$0xff]
                  %258 = vst [vmem:[%s246 + $0x28] sm:$0xff] %v257
                  %v259 = vld [vmem:[%s245 + $0x90] sm:$0xff]
                  %260 = vst [vmem:[%s246 + $0x30] sm:$0xff] %v259
                  %v261 = vld [vmem:[%s245 + $0xa8] sm:$0xff]
                  %262 = vst [vmem:[%s246 + $0x38] sm:$0xff] %v261
                  %v263 = vld [vmem:[%s245 + $0xc0] sm:$0xff]
                  %264 = vst [vmem:[%s246 + $0x40] sm:$0xff] %v263
                  %v265 = vld [vmem:[%s245 + $0xd8] sm:$0xff]
                  %266 = vst [vmem:[%s246 + $0x48] sm:$0xff] %v265
                  %v267 = vld [vmem:[%s245 + $0xf0] sm:$0xff]
                  %268 = vst [vmem:[%s246 + $0x50] sm:$0xff] %v267
                  %v269 = vld [vmem:[%s245 + $0x108] sm:$0xff]
                  %270 = vst [vmem:[%s246 + $0x58] sm:$0xff] %v269
                  %v271 = vld [vmem:[%s245 + $0x120] sm:$0xff]
                  %272 = vst [vmem:[%s246 + $0x60] sm:$0xff] %v271
                  %v273 = vld [vmem:[%s245 + $0x138] sm:$0xff]
                  %274 = vst [vmem:[%s246 + $0x68] sm:$0xff] %v273
                  %v275 = vld [vmem:[%s245 + $0x150] sm:$0xff]
                  %276 = vst [vmem:[%s246 + $0x70] sm:$0xff] %v275
                  %v277 = vld [vmem:[%s245 + $0x168] sm:$0xff]
                  %278 = vst [vmem:[%s246 + $0x78] sm:$0xff] %v277
                  %v279 = vld [vmem:[%s245 + $0x180] sm:$0xff]
                  %280 = vst [vmem:[%s246 + $0x80] sm:$0xff] %v279
                  %v281 = vld [vmem:[%s245 + $0x198] sm:$0xff]
                  %282 = vst [vmem:[%s246 + $0x88] sm:$0xff] %v281
                  %v283 = vld [vmem:[%s245 + $0x1b0] sm:$0xff]
                  %284 = vst [vmem:[%s246 + $0x90] sm:$0xff] %v283
                  %v285 = vld [vmem:[%s245 + $0x1c8] sm:$0xff]
                  %286 = vst [vmem:[%s246 + $0x98] sm:$0xff] %v285
                  %v287 = vld [vmem:[%s245 + $0x1e0] sm:$0xff]
                  %288 = vst [vmem:[%s246 + $0xa0] sm:$0xff] %v287
                  %v289 = vld [vmem:[%s245 + $0x1f8] sm:$0xff]
                  %290 = vst [vmem:[%s246 + $0xa8] sm:$0xff] %v289
                  %v291 = vld [vmem:[%s245 + $0x210] sm:$0xff]
                  %292 = vst [vmem:[%s246 + $0xb0] sm:$0xff] %v291
                  %v293 = vld [vmem:[%s245 + $0x228] sm:$0xff]
                  %294 = vst [vmem:[%s246 + $0xb8] sm:$0xff] %v293
                  %v295 = vld [vmem:[%s245 + $0x240] sm:$0xff]
                  %296 = vst [vmem:[%s246 + $0xc0] sm:$0xff] %v295
                  %v297 = vld [vmem:[%s245 + $0x258] sm:$0xff]
                  %298 = vst [vmem:[%s246 + $0xc8] sm:$0xff] %v297
                  %v299 = vld [vmem:[%s245 + $0x270] sm:$0xff]
                  %300 = vst [vmem:[%s246 + $0xd0] sm:$0xff] %v299
                  %v301 = vld [vmem:[%s245 + $0x288] sm:$0xff]
                  %302 = vst [vmem:[%s246 + $0xd8] sm:$0xff] %v301
                  %v303 = vld [vmem:[%s245 + $0x2a0] sm:$0xff]
                  %304 = vst [vmem:[%s246 + $0xe0] sm:$0xff] %v303
                  %v305 = vld [vmem:[%s245 + $0x2b8] sm:$0xff]
                  %306 = vst [vmem:[%s246 + $0xe8] sm:$0xff] %v305
                  %v307 = vld [vmem:[%s245 + $0x2d0] sm:$0xff]
                  %308 = vst [vmem:[%s246 + $0xf0] sm:$0xff] %v307
                  %v309 = vld [vmem:[%s245 + $0x2e8] sm:$0xff]
                  %310 = vst [vmem:[%s246 + $0xf8] sm:$0xff] %v309
                $region52: #{gcn_encoder_forward.5} parent=46 // loop_footer
                  %s244 = sadd.s32 1, %s240
                $region53: #{gcn_encoder_forward.5} parent=46 // loop_footer_branch
                  %239 = sbr.rel target = $region49
                $region54: #{gcn_encoder_forward.5} parent=46 // loop_exit
                  _
              $region47: #{gcn_encoder_forward.5} parent=31 // pred_fallthru
                _
              // Predicated region
              $region55: #{gcn_encoder_forward.5} parent=31 // pred_check
                _
              $region56: #{gcn_encoder_forward.5} parent=31 // pred_check_branch
                %312 = sbr.rel target = $region58
              $region57: #{gcn_encoder_forward.5} parent=31 // pred_region
                _
              $region58: #{gcn_encoder_forward.5} parent=31 // pred_fallthru
                _
            $region32: #{gcn_encoder_forward.5} parent=27 // pred_fallthru
              _
            // Predicated region
            $region33: #{gcn_encoder_forward.5} parent=27 // pred_check
              _
            $region34: #{gcn_encoder_forward.5} parent=27 // pred_check_branch
              %162 = sbr.rel target = $region36
            $region35: #{gcn_encoder_forward.5} parent=27 // pred_region
              %s164 = ssub.s32 256, 1
              loop: start=0, step=1, limit=1
              $region37: #{gcn_encoder_forward.5} parent=35 // loop_pre_header
                _
              $region38: #{gcn_encoder_forward.5} parent=35 // loop_header
                %s166 = sphi 0, %s170
                %p167 = scmp.ge.s32.totalorder %s166, 1
                %s171 = sphi %s156, %s156
                %s172 = sphi %s150, %s150
              $region39: #{gcn_encoder_forward.5} parent=35 // loop_header_branch
                %169 = sbr.rel (%p167) target = $region43
              $region40: #{gcn_encoder_forward.5} parent=35 // loop_body
                %v173 = vld [vmem:[%s171] sm:%s164]
                %174 = vst [vmem:[%s172] sm:%s164] %v173
                %v175 = vld [vmem:[%s171 + $0x18] sm:%s164]
                %176 = vst [vmem:[%s172 + $0x8] sm:%s164] %v175
                %v177 = vld [vmem:[%s171 + $0x30] sm:%s164]
                %178 = vst [vmem:[%s172 + $0x10] sm:%s164] %v177
                %v179 = vld [vmem:[%s171 + $0x48] sm:%s164]
                %180 = vst [vmem:[%s172 + $0x18] sm:%s164] %v179
                %v181 = vld [vmem:[%s171 + $0x60] sm:%s164]
                %182 = vst [vmem:[%s172 + $0x20] sm:%s164] %v181
                %v183 = vld [vmem:[%s171 + $0x78] sm:%s164]
                %184 = vst [vmem:[%s172 + $0x28] sm:%s164] %v183
                %v185 = vld [vmem:[%s171 + $0x90] sm:%s164]
                %186 = vst [vmem:[%s172 + $0x30] sm:%s164] %v185
                %v187 = vld [vmem:[%s171 + $0xa8] sm:%s164]
                %188 = vst [vmem:[%s172 + $0x38] sm:%s164] %v187
                %v189 = vld [vmem:[%s171 + $0xc0] sm:%s164]
                %190 = vst [vmem:[%s172 + $0x40] sm:%s164] %v189
                %v191 = vld [vmem:[%s171 + $0xd8] sm:%s164]
                %192 = vst [vmem:[%s172 + $0x48] sm:%s164] %v191
                %v193 = vld [vmem:[%s171 + $0xf0] sm:%s164]
                %194 = vst [vmem:[%s172 + $0x50] sm:%s164] %v193
                %v195 = vld [vmem:[%s171 + $0x108] sm:%s164]
                %196 = vst [vmem:[%s172 + $0x58] sm:%s164] %v195
                %v197 = vld [vmem:[%s171 + $0x120] sm:%s164]
                %198 = vst [vmem:[%s172 + $0x60] sm:%s164] %v197
                %v199 = vld [vmem:[%s171 + $0x138] sm:%s164]
                %200 = vst [vmem:[%s172 + $0x68] sm:%s164] %v199
                %v201 = vld [vmem:[%s171 + $0x150] sm:%s164]
                %202 = vst [vmem:[%s172 + $0x70] sm:%s164] %v201
                %v203 = vld [vmem:[%s171 + $0x168] sm:%s164]
                %204 = vst [vmem:[%s172 + $0x78] sm:%s164] %v203
                %v205 = vld [vmem:[%s171 + $0x180] sm:%s164]
                %206 = vst [vmem:[%s172 + $0x80] sm:%s164] %v205
                %v207 = vld [vmem:[%s171 + $0x198] sm:%s164]
                %208 = vst [vmem:[%s172 + $0x88] sm:%s164] %v207
                %v209 = vld [vmem:[%s171 + $0x1b0] sm:%s164]
                %210 = vst [vmem:[%s172 + $0x90] sm:%s164] %v209
                %v211 = vld [vmem:[%s171 + $0x1c8] sm:%s164]
                %212 = vst [vmem:[%s172 + $0x98] sm:%s164] %v211
                %v213 = vld [vmem:[%s171 + $0x1e0] sm:%s164]
                %214 = vst [vmem:[%s172 + $0xa0] sm:%s164] %v213
                %v215 = vld [vmem:[%s171 + $0x1f8] sm:%s164]
                %216 = vst [vmem:[%s172 + $0xa8] sm:%s164] %v215
                %v217 = vld [vmem:[%s171 + $0x210] sm:%s164]
                %218 = vst [vmem:[%s172 + $0xb0] sm:%s164] %v217
                %v219 = vld [vmem:[%s171 + $0x228] sm:%s164]
                %220 = vst [vmem:[%s172 + $0xb8] sm:%s164] %v219
                %v221 = vld [vmem:[%s171 + $0x240] sm:%s164]
                %222 = vst [vmem:[%s172 + $0xc0] sm:%s164] %v221
                %v223 = vld [vmem:[%s171 + $0x258] sm:%s164]
                %224 = vst [vmem:[%s172 + $0xc8] sm:%s164] %v223
                %v225 = vld [vmem:[%s171 + $0x270] sm:%s164]
                %226 = vst [vmem:[%s172 + $0xd0] sm:%s164] %v225
                %v227 = vld [vmem:[%s171 + $0x288] sm:%s164]
                %228 = vst [vmem:[%s172 + $0xd8] sm:%s164] %v227
                %v229 = vld [vmem:[%s171 + $0x2a0] sm:%s164]
                %230 = vst [vmem:[%s172 + $0xe0] sm:%s164] %v229
                %v231 = vld [vmem:[%s171 + $0x2b8] sm:%s164]
                %232 = vst [vmem:[%s172 + $0xe8] sm:%s164] %v231
                %v233 = vld [vmem:[%s171 + $0x2d0] sm:%s164]
                %234 = vst [vmem:[%s172 + $0xf0] sm:%s164] %v233
                %v235 = vld [vmem:[%s171 + $0x2e8] sm:%s164]
                %236 = vst [vmem:[%s172 + $0xf8] sm:%s164] %v235
              $region41: #{gcn_encoder_forward.5} parent=35 // loop_footer
                %s170 = sadd.s32 1, %s166
              $region42: #{gcn_encoder_forward.5} parent=35 // loop_footer_branch
                %165 = sbr.rel target = $region38
              $region43: #{gcn_encoder_forward.5} parent=35 // loop_exit
                _
            $region36: #{gcn_encoder_forward.5} parent=27 // pred_fallthru
              _
          $region28: #{gcn_encoder_forward.5} parent=23 // pred_fallthru
            _
          %313 = vnop
        $region24: #{gcn_encoder_forward.5} parent=19 // pred_fallthru
          _
        // Predicated region
        $region59: #{gcn_encoder_forward.5} parent=19 // pred_check
          %p314 = pneg %p69
        $region60: #{gcn_encoder_forward.5} parent=19 // pred_check_branch
          %316 = sbr.rel (%p314) target = $region62
        $region61: #{gcn_encoder_forward.5} parent=19 // pred_region
          %s317 = smul.u32 32, %s17
          %p318 = scmp.lt.s32.totalorder %s317, 95
          %s319 = scalar_select %p318, %s317, 95
          %s320 = smul.addr %s319, 4
          %s321 = scalar_lea.vmem %s1, %s320
          %s322 = smul.u32 32, %s17
        $region62: #{gcn_encoder_forward.5} parent=19 // pred_fallthru
          _
      $region20: #{gcn_encoder_forward.5} parent=5 // pred_fallthru
        _
      %p323 = scmp.le.s32.totalorder 1, %s9
      %p324 = scmp.lt.s32.totalorder %s9, 10
      %p325 = pnand %p323, %p324
      %p326 = pneg %p325
      // Predicated region
      $region63: #{gcn_encoder_forward.5} parent=5 // pred_check
        _
      $region64: #{gcn_encoder_forward.5} parent=5 // pred_check_branch
        %328 = sbr.rel (%p325) target = $region66
      $region65: #{gcn_encoder_forward.5} parent=5 // pred_region
        %s329 = ssub.s32 %s9, 1
        %s330 = sand.u32 %s36, 1
        %s331 = sand.u32 %s36, 1
        %s332 = smul.addr %s331, 256
        %s333 = scalar_lea.vmem [#allocation3], %s332
        // Predicated region
        $region67: #{gcn_encoder_forward.5} parent=65 // pred_check
          %p334 = pneg %p49
        $region68: #{gcn_encoder_forward.5} parent=65 // pred_check_branch
          %336 = sbr.rel (%p334) target = $region70
        $region69: #{gcn_encoder_forward.5} parent=65 // pred_region
          _
        $region70: #{gcn_encoder_forward.5} parent=65 // pred_fallthru
          _
        %s337 = sand.u32 %s36, 1
        %s338 = sand.u32 %s36, 1
        %s339 = smul.addr %s338, 256
        %s340 = scalar_lea.vmem [#allocation3], %s339
        %p341 = pneg %p49
        %p342 = pneg %p46
        %s343 = smul.u32 32, %s19
        %p344 = scmp.lt.s32.totalorder %s343, 95
        %s345 = scalar_select %p344, %s343, 95
        %s346 = smul.addr %s345, 4
        %s347 = scalar_lea.vmem %s1, %s346
        %p348 = pneg %p75
        %p349 = pneg %p72
        %p350 = pneg %p96
        %p351 = pneg %p93
        %p352 = pneg %p122
        %p353 = pneg %p119
        %s354 = smul.u32 32, %s18
        %p355 = scmp.lt.s32.totalorder %s354, 95
        %s356 = scalar_select %p355, %s354, 95
        %s357 = smul.addr %s356, 4
        %s358 = scalar_lea.vmem %s3, %s357
        %s359 = smul.u32 32, %s18
        %s360 = smul.u32 2, %s19
        %s361 = smul.u32 32, %s19
        %p362 = scmp.lt.s32.totalorder %s361, 95
        %s363 = scalar_select %p362, %s361, 95
        %s364 = smul.addr %s363, 4
        %s365 = scalar_lea.vmem %s1, %s364
        %s366 = smul.u32 32, %s19
        %s367 = smul.u32 32, %s18
        %p368 = scmp.lt.s32.totalorder %s367, 95
        %s369 = scalar_select %p368, %s367, 95
        %s370 = smul.addr %s369, 4
        %s371 = scalar_lea.vmem %s3, %s370
        %s372 = smul.u32 32, %s18
        %p374 = scmp.eq.s32.totalorder %s19, 0
        // Predicated region
        $region71: #{gcn_encoder_forward.5} parent=65 // pred_check
          %p375 = pneg %p374
        $region72: #{gcn_encoder_forward.5} parent=65 // pred_check_branch
          %377 = sbr.rel (%p375) target = $region74
        $region73: #{gcn_encoder_forward.5} parent=65 // pred_region
          %vm378 = vcmask 261120
          %379 = vst.msk [vmem:[#allocation2] sm:$0xff] %vm378, 0.0
          %380 = vst.msk [vmem:[#allocation2 + $0x8] sm:$0xff] %vm378, 0.0
          %381 = vst.msk [vmem:[#allocation2 + $0x10] sm:$0xff] %vm378, 0.0
          %382 = vst.msk [vmem:[#allocation2 + $0x18] sm:$0xff] %vm378, 0.0
          %383 = vst.msk [vmem:[#allocation2 + $0x20] sm:$0xff] %vm378, 0.0
          %384 = vst.msk [vmem:[#allocation2 + $0x28] sm:$0xff] %vm378, 0.0
          %385 = vst.msk [vmem:[#allocation2 + $0x30] sm:$0xff] %vm378, 0.0
          %386 = vst.msk [vmem:[#allocation2 + $0x38] sm:$0xff] %vm378, 0.0
          %387 = vst.msk [vmem:[#allocation2 + $0x40] sm:$0xff] %vm378, 0.0
          %388 = vst.msk [vmem:[#allocation2 + $0x48] sm:$0xff] %vm378, 0.0
          %389 = vst.msk [vmem:[#allocation2 + $0x50] sm:$0xff] %vm378, 0.0
          %390 = vst.msk [vmem:[#allocation2 + $0x58] sm:$0xff] %vm378, 0.0
          %391 = vst.msk [vmem:[#allocation2 + $0x60] sm:$0xff] %vm378, 0.0
          %392 = vst.msk [vmem:[#allocation2 + $0x68] sm:$0xff] %vm378, 0.0
          %393 = vst.msk [vmem:[#allocation2 + $0x70] sm:$0xff] %vm378, 0.0
          %394 = vst.msk [vmem:[#allocation2 + $0x78] sm:$0xff] %vm378, 0.0
          %395 = vst.msk [vmem:[#allocation2 + $0x80] sm:$0xff] %vm378, 0.0
          %396 = vst.msk [vmem:[#allocation2 + $0x88] sm:$0xff] %vm378, 0.0
          %397 = vst.msk [vmem:[#allocation2 + $0x90] sm:$0xff] %vm378, 0.0
          %398 = vst.msk [vmem:[#allocation2 + $0x98] sm:$0xff] %vm378, 0.0
          %399 = vst.msk [vmem:[#allocation2 + $0xa0] sm:$0xff] %vm378, 0.0
          %400 = vst.msk [vmem:[#allocation2 + $0xa8] sm:$0xff] %vm378, 0.0
          %401 = vst.msk [vmem:[#allocation2 + $0xb0] sm:$0xff] %vm378, 0.0
          %402 = vst.msk [vmem:[#allocation2 + $0xb8] sm:$0xff] %vm378, 0.0
          %403 = vst.msk [vmem:[#allocation2 + $0xc0] sm:$0xff] %vm378, 0.0
          %404 = vst.msk [vmem:[#allocation2 + $0xc8] sm:$0xff] %vm378, 0.0
          %405 = vst.msk [vmem:[#allocation2 + $0xd0] sm:$0xff] %vm378, 0.0
          %406 = vst.msk [vmem:[#allocation2 + $0xd8] sm:$0xff] %vm378, 0.0
          %407 = vst.msk [vmem:[#allocation2 + $0xe0] sm:$0xff] %vm378, 0.0
          %408 = vst.msk [vmem:[#allocation2 + $0xe8] sm:$0xff] %vm378, 0.0
          %409 = vst.msk [vmem:[#allocation2 + $0xf0] sm:$0xff] %vm378, 0.0
          %410 = vst.msk [vmem:[#allocation2 + $0xf8] sm:$0xff] %vm378, 0.0
        $region74: #{gcn_encoder_forward.5} parent=65 // pred_fallthru
          _
        %v411 = vld [vmem:[%s365] sm:$0xf]
        %v412 = vld [vmem:[%s365 + $0x4] sm:$0xf]
        %v413 = vld [vmem:[%s365 + $0x8] sm:$0xf]
        %v414 = vld [vmem:[%s365 + $0xc] sm:$0xf]
        %v415 = vld [vmem:[%s365 + $0x10] sm:$0xf]
        %v416 = vld [vmem:[%s365 + $0x14] sm:$0xf]
        %v417 = vld [vmem:[%s365 + $0x18] sm:$0xf]
        %v418 = vld [vmem:[%s365 + $0x1c] sm:$0xf]
        %v419 = vld [vmem:[%s365 + $0x20] sm:$0xf]
        %v420 = vld [vmem:[%s365 + $0x24] sm:$0xf]
        %v421 = vld [vmem:[%s365 + $0x28] sm:$0xf]
        %v422 = vld [vmem:[%s365 + $0x2c] sm:$0xf]
        %v423 = vld [vmem:[%s365 + $0x30] sm:$0xf]
        %v424 = vld [vmem:[%s365 + $0x34] sm:$0xf]
        %v425 = vld [vmem:[%s365 + $0x38] sm:$0xf]
        %v426 = vld [vmem:[%s365 + $0x3c] sm:$0xf]
        %v427 = vld [vmem:[%s365 + $0x40] sm:$0xf]
        %v428 = vld [vmem:[%s365 + $0x44] sm:$0xf]
        %v429 = vld [vmem:[%s365 + $0x48] sm:$0xf]
        %v430 = vld [vmem:[%s365 + $0x4c] sm:$0xf]
        %v431 = vld [vmem:[%s365 + $0x50] sm:$0xf]
        %v432 = vld [vmem:[%s365 + $0x54] sm:$0xf]
        %v433 = vld [vmem:[%s365 + $0x58] sm:$0xf]
        %v434 = vld [vmem:[%s365 + $0x5c] sm:$0xf]
        %v435 = vld [vmem:[%s365 + $0x60] sm:$0xf]
        %v436 = vld [vmem:[%s365 + $0x64] sm:$0xf]
        %v437 = vld [vmem:[%s365 + $0x68] sm:$0xf]
        %v438 = vld [vmem:[%s365 + $0x6c] sm:$0xf]
        %v439 = vld [vmem:[%s365 + $0x70] sm:$0xf]
        %v440 = vld [vmem:[%s365 + $0x74] sm:$0xf]
        %v441 = vld [vmem:[%s365 + $0x78] sm:$0xf]
        %v442 = vld [vmem:[%s365 + $0x7c] sm:$0xf]
        %v443 = vld [vmem:[%s2] sm:$0xf]
        %v444 = vld [vmem:[%s2 + $0x4] sm:$0xf]
        %v445 = vld [vmem:[%s2 + $0x8] sm:$0xf]
        %v446 = vld [vmem:[%s2 + $0xc] sm:$0xf]
        %v447 = vld [vmem:[%s2 + $0x10] sm:$0xf]
        %v448 = vld [vmem:[%s2 + $0x14] sm:$0xf]
        %v449 = vld [vmem:[%s2 + $0x18] sm:$0xf]
        %v450 = vld [vmem:[%s2 + $0x1c] sm:$0xf]
        %v483 = vunpack.c.l.b16 %v411
        %v484 = vunpack.c.l.b16 %v412
        %v485 = vunpack.c.l.b16 %v413
        %v486 = vunpack.c.l.b16 %v414
        %v487 = vunpack.c.l.b16 %v415
        %v488 = vunpack.c.l.b16 %v416
        %v489 = vunpack.c.l.b16 %v417
        %v490 = vunpack.c.l.b16 %v418
        %v491 = vunpack.c.l.b16 %v419
        %v492 = vunpack.c.l.b16 %v420
        %v493 = vunpack.c.l.b16 %v421
        %v494 = vunpack.c.l.b16 %v422
        %v495 = vunpack.c.l.b16 %v423
        %v496 = vunpack.c.l.b16 %v424
        %v497 = vunpack.c.l.b16 %v425
        %v498 = vunpack.c.l.b16 %v426
        %v499 = vunpack.c.l.b16 %v427
        %v500 = vunpack.c.l.b16 %v428
        %v501 = vunpack.c.l.b16 %v429
        %v502 = vunpack.c.l.b16 %v430
        %v503 = vunpack.c.l.b16 %v431
        %v504 = vunpack.c.l.b16 %v432
        %v505 = vunpack.c.l.b16 %v433
        %v506 = vunpack.c.l.b16 %v434
        %v507 = vunpack.c.l.b16 %v435
        %v508 = vunpack.c.l.b16 %v436
        %v509 = vunpack.c.l.b16 %v437
        %v510 = vunpack.c.l.b16 %v438
        %v511 = vunpack.c.l.b16 %v439
        %v512 = vunpack.c.l.b16 %v440
        %v513 = vunpack.c.l.b16 %v441
        %v514 = vunpack.c.l.b16 %v442
        %v515 = vpack.c.b16 %v484, %v483
        %v516 = vpack.c.b16 %v486, %v485
        %v517 = vpack.c.b16 %v488, %v487
        %v518 = vpack.c.b16 %v490, %v489
        %v519 = vpack.c.b16 %v492, %v491
        %v520 = vpack.c.b16 %v494, %v493
        %v521 = vpack.c.b16 %v496, %v495
        %v522 = vpack.c.b16 %v498, %v497
        %v523 = vpack.c.b16 %v500, %v499
        %v524 = vpack.c.b16 %v502, %v501
        %v525 = vpack.c.b16 %v504, %v503
        %v526 = vpack.c.b16 %v506, %v505
        %v527 = vpack.c.b16 %v508, %v507
        %v528 = vpack.c.b16 %v510, %v509
        %v529 = vpack.c.b16 %v512, %v511
        %v530 = vpack.c.b16 %v514, %v513
        %v539 = vunpack.c.l.b16 %v443
        %v540 = vunpack.c.l.b16 %v444
        %v541 = vunpack.c.l.b16 %v445
        %v542 = vunpack.c.l.b16 %v446
        %v543 = vunpack.c.l.b16 %v447
        %v544 = vunpack.c.l.b16 %v448
        %v545 = vunpack.c.l.b16 %v449
        %v546 = vunpack.c.l.b16 %v450
        %v547 = vpack.c.b16 %v540, %v539
        %v548 = vpack.c.b16 %v542, %v541
        %v549 = vpack.c.b16 %v544, %v543
        %v550 = vpack.c.b16 %v546, %v545
        %vm555 = vcmask 523264
        %v557 = vsel %vm555, %v515, 0
        %v560 = vsel %vm555, %v516, 0
        %v563 = vsel %vm555, %v517, 0
        %v566 = vsel %vm555, %v518, 0
        %v569 = vsel %vm555, %v519, 0
        %v572 = vsel %vm555, %v520, 0
        %v575 = vsel %vm555, %v521, 0
        %v578 = vsel %vm555, %v522, 0
        %v581 = vsel %vm555, %v523, 0
        %v584 = vsel %vm555, %v524, 0
        %v587 = vsel %vm555, %v525, 0
        %v590 = vsel %vm555, %v526, 0
        %v593 = vsel %vm555, %v527, 0
        %v596 = vsel %vm555, %v528, 0
        %v599 = vsel %vm555, %v529, 0
        %v602 = vsel %vm555, %v530, 0
        %604 = vmatprep.subr.bf16.mxu0 0
        %605 = vmatpush1.bf16.msra.mxu0 0
        %606 = vmatprep.subr.bf16.mxu0 0
        %607 = vmatpush1.bf16.msra.mxu0 0
        %608 = vmatprep.subr.bf16.mxu0 0
        %609 = vmatpush1.bf16.msra.mxu0 0
        %610 = vmatprep.subr.bf16.mxu0 0
        %611 = vmatpush1.bf16.msra.mxu0 0
        %612 = vmatprep.subr.bf16.mxu0 0
        %613 = vmatpush1.bf16.msra.mxu0 %v550
        %614 = vmatprep.subr.bf16.mxu0 0
        %615 = vmatpush1.bf16.msra.mxu0 %v549
        %616 = vmatprep.subr.bf16.mxu0 0
        %617 = vmatpush1.bf16.msra.mxu0 %v548
        %618 = vmatprep.subr.bf16.mxu0 0
        %619 = vmatpush1.bf16.msra.mxu0 %v547
        %620 = vmatprep.subr.bf16.mxu0 0
        %621 = vmatpush2.bf16.msra.mxu0 0
        %622 = vmatprep.subr.bf16.mxu0 0
        %623 = vmatpush2.bf16.msra.mxu0 0
        %624 = vmatprep.subr.bf16.mxu0 0
        %625 = vmatpush2.bf16.msra.mxu0 0
        %626 = vmatprep.subr.bf16.mxu0 0
        %627 = vmatpush2.bf16.msra.mxu0 0
        %628 = vmatprep.subr.bf16.mxu0 0
        %629 = vmatpush2.bf16.msra.mxu0 0
        %630 = vmatprep.subr.bf16.mxu0 0
        %631 = vmatpush2.bf16.msra.mxu0 0
        %632 = vmatprep.subr.bf16.mxu0 0
        %633 = vmatpush2.bf16.msra.mxu0 0
        %634 = vmatprep.subr.bf16.mxu0 0
        %635 = vmatpush2.bf16.msra.mxu0 0
        %636 = vmatprep.mubr.bf16.mxu0 0
        %637 = vmatmul.mubr.bf16.gmra.mxu0 %v557
        %v638 = vpop.f32.mrf.mxu0
        %v639 = vadd.f32 0.0, %v638
        %v640 = vpop.f32.mrf.mxu0
        %v641 = vpop.f32.mrf.mxu0
        %v642 = vadd.f32 0.0, %v641
        %v643 = vpop.f32.mrf.mxu0
        %644 = vmatprep.mubr.bf16.mxu0 0
        %645 = vmatmul.mubr.bf16.gmra.mxu0 %v560
        %v646 = vpop.f32.mrf.mxu0
        %v647 = vadd.f32 0.0, %v646
        %v648 = vpop.f32.mrf.mxu0
        %v649 = vpop.f32.mrf.mxu0
        %v650 = vadd.f32 0.0, %v649
        %v651 = vpop.f32.mrf.mxu0
        %652 = vmatprep.mubr.bf16.mxu0 0
        %653 = vmatmul.mubr.bf16.gmra.mxu0 %v563
        %v654 = vpop.f32.mrf.mxu0
        %v655 = vadd.f32 0.0, %v654
        %v656 = vpop.f32.mrf.mxu0
        %v657 = vpop.f32.mrf.mxu0
        %v658 = vadd.f32 0.0, %v657
        %v659 = vpop.f32.mrf.mxu0
        %660 = vmatprep.mubr.bf16.mxu0 0
        %661 = vmatmul.mubr.bf16.gmra.mxu0 %v566
        %v662 = vpop.f32.mrf.mxu0
        %v663 = vadd.f32 0.0, %v662
        %v664 = vpop.f32.mrf.mxu0
        %v665 = vpop.f32.mrf.mxu0
        %v666 = vadd.f32 0.0, %v665
        %v667 = vpop.f32.mrf.mxu0
        %668 = vmatprep.mubr.bf16.mxu0 0
        %669 = vmatmul.mubr.bf16.gmra.mxu0 %v569
        %v670 = vpop.f32.mrf.mxu0
        %v671 = vadd.f32 0.0, %v670
        %v672 = vpop.f32.mrf.mxu0
        %v673 = vpop.f32.mrf.mxu0
        %v674 = vadd.f32 0.0, %v673
        %v675 = vpop.f32.mrf.mxu0
        %676 = vmatprep.mubr.bf16.mxu0 0
        %677 = vmatmul.mubr.bf16.gmra.mxu0 %v572
        %v678 = vpop.f32.mrf.mxu0
        %v679 = vadd.f32 0.0, %v678
        %v680 = vpop.f32.mrf.mxu0
        %v681 = vpop.f32.mrf.mxu0
        %v682 = vadd.f32 0.0, %v681
        %v683 = vpop.f32.mrf.mxu0
        %684 = vmatprep.mubr.bf16.mxu0 0
        %685 = vmatmul.mubr.bf16.gmra.mxu0 %v575
        %v686 = vpop.f32.mrf.mxu0
        %v687 = vadd.f32 0.0, %v686
        %v688 = vpop.f32.mrf.mxu0
        %v689 = vpop.f32.mrf.mxu0
        %v690 = vadd.f32 0.0, %v689
        %v691 = vpop.f32.mrf.mxu0
        %692 = vmatprep.mubr.bf16.mxu0 0
        %693 = vmatmul.mubr.bf16.gmra.mxu0 %v578
        %v694 = vpop.f32.mrf.mxu0
        %v695 = vadd.f32 0.0, %v694
        %v696 = vpop.f32.mrf.mxu0
        %v697 = vpop.f32.mrf.mxu0
        %v698 = vadd.f32 0.0, %v697
        %v699 = vpop.f32.mrf.mxu0
        %700 = vmatprep.mubr.bf16.mxu0 0
        %701 = vmatmul.mubr.bf16.gmra.mxu0 %v581
        %v702 = vpop.f32.mrf.mxu0
        %v703 = vadd.f32 0.0, %v702
        %v704 = vpop.f32.mrf.mxu0
        %v705 = vpop.f32.mrf.mxu0
        %v706 = vadd.f32 0.0, %v705
        %v707 = vpop.f32.mrf.mxu0
        %708 = vmatprep.mubr.bf16.mxu0 0
        %709 = vmatmul.mubr.bf16.gmra.mxu0 %v584
        %v710 = vpop.f32.mrf.mxu0
        %v711 = vadd.f32 0.0, %v710
        %v712 = vpop.f32.mrf.mxu0
        %v713 = vpop.f32.mrf.mxu0
        %v714 = vadd.f32 0.0, %v713
        %v715 = vpop.f32.mrf.mxu0
        %716 = vmatprep.mubr.bf16.mxu0 0
        %717 = vmatmul.mubr.bf16.gmra.mxu0 %v587
        %v718 = vpop.f32.mrf.mxu0
        %v719 = vadd.f32 0.0, %v718
        %v720 = vpop.f32.mrf.mxu0
        %v721 = vpop.f32.mrf.mxu0
        %v722 = vadd.f32 0.0, %v721
        %v723 = vpop.f32.mrf.mxu0
        %724 = vmatprep.mubr.bf16.mxu0 0
        %725 = vmatmul.mubr.bf16.gmra.mxu0 %v590
        %v726 = vpop.f32.mrf.mxu0
        %v727 = vadd.f32 0.0, %v726
        %v728 = vpop.f32.mrf.mxu0
        %v729 = vpop.f32.mrf.mxu0
        %v730 = vadd.f32 0.0, %v729
        %v731 = vpop.f32.mrf.mxu0
        %732 = vmatprep.mubr.bf16.mxu0 0
        %733 = vmatmul.mubr.bf16.gmra.mxu0 %v593
        %v734 = vpop.f32.mrf.mxu0
        %v735 = vadd.f32 0.0, %v734
        %v736 = vpop.f32.mrf.mxu0
        %v737 = vpop.f32.mrf.mxu0
        %v738 = vadd.f32 0.0, %v737
        %v739 = vpop.f32.mrf.mxu0
        %740 = vmatprep.mubr.bf16.mxu0 0
        %741 = vmatmul.mubr.bf16.gmra.mxu0 %v596
        %v742 = vpop.f32.mrf.mxu0
        %v743 = vadd.f32 0.0, %v742
        %v744 = vpop.f32.mrf.mxu0
        %v745 = vpop.f32.mrf.mxu0
        %v746 = vadd.f32 0.0, %v745
        %v747 = vpop.f32.mrf.mxu0
        %748 = vmatprep.mubr.bf16.mxu0 0
        %749 = vmatmul.mubr.bf16.gmra.mxu0 %v599
        %v750 = vpop.f32.mrf.mxu0
        %v751 = vadd.f32 0.0, %v750
        %v752 = vpop.f32.mrf.mxu0
        %v753 = vpop.f32.mrf.mxu0
        %v754 = vadd.f32 0.0, %v753
        %v755 = vpop.f32.mrf.mxu0
        %756 = vmatprep.mubr.bf16.mxu0 0
        %757 = vmatmul.mubr.bf16.gmra.mxu0 %v602
        %v758 = vpop.f32.mrf.mxu0
        %v759 = vadd.f32 0.0, %v758
        %v760 = vpop.f32.mrf.mxu0
        %v761 = vpop.f32.mrf.mxu0
        %v762 = vadd.f32 0.0, %v761
        %v763 = vpop.f32.mrf.mxu0
        %764 = vdwg.mxu0
        %v765 = vld [vmem:[#allocation2] sm:$0xff]
        %v766 = vld [vmem:[#allocation2 + $0x8] sm:$0xff]
        %v767 = vld [vmem:[#allocation2 + $0x10] sm:$0xff]
        %v768 = vld [vmem:[#allocation2 + $0x18] sm:$0xff]
        %v769 = vld [vmem:[#allocation2 + $0x20] sm:$0xff]
        %v770 = vld [vmem:[#allocation2 + $0x28] sm:$0xff]
        %v771 = vld [vmem:[#allocation2 + $0x30] sm:$0xff]
        %v772 = vld [vmem:[#allocation2 + $0x38] sm:$0xff]
        %v773 = vld [vmem:[#allocation2 + $0x40] sm:$0xff]
        %v774 = vld [vmem:[#allocation2 + $0x48] sm:$0xff]
        %v775 = vld [vmem:[#allocation2 + $0x50] sm:$0xff]
        %v776 = vld [vmem:[#allocation2 + $0x58] sm:$0xff]
        %v777 = vld [vmem:[#allocation2 + $0x60] sm:$0xff]
        %v778 = vld [vmem:[#allocation2 + $0x68] sm:$0xff]
        %v779 = vld [vmem:[#allocation2 + $0x70] sm:$0xff]
        %v780 = vld [vmem:[#allocation2 + $0x78] sm:$0xff]
        %v781 = vld [vmem:[#allocation2 + $0x80] sm:$0xff]
        %v782 = vld [vmem:[#allocation2 + $0x88] sm:$0xff]
        %v783 = vld [vmem:[#allocation2 + $0x90] sm:$0xff]
        %v784 = vld [vmem:[#allocation2 + $0x98] sm:$0xff]
        %v785 = vld [vmem:[#allocation2 + $0xa0] sm:$0xff]
        %v786 = vld [vmem:[#allocation2 + $0xa8] sm:$0xff]
        %v787 = vld [vmem:[#allocation2 + $0xb0] sm:$0xff]
        %v788 = vld [vmem:[#allocation2 + $0xb8] sm:$0xff]
        %v789 = vld [vmem:[#allocation2 + $0xc0] sm:$0xff]
        %v790 = vld [vmem:[#allocation2 + $0xc8] sm:$0xff]
        %v791 = vld [vmem:[#allocation2 + $0xd0] sm:$0xff]
        %v792 = vld [vmem:[#allocation2 + $0xd8] sm:$0xff]
        %v793 = vld [vmem:[#allocation2 + $0xe0] sm:$0xff]
        %v794 = vld [vmem:[#allocation2 + $0xe8] sm:$0xff]
        %v795 = vld [vmem:[#allocation2 + $0xf0] sm:$0xff]
        %v796 = vld [vmem:[#allocation2 + $0xf8] sm:$0xff]
        %v797 = vld [vmem:[%s333] sm:$0xff]
        %v798 = vld [vmem:[%s333 + $0x8] sm:$0xff]
        %v799 = vld [vmem:[%s333 + $0x10] sm:$0xff]
        %v800 = vld [vmem:[%s333 + $0x18] sm:$0xff]
        %v801 = vld [vmem:[%s333 + $0x20] sm:$0xff]
        %v802 = vld [vmem:[%s333 + $0x28] sm:$0xff]
        %v803 = vld [vmem:[%s333 + $0x30] sm:$0xff]
        %v804 = vld [vmem:[%s333 + $0x38] sm:$0xff]
        %v805 = vld [vmem:[%s333 + $0x40] sm:$0xff]
        %v806 = vld [vmem:[%s333 + $0x48] sm:$0xff]
        %v807 = vld [vmem:[%s333 + $0x50] sm:$0xff]
        %v808 = vld [vmem:[%s333 + $0x58] sm:$0xff]
        %v809 = vld [vmem:[%s333 + $0x60] sm:$0xff]
        %v810 = vld [vmem:[%s333 + $0x68] sm:$0xff]
        %v811 = vld [vmem:[%s333 + $0x70] sm:$0xff]
        %v812 = vld [vmem:[%s333 + $0x78] sm:$0xff]
        %v813 = vld [vmem:[%s333 + $0x80] sm:$0xff]
        %v814 = vld [vmem:[%s333 + $0x88] sm:$0xff]
        %v815 = vld [vmem:[%s333 + $0x90] sm:$0xff]
        %v816 = vld [vmem:[%s333 + $0x98] sm:$0xff]
        %v817 = vld [vmem:[%s333 + $0xa0] sm:$0xff]
        %v818 = vld [vmem:[%s333 + $0xa8] sm:$0xff]
        %v819 = vld [vmem:[%s333 + $0xb0] sm:$0xff]
        %v820 = vld [vmem:[%s333 + $0xb8] sm:$0xff]
        %v821 = vld [vmem:[%s333 + $0xc0] sm:$0xff]
        %v822 = vld [vmem:[%s333 + $0xc8] sm:$0xff]
        %v823 = vld [vmem:[%s333 + $0xd0] sm:$0xff]
        %v824 = vld [vmem:[%s333 + $0xd8] sm:$0xff]
        %v825 = vld [vmem:[%s333 + $0xe0] sm:$0xff]
        %v826 = vld [vmem:[%s333 + $0xe8] sm:$0xff]
        %v827 = vld [vmem:[%s333 + $0xf0] sm:$0xff]
        %v828 = vld [vmem:[%s333 + $0xf8] sm:$0xff]
        %v829 = vpack.c.bf16 %v642, %v639
        %v830 = vpack.c.bf16 %v650, %v647
        %v831 = vpack.c.bf16 %v658, %v655
        %v832 = vpack.c.bf16 %v666, %v663
        %v833 = vpack.c.bf16 %v674, %v671
        %v834 = vpack.c.bf16 %v682, %v679
        %v835 = vpack.c.bf16 %v690, %v687
        %v836 = vpack.c.bf16 %v698, %v695
        %v837 = vpack.c.bf16 %v706, %v703
        %v838 = vpack.c.bf16 %v714, %v711
        %v839 = vpack.c.bf16 %v722, %v719
        %v840 = vpack.c.bf16 %v730, %v727
        %v841 = vpack.c.bf16 %v738, %v735
        %v842 = vpack.c.bf16 %v746, %v743
        %v843 = vpack.c.bf16 %v754, %v751
        %v844 = vpack.c.bf16 %v762, %v759
        %v877 = vunpack.c.l.b16 %v797
        %v878 = vunpack.c.h.b16 %v797
        %v879 = vunpack.c.l.b16 %v798
        %v880 = vunpack.c.h.b16 %v798
        %v881 = vunpack.c.l.b16 %v799
        %v882 = vunpack.c.h.b16 %v799
        %v883 = vunpack.c.l.b16 %v800
        %v884 = vunpack.c.h.b16 %v800
        %v885 = vunpack.c.l.b16 %v801
        %v886 = vunpack.c.h.b16 %v801
        %v887 = vunpack.c.l.b16 %v802
        %v888 = vunpack.c.h.b16 %v802
        %v889 = vunpack.c.l.b16 %v803
        %v890 = vunpack.c.h.b16 %v803
        %v891 = vunpack.c.l.b16 %v804
        %v892 = vunpack.c.h.b16 %v804
        %v893 = vunpack.c.l.b16 %v805
        %v894 = vunpack.c.h.b16 %v805
        %v895 = vunpack.c.l.b16 %v806
        %v896 = vunpack.c.h.b16 %v806
        %v897 = vunpack.c.l.b16 %v807
        %v898 = vunpack.c.h.b16 %v807
        %v899 = vunpack.c.l.b16 %v808
        %v900 = vunpack.c.h.b16 %v808
        %v901 = vunpack.c.l.b16 %v809
        %v902 = vunpack.c.h.b16 %v809
        %v903 = vunpack.c.l.b16 %v810
        %v904 = vunpack.c.h.b16 %v810
        %v905 = vunpack.c.l.b16 %v811
        %v906 = vunpack.c.h.b16 %v811
        %v907 = vunpack.c.l.b16 %v812
        %v908 = vunpack.c.h.b16 %v812
        %v909 = vunpack.c.l.b16 %v813
        %v910 = vunpack.c.h.b16 %v813
        %v911 = vunpack.c.l.b16 %v814
        %v912 = vunpack.c.h.b16 %v814
        %v913 = vunpack.c.l.b16 %v815
        %v914 = vunpack.c.h.b16 %v815
        %v915 = vunpack.c.l.b16 %v816
        %v916 = vunpack.c.h.b16 %v816
        %v917 = vunpack.c.l.b16 %v817
        %v918 = vunpack.c.h.b16 %v817
        %v919 = vunpack.c.l.b16 %v818
        %v920 = vunpack.c.h.b16 %v818
        %v921 = vunpack.c.l.b16 %v819
        %v922 = vunpack.c.h.b16 %v819
        %v923 = vunpack.c.l.b16 %v820
        %v924 = vunpack.c.h.b16 %v820
        %v925 = vunpack.c.l.b16 %v821
        %v926 = vunpack.c.h.b16 %v821
        %v927 = vunpack.c.l.b16 %v822
        %v928 = vunpack.c.h.b16 %v822
        %v929 = vunpack.c.l.b16 %v823
        %v930 = vunpack.c.h.b16 %v823
        %v931 = vunpack.c.l.b16 %v824
        %v932 = vunpack.c.h.b16 %v824
        %v933 = vunpack.c.l.b16 %v825
        %v934 = vunpack.c.h.b16 %v825
        %v935 = vunpack.c.l.b16 %v826
        %v936 = vunpack.c.h.b16 %v826
        %v937 = vunpack.c.l.b16 %v827
        %v938 = vunpack.c.h.b16 %v827
        %v939 = vunpack.c.l.b16 %v828
        %v940 = vunpack.c.h.b16 %v828
        %v941 = vpack.c.b16 %v879, %v877
        %v942 = vpack.c.b16 %v880, %v878
        %v943 = vpack.c.b16 %v883, %v881
        %v944 = vpack.c.b16 %v884, %v882
        %v945 = vpack.c.b16 %v887, %v885
        %v946 = vpack.c.b16 %v888, %v886
        %v947 = vpack.c.b16 %v891, %v889
        %v948 = vpack.c.b16 %v892, %v890
        %v949 = vpack.c.b16 %v895, %v893
        %v950 = vpack.c.b16 %v896, %v894
        %v951 = vpack.c.b16 %v899, %v897
        %v952 = vpack.c.b16 %v900, %v898
        %v953 = vpack.c.b16 %v903, %v901
        %v954 = vpack.c.b16 %v904, %v902
        %v955 = vpack.c.b16 %v907, %v905
        %v956 = vpack.c.b16 %v908, %v906
        %v957 = vpack.c.b16 %v911, %v909
        %v958 = vpack.c.b16 %v912, %v910
        %v959 = vpack.c.b16 %v915, %v913
        %v960 = vpack.c.b16 %v916, %v914
        %v961 = vpack.c.b16 %v919, %v917
        %v962 = vpack.c.b16 %v920, %v918
        %v963 = vpack.c.b16 %v923, %v921
        %v964 = vpack.c.b16 %v924, %v922
        %v965 = vpack.c.b16 %v927, %v925
        %v966 = vpack.c.b16 %v928, %v926
        %v967 = vpack.c.b16 %v931, %v929
        %v968 = vpack.c.b16 %v932, %v930
        %v969 = vpack.c.b16 %v935, %v933
        %v970 = vpack.c.b16 %v936, %v934
        %v971 = vpack.c.b16 %v939, %v937
        %v972 = vpack.c.b16 %v940, %v938
        %1005 = vmatprep.subr.bf16.mxu0 0
        %1006 = vmatpush1.bf16.msra.mxu0 %v836
        %1007 = vmatprep.subr.bf16.mxu0 0
        %1008 = vmatpush1.bf16.msra.mxu0 %v835
        %1009 = vmatprep.subr.bf16.mxu0 0
        %1010 = vmatpush1.bf16.msra.mxu0 %v834
        %1011 = vmatprep.subr.bf16.mxu0 0
        %1012 = vmatpush1.bf16.msra.mxu0 %v833
        %1013 = vmatprep.subr.bf16.mxu0 0
        %1014 = vmatpush1.bf16.msra.mxu0 %v832
        %1015 = vmatprep.subr.bf16.mxu0 0
        %1016 = vmatpush1.bf16.msra.mxu0 %v831
        %1017 = vmatprep.subr.bf16.mxu0 0
        %1018 = vmatpush1.bf16.msra.mxu0 %v830
        %1019 = vmatprep.subr.bf16.mxu0 0
        %1020 = vmatpush1.bf16.msra.mxu0 %v829
        %1021 = vmatprep.subr.bf16.mxu0 0
        %1022 = vmatpush2.bf16.msra.mxu0 %v844
        %1023 = vmatprep.subr.bf16.mxu0 0
        %1024 = vmatpush2.bf16.msra.mxu0 %v843
        %1025 = vmatprep.subr.bf16.mxu0 0
        %1026 = vmatpush2.bf16.msra.mxu0 %v842
        %1027 = vmatprep.subr.bf16.mxu0 0
        %1028 = vmatpush2.bf16.msra.mxu0 %v841
        %1029 = vmatprep.subr.bf16.mxu0 0
        %1030 = vmatpush2.bf16.msra.mxu0 %v840
        %1031 = vmatprep.subr.bf16.mxu0 0
        %1032 = vmatpush2.bf16.msra.mxu0 %v839
        %1033 = vmatprep.subr.bf16.mxu0 0
        %1034 = vmatpush2.bf16.msra.mxu0 %v838
        %1035 = vmatprep.subr.bf16.mxu0 0
        %1036 = vmatpush2.bf16.msra.mxu0 %v837
        %1037 = vmatprep.mubr.bf16.mxu0 %v942
        %1038 = vmatmul.mubr.bf16.gmra.mxu0 %v941
        %v1039 = vpop.f32.mrf.mxu0
        %v1040 = vadd.f32 0.0, %v1039
        %v1041 = vpop.f32.mrf.mxu0
        %v1042 = vpop.f32.mrf.mxu0
        %v1043 = vadd.f32 0.0, %v1042
        %v1044 = vpop.f32.mrf.mxu0
        %1045 = vmatprep.mubr.bf16.mxu0 %v944
        %1046 = vmatmul.mubr.bf16.gmra.mxu0 %v943
        %v1047 = vpop.f32.mrf.mxu0
        %v1048 = vadd.f32 0.0, %v1047
        %v1049 = vpop.f32.mrf.mxu0
        %v1050 = vpop.f32.mrf.mxu0
        %v1051 = vadd.f32 0.0, %v1050
        %v1052 = vpop.f32.mrf.mxu0
        %1053 = vmatprep.mubr.bf16.mxu0 %v946
        %1054 = vmatmul.mubr.bf16.gmra.mxu0 %v945
        %v1055 = vpop.f32.mrf.mxu0
        %v1056 = vadd.f32 0.0, %v1055
        %v1057 = vpop.f32.mrf.mxu0
        %v1058 = vpop.f32.mrf.mxu0
        %v1059 = vadd.f32 0.0, %v1058
        %v1060 = vpop.f32.mrf.mxu0
        %1061 = vmatprep.mubr.bf16.mxu0 %v948
        %1062 = vmatmul.mubr.bf16.gmra.mxu0 %v947
        %v1063 = vpop.f32.mrf.mxu0
        %v1064 = vadd.f32 0.0, %v1063
        %v1065 = vpop.f32.mrf.mxu0
        %v1066 = vpop.f32.mrf.mxu0
        %v1067 = vadd.f32 0.0, %v1066
        %v1068 = vpop.f32.mrf.mxu0
        %1069 = vmatprep.mubr.bf16.mxu0 %v950
        %1070 = vmatmul.mubr.bf16.gmra.mxu0 %v949
        %v1071 = vpop.f32.mrf.mxu0
        %v1072 = vadd.f32 0.0, %v1071
        %v1073 = vpop.f32.mrf.mxu0
        %v1074 = vpop.f32.mrf.mxu0
        %v1075 = vadd.f32 0.0, %v1074
        %v1076 = vpop.f32.mrf.mxu0
        %1077 = vmatprep.mubr.bf16.mxu0 %v952
        %1078 = vmatmul.mubr.bf16.gmra.mxu0 %v951
        %v1079 = vpop.f32.mrf.mxu0
        %v1080 = vadd.f32 0.0, %v1079
        %v1081 = vpop.f32.mrf.mxu0
        %v1082 = vpop.f32.mrf.mxu0
        %v1083 = vadd.f32 0.0, %v1082
        %v1084 = vpop.f32.mrf.mxu0
        %1085 = vmatprep.mubr.bf16.mxu0 %v954
        %1086 = vmatmul.mubr.bf16.gmra.mxu0 %v953
        %v1087 = vpop.f32.mrf.mxu0
        %v1088 = vadd.f32 0.0, %v1087
        %v1089 = vpop.f32.mrf.mxu0
        %v1090 = vpop.f32.mrf.mxu0
        %v1091 = vadd.f32 0.0, %v1090
        %v1092 = vpop.f32.mrf.mxu0
        %1093 = vmatprep.mubr.bf16.mxu0 %v956
        %1094 = vmatmul.mubr.bf16.gmra.mxu0 %v955
        %v1095 = vpop.f32.mrf.mxu0
        %v1096 = vadd.f32 0.0, %v1095
        %v1097 = vpop.f32.mrf.mxu0
        %v1098 = vpop.f32.mrf.mxu0
        %v1099 = vadd.f32 0.0, %v1098
        %v1100 = vpop.f32.mrf.mxu0
        %1101 = vmatprep.mubr.bf16.mxu0 %v958
        %1102 = vmatmul.mubr.bf16.gmra.mxu0 %v957
        %v1103 = vpop.f32.mrf.mxu0
        %v1104 = vadd.f32 0.0, %v1103
        %v1105 = vpop.f32.mrf.mxu0
        %v1106 = vpop.f32.mrf.mxu0
        %v1107 = vadd.f32 0.0, %v1106
        %v1108 = vpop.f32.mrf.mxu0
        %1109 = vmatprep.mubr.bf16.mxu0 %v960
        %1110 = vmatmul.mubr.bf16.gmra.mxu0 %v959
        %v1111 = vpop.f32.mrf.mxu0
        %v1112 = vadd.f32 0.0, %v1111
        %v1113 = vpop.f32.mrf.mxu0
        %v1114 = vpop.f32.mrf.mxu0
        %v1115 = vadd.f32 0.0, %v1114
        %v1116 = vpop.f32.mrf.mxu0
        %1117 = vmatprep.mubr.bf16.mxu0 %v962
        %1118 = vmatmul.mubr.bf16.gmra.mxu0 %v961
        %v1119 = vpop.f32.mrf.mxu0
        %v1120 = vadd.f32 0.0, %v1119
        %v1121 = vpop.f32.mrf.mxu0
        %v1122 = vpop.f32.mrf.mxu0
        %v1123 = vadd.f32 0.0, %v1122
        %v1124 = vpop.f32.mrf.mxu0
        %1125 = vmatprep.mubr.bf16.mxu0 %v964
        %1126 = vmatmul.mubr.bf16.gmra.mxu0 %v963
        %v1127 = vpop.f32.mrf.mxu0
        %v1128 = vadd.f32 0.0, %v1127
        %v1129 = vpop.f32.mrf.mxu0
        %v1130 = vpop.f32.mrf.mxu0
        %v1131 = vadd.f32 0.0, %v1130
        %v1132 = vpop.f32.mrf.mxu0
        %1133 = vmatprep.mubr.bf16.mxu0 %v966
        %1134 = vmatmul.mubr.bf16.gmra.mxu0 %v965
        %v1135 = vpop.f32.mrf.mxu0
        %v1136 = vadd.f32 0.0, %v1135
        %v1137 = vpop.f32.mrf.mxu0
        %v1138 = vpop.f32.mrf.mxu0
        %v1139 = vadd.f32 0.0, %v1138
        %v1140 = vpop.f32.mrf.mxu0
        %1141 = vmatprep.mubr.bf16.mxu0 %v968
        %1142 = vmatmul.mubr.bf16.gmra.mxu0 %v967
        %v1143 = vpop.f32.mrf.mxu0
        %v1144 = vadd.f32 0.0, %v1143
        %v1145 = vpop.f32.mrf.mxu0
        %v1146 = vpop.f32.mrf.mxu0
        %v1147 = vadd.f32 0.0, %v1146
        %v1148 = vpop.f32.mrf.mxu0
        %1149 = vmatprep.mubr.bf16.mxu0 %v970
        %1150 = vmatmul.mubr.bf16.gmra.mxu0 %v969
        %v1151 = vpop.f32.mrf.mxu0
        %v1152 = vadd.f32 0.0, %v1151
        %v1153 = vpop.f32.mrf.mxu0
        %v1154 = vpop.f32.mrf.mxu0
        %v1155 = vadd.f32 0.0, %v1154
        %v1156 = vpop.f32.mrf.mxu0
        %1157 = vmatprep.mubr.bf16.mxu0 %v972
        %1158 = vmatmul.mubr.bf16.gmra.mxu0 %v971
        %v1159 = vpop.f32.mrf.mxu0
        %v1160 = vadd.f32 0.0, %v1159
        %v1161 = vpop.f32.mrf.mxu0
        %v1162 = vpop.f32.mrf.mxu0
        %v1163 = vadd.f32 0.0, %v1162
        %v1164 = vpop.f32.mrf.mxu0
        %1165 = vdwg.mxu0
        %v1166 = vadd.f32 %v765, %v1040
        %v1167 = vadd.f32 %v766, %v1043
        %v1168 = vadd.f32 %v767, %v1048
        %v1169 = vadd.f32 %v768, %v1051
        %v1170 = vadd.f32 %v769, %v1056
        %v1171 = vadd.f32 %v770, %v1059
        %v1172 = vadd.f32 %v771, %v1064
        %v1173 = vadd.f32 %v772, %v1067
        %v1174 = vadd.f32 %v773, %v1072
        %v1175 = vadd.f32 %v774, %v1075
        %v1176 = vadd.f32 %v775, %v1080
        %v1177 = vadd.f32 %v776, %v1083
        %v1178 = vadd.f32 %v777, %v1088
        %v1179 = vadd.f32 %v778, %v1091
        %v1180 = vadd.f32 %v779, %v1096
        %v1181 = vadd.f32 %v780, %v1099
        %v1182 = vadd.f32 %v781, %v1104
        %v1183 = vadd.f32 %v782, %v1107
        %v1184 = vadd.f32 %v783, %v1112
        %v1185 = vadd.f32 %v784, %v1115
        %v1186 = vadd.f32 %v785, %v1120
        %v1187 = vadd.f32 %v786, %v1123
        %v1188 = vadd.f32 %v787, %v1128
        %v1189 = vadd.f32 %v788, %v1131
        %v1190 = vadd.f32 %v789, %v1136
        %v1191 = vadd.f32 %v790, %v1139
        %v1192 = vadd.f32 %v791, %v1144
        %v1193 = vadd.f32 %v792, %v1147
        %v1194 = vadd.f32 %v793, %v1152
        %v1195 = vadd.f32 %v794, %v1155
        %v1196 = vadd.f32 %v795, %v1160
        %v1197 = vadd.f32 %v796, %v1163
        %vm1198 = vcmask 261120
        %1199 = vst.msk [vmem:[#allocation2] sm:$0xff] %vm1198, %v1166
        %1200 = vst.msk [vmem:[#allocation2 + $0x8] sm:$0xff] %vm1198, %v1167
        %1201 = vst.msk [vmem:[#allocation2 + $0x10] sm:$0xff] %vm1198, %v1168
        %1202 = vst.msk [vmem:[#allocation2 + $0x18] sm:$0xff] %vm1198, %v1169
        %1203 = vst.msk [vmem:[#allocation2 + $0x20] sm:$0xff] %vm1198, %v1170
        %1204 = vst.msk [vmem:[#allocation2 + $0x28] sm:$0xff] %vm1198, %v1171
        %1205 = vst.msk [vmem:[#allocation2 + $0x30] sm:$0xff] %vm1198, %v1172
        %1206 = vst.msk [vmem:[#allocation2 + $0x38] sm:$0xff] %vm1198, %v1173
        %1207 = vst.msk [vmem:[#allocation2 + $0x40] sm:$0xff] %vm1198, %v1174
        %1208 = vst.msk [vmem:[#allocation2 + $0x48] sm:$0xff] %vm1198, %v1175
        %1209 = vst.msk [vmem:[#allocation2 + $0x50] sm:$0xff] %vm1198, %v1176
        %1210 = vst.msk [vmem:[#allocation2 + $0x58] sm:$0xff] %vm1198, %v1177
        %1211 = vst.msk [vmem:[#allocation2 + $0x60] sm:$0xff] %vm1198, %v1178
        %1212 = vst.msk [vmem:[#allocation2 + $0x68] sm:$0xff] %vm1198, %v1179
        %1213 = vst.msk [vmem:[#allocation2 + $0x70] sm:$0xff] %vm1198, %v1180
        %1214 = vst.msk [vmem:[#allocation2 + $0x78] sm:$0xff] %vm1198, %v1181
        %1215 = vst.msk [vmem:[#allocation2 + $0x80] sm:$0xff] %vm1198, %v1182
        %1216 = vst.msk [vmem:[#allocation2 + $0x88] sm:$0xff] %vm1198, %v1183
        %1217 = vst.msk [vmem:[#allocation2 + $0x90] sm:$0xff] %vm1198, %v1184
        %1218 = vst.msk [vmem:[#allocation2 + $0x98] sm:$0xff] %vm1198, %v1185
        %1219 = vst.msk [vmem:[#allocation2 + $0xa0] sm:$0xff] %vm1198, %v1186
        %1220 = vst.msk [vmem:[#allocation2 + $0xa8] sm:$0xff] %vm1198, %v1187
        %1221 = vst.msk [vmem:[#allocation2 + $0xb0] sm:$0xff] %vm1198, %v1188
        %1222 = vst.msk [vmem:[#allocation2 + $0xb8] sm:$0xff] %vm1198, %v1189
        %1223 = vst.msk [vmem:[#allocation2 + $0xc0] sm:$0xff] %vm1198, %v1190
        %1224 = vst.msk [vmem:[#allocation2 + $0xc8] sm:$0xff] %vm1198, %v1191
        %1225 = vst.msk [vmem:[#allocation2 + $0xd0] sm:$0xff] %vm1198, %v1192
        %1226 = vst.msk [vmem:[#allocation2 + $0xd8] sm:$0xff] %vm1198, %v1193
        %1227 = vst.msk [vmem:[#allocation2 + $0xe0] sm:$0xff] %vm1198, %v1194
        %1228 = vst.msk [vmem:[#allocation2 + $0xe8] sm:$0xff] %vm1198, %v1195
        %1229 = vst.msk [vmem:[#allocation2 + $0xf0] sm:$0xff] %vm1198, %v1196
        %1230 = vst.msk [vmem:[#allocation2 + $0xf8] sm:$0xff] %vm1198, %v1197
        %p1231 = scmp.eq.s32.totalorder %s19, 2
        // Predicated region
        $region75: #{gcn_encoder_forward.5} parent=65 // pred_check
          %p1232 = pneg %p1231
        $region76: #{gcn_encoder_forward.5} parent=65 // pred_check_branch
          %1234 = sbr.rel (%p1232) target = $region78
        $region77: #{gcn_encoder_forward.5} parent=65 // pred_region
          %v1235 = vld [vmem:[#allocation2] sm:$0xff]
          %v1236 = vld [vmem:[#allocation2 + $0x8] sm:$0xff]
          %v1237 = vld [vmem:[#allocation2 + $0x10] sm:$0xff]
          %v1238 = vld [vmem:[#allocation2 + $0x18] sm:$0xff]
          %v1239 = vld [vmem:[#allocation2 + $0x20] sm:$0xff]
          %v1240 = vld [vmem:[#allocation2 + $0x28] sm:$0xff]
          %v1241 = vld [vmem:[#allocation2 + $0x30] sm:$0xff]
          %v1242 = vld [vmem:[#allocation2 + $0x38] sm:$0xff]
          %v1243 = vld [vmem:[#allocation2 + $0x40] sm:$0xff]
          %v1244 = vld [vmem:[#allocation2 + $0x48] sm:$0xff]
          %v1245 = vld [vmem:[#allocation2 + $0x50] sm:$0xff]
          %v1246 = vld [vmem:[#allocation2 + $0x58] sm:$0xff]
          %v1247 = vld [vmem:[#allocation2 + $0x60] sm:$0xff]
          %v1248 = vld [vmem:[#allocation2 + $0x68] sm:$0xff]
          %v1249 = vld [vmem:[#allocation2 + $0x70] sm:$0xff]
          %v1250 = vld [vmem:[#allocation2 + $0x78] sm:$0xff]
          %v1251 = vld [vmem:[#allocation2 + $0x80] sm:$0xff]
          %v1252 = vld [vmem:[#allocation2 + $0x88] sm:$0xff]
          %v1253 = vld [vmem:[#allocation2 + $0x90] sm:$0xff]
          %v1254 = vld [vmem:[#allocation2 + $0x98] sm:$0xff]
          %v1255 = vld [vmem:[#allocation2 + $0xa0] sm:$0xff]
          %v1256 = vld [vmem:[#allocation2 + $0xa8] sm:$0xff]
          %v1257 = vld [vmem:[#allocation2 + $0xb0] sm:$0xff]
          %v1258 = vld [vmem:[#allocation2 + $0xb8] sm:$0xff]
          %v1259 = vld [vmem:[#allocation2 + $0xc0] sm:$0xff]
          %v1260 = vld [vmem:[#allocation2 + $0xc8] sm:$0xff]
          %v1261 = vld [vmem:[#allocation2 + $0xd0] sm:$0xff]
          %v1262 = vld [vmem:[#allocation2 + $0xd8] sm:$0xff]
          %v1263 = vld [vmem:[#allocation2 + $0xe0] sm:$0xff]
          %v1264 = vld [vmem:[#allocation2 + $0xe8] sm:$0xff]
          %v1265 = vld [vmem:[#allocation2 + $0xf0] sm:$0xff]
          %v1266 = vld [vmem:[#allocation2 + $0xf8] sm:$0xff]
          %v1267 = vmax.f32 %v1235, 0.0
          %v1268 = vmax.f32 %v1236, 0.0
          %v1269 = vmax.f32 %v1237, 0.0
          %v1270 = vmax.f32 %v1238, 0.0
          %v1271 = vmax.f32 %v1239, 0.0
          %v1272 = vmax.f32 %v1240, 0.0
          %v1273 = vmax.f32 %v1241, 0.0
          %v1274 = vmax.f32 %v1242, 0.0
          %v1275 = vmax.f32 %v1243, 0.0
          %v1276 = vmax.f32 %v1244, 0.0
          %v1277 = vmax.f32 %v1245, 0.0
          %v1278 = vmax.f32 %v1246, 0.0
          %v1279 = vmax.f32 %v1247, 0.0
          %v1280 = vmax.f32 %v1248, 0.0
          %v1281 = vmax.f32 %v1249, 0.0
          %v1282 = vmax.f32 %v1250, 0.0
          %v1283 = vmax.f32 %v1251, 0.0
          %v1284 = vmax.f32 %v1252, 0.0
          %v1285 = vmax.f32 %v1253, 0.0
          %v1286 = vmax.f32 %v1254, 0.0
          %v1287 = vmax.f32 %v1255, 0.0
          %v1288 = vmax.f32 %v1256, 0.0
          %v1289 = vmax.f32 %v1257, 0.0
          %v1290 = vmax.f32 %v1258, 0.0
          %v1291 = vmax.f32 %v1259, 0.0
          %v1292 = vmax.f32 %v1260, 0.0
          %v1293 = vmax.f32 %v1261, 0.0
          %v1294 = vmax.f32 %v1262, 0.0
          %v1295 = vmax.f32 %v1263, 0.0
          %v1296 = vmax.f32 %v1264, 0.0
          %v1297 = vmax.f32 %v1265, 0.0
          %v1298 = vmax.f32 %v1266, 0.0
          %v1299 = vpack.c.bf16 %v1268, %v1267
          %v1300 = vpack.c.bf16 %v1270, %v1269
          %v1301 = vpack.c.bf16 %v1272, %v1271
          %v1302 = vpack.c.bf16 %v1274, %v1273
          %v1303 = vpack.c.bf16 %v1276, %v1275
          %v1304 = vpack.c.bf16 %v1278, %v1277
          %v1305 = vpack.c.bf16 %v1280, %v1279
          %v1306 = vpack.c.bf16 %v1282, %v1281
          %v1307 = vpack.c.bf16 %v1284, %v1283
          %v1308 = vpack.c.bf16 %v1286, %v1285
          %v1309 = vpack.c.bf16 %v1288, %v1287
          %v1310 = vpack.c.bf16 %v1290, %v1289
          %v1311 = vpack.c.bf16 %v1292, %v1291
          %v1312 = vpack.c.bf16 %v1294, %v1293
          %v1313 = vpack.c.bf16 %v1296, %v1295
          %v1314 = vpack.c.bf16 %v1298, %v1297
          %v1331 = vunpack.c.l.b16 %v1299
          %v1332 = vunpack.c.h.b16 %v1299
          %v1333 = vunpack.c.l.b16 %v1300
          %v1334 = vunpack.c.h.b16 %v1300
          %v1335 = vunpack.c.l.b16 %v1301
          %v1336 = vunpack.c.h.b16 %v1301
          %v1337 = vunpack.c.l.b16 %v1302
          %v1338 = vunpack.c.h.b16 %v1302
          %v1339 = vunpack.c.l.b16 %v1303
          %v1340 = vunpack.c.h.b16 %v1303
          %v1341 = vunpack.c.l.b16 %v1304
          %v1342 = vunpack.c.h.b16 %v1304
          %v1343 = vunpack.c.l.b16 %v1305
          %v1344 = vunpack.c.h.b16 %v1305
          %v1345 = vunpack.c.l.b16 %v1306
          %v1346 = vunpack.c.h.b16 %v1306
          %v1347 = vunpack.c.l.b16 %v1307
          %v1348 = vunpack.c.h.b16 %v1307
          %v1349 = vunpack.c.l.b16 %v1308
          %v1350 = vunpack.c.h.b16 %v1308
          %v1351 = vunpack.c.l.b16 %v1309
          %v1352 = vunpack.c.h.b16 %v1309
          %v1353 = vunpack.c.l.b16 %v1310
          %v1354 = vunpack.c.h.b16 %v1310
          %v1355 = vunpack.c.l.b16 %v1311
          %v1356 = vunpack.c.h.b16 %v1311
          %v1357 = vunpack.c.l.b16 %v1312
          %v1358 = vunpack.c.h.b16 %v1312
          %v1359 = vunpack.c.l.b16 %v1313
          %v1360 = vunpack.c.h.b16 %v1313
          %v1361 = vunpack.c.l.b16 %v1314
          %v1362 = vunpack.c.h.b16 %v1314
          %v1363 = vpack.c.b16 %v1331, %v1331
          %v1364 = vpack.c.b16 %v1332, %v1332
          %v1365 = vpack.c.b16 %v1333, %v1333
          %v1366 = vpack.c.b16 %v1334, %v1334
          %v1367 = vpack.c.b16 %v1335, %v1335
          %v1368 = vpack.c.b16 %v1336, %v1336
          %v1369 = vpack.c.b16 %v1337, %v1337
          %v1370 = vpack.c.b16 %v1338, %v1338
          %v1371 = vpack.c.b16 %v1339, %v1339
          %v1372 = vpack.c.b16 %v1340, %v1340
          %v1373 = vpack.c.b16 %v1341, %v1341
          %v1374 = vpack.c.b16 %v1342, %v1342
          %v1375 = vpack.c.b16 %v1343, %v1343
          %v1376 = vpack.c.b16 %v1344, %v1344
          %v1377 = vpack.c.b16 %v1345, %v1345
          %v1378 = vpack.c.b16 %v1346, %v1346
          %v1379 = vpack.c.b16 %v1347, %v1347
          %v1380 = vpack.c.b16 %v1348, %v1348
          %v1381 = vpack.c.b16 %v1349, %v1349
          %v1382 = vpack.c.b16 %v1350, %v1350
          %v1383 = vpack.c.b16 %v1351, %v1351
          %v1384 = vpack.c.b16 %v1352, %v1352
          %v1385 = vpack.c.b16 %v1353, %v1353
          %v1386 = vpack.c.b16 %v1354, %v1354
          %v1387 = vpack.c.b16 %v1355, %v1355
          %v1388 = vpack.c.b16 %v1356, %v1356
          %v1389 = vpack.c.b16 %v1357, %v1357
          %v1390 = vpack.c.b16 %v1358, %v1358
          %v1391 = vpack.c.b16 %v1359, %v1359
          %v1392 = vpack.c.b16 %v1360, %v1360
          %v1393 = vpack.c.b16 %v1361, %v1361
          %v1394 = vpack.c.b16 %v1362, %v1362
          %vm1427 = vcmask 257024
          %1428 = vst.msk [vmem:[%s371] sm:$0xf] %vm1427, %v1363
          %1429 = vst.msk [vmem:[%s371 + $0x4] sm:$0xf] %vm1427, %v1364
          %1430 = vst.msk [vmem:[%s371 + $0x8] sm:$0xf] %vm1427, %v1365
          %1431 = vst.msk [vmem:[%s371 + $0xc] sm:$0xf] %vm1427, %v1366
          %1432 = vst.msk [vmem:[%s371 + $0x10] sm:$0xf] %vm1427, %v1367
          %1433 = vst.msk [vmem:[%s371 + $0x14] sm:$0xf] %vm1427, %v1368
          %1434 = vst.msk [vmem:[%s371 + $0x18] sm:$0xf] %vm1427, %v1369
          %1435 = vst.msk [vmem:[%s371 + $0x1c] sm:$0xf] %vm1427, %v1370
          %1436 = vst.msk [vmem:[%s371 + $0x20] sm:$0xf] %vm1427, %v1371
          %1437 = vst.msk [vmem:[%s371 + $0x24] sm:$0xf] %vm1427, %v1372
          %1438 = vst.msk [vmem:[%s371 + $0x28] sm:$0xf] %vm1427, %v1373
          %1439 = vst.msk [vmem:[%s371 + $0x2c] sm:$0xf] %vm1427, %v1374
          %1440 = vst.msk [vmem:[%s371 + $0x30] sm:$0xf] %vm1427, %v1375
          %1441 = vst.msk [vmem:[%s371 + $0x34] sm:$0xf] %vm1427, %v1376
          %1442 = vst.msk [vmem:[%s371 + $0x38] sm:$0xf] %vm1427, %v1377
          %1443 = vst.msk [vmem:[%s371 + $0x3c] sm:$0xf] %vm1427, %v1378
          %1444 = vst.msk [vmem:[%s371 + $0x40] sm:$0xf] %vm1427, %v1379
          %1445 = vst.msk [vmem:[%s371 + $0x44] sm:$0xf] %vm1427, %v1380
          %1446 = vst.msk [vmem:[%s371 + $0x48] sm:$0xf] %vm1427, %v1381
          %1447 = vst.msk [vmem:[%s371 + $0x4c] sm:$0xf] %vm1427, %v1382
          %1448 = vst.msk [vmem:[%s371 + $0x50] sm:$0xf] %vm1427, %v1383
          %1449 = vst.msk [vmem:[%s371 + $0x54] sm:$0xf] %vm1427, %v1384
          %1450 = vst.msk [vmem:[%s371 + $0x58] sm:$0xf] %vm1427, %v1385
          %1451 = vst.msk [vmem:[%s371 + $0x5c] sm:$0xf] %vm1427, %v1386
          %1452 = vst.msk [vmem:[%s371 + $0x60] sm:$0xf] %vm1427, %v1387
          %1453 = vst.msk [vmem:[%s371 + $0x64] sm:$0xf] %vm1427, %v1388
          %1454 = vst.msk [vmem:[%s371 + $0x68] sm:$0xf] %vm1427, %v1389
          %1455 = vst.msk [vmem:[%s371 + $0x6c] sm:$0xf] %vm1427, %v1390
          %1456 = vst.msk [vmem:[%s371 + $0x70] sm:$0xf] %vm1427, %v1391
          %1457 = vst.msk [vmem:[%s371 + $0x74] sm:$0xf] %vm1427, %v1392
          %1458 = vst.msk [vmem:[%s371 + $0x78] sm:$0xf] %vm1427, %v1393
          %1459 = vst.msk [vmem:[%s371 + $0x7c] sm:$0xf] %vm1427, %v1394
        $region78: #{gcn_encoder_forward.5} parent=65 // pred_fallthru
          _
        %s1460 = smul.u32 32, %s18
        %p1461 = scmp.lt.s32.totalorder %s1460, 95
        %s1462 = scalar_select %p1461, %s1460, 95
        %s1463 = smul.addr %s1462, 4
        %s1464 = scalar_lea.vmem %s3, %s1463
        // Predicated region
        $region79: #{gcn_encoder_forward.5} parent=65 // pred_check
          %p1465 = pneg %p119
        $region80: #{gcn_encoder_forward.5} parent=65 // pred_check_branch
          %1467 = sbr.rel (%p1465) target = $region82
        $region81: #{gcn_encoder_forward.5} parent=65 // pred_region
          %s1468 = smul.u32 32, %s18
        $region82: #{gcn_encoder_forward.5} parent=65 // pred_fallthru
          _
      $region66: #{gcn_encoder_forward.5} parent=5 // pred_fallthru
        _
      %p1469 = scmp.le.s32.totalorder 2, %s9
      // Predicated region
      $region83: #{gcn_encoder_forward.5} parent=5 // pred_check
        %p1470 = pneg %p1469
      $region84: #{gcn_encoder_forward.5} parent=5 // pred_check_branch
        %1472 = sbr.rel (%p1470) target = $region86
      $region85: #{gcn_encoder_forward.5} parent=5 // pred_region
        %s1473 = ssub.s32 %s9, 2
        // Predicated region
        $region87: #{gcn_encoder_forward.5} parent=85 // pred_check
          %p1474 = pneg %p125
        $region88: #{gcn_encoder_forward.5} parent=85 // pred_check_branch
          %1476 = sbr.rel (%p1474) target = $region90
        $region89: #{gcn_encoder_forward.5} parent=85 // pred_region
          %s1477 = smul.u32 32, %s20
          %p1478 = scmp.lt.s32.totalorder %s1477, 95
          %s1479 = scalar_select %p1478, %s1477, 95
          %s1480 = smul.addr %s1479, 4
          %s1481 = scalar_lea.vmem %s3, %s1480
        $region90: #{gcn_encoder_forward.5} parent=85 // pred_fallthru
          _
      $region86: #{gcn_encoder_forward.5} parent=5 // pred_fallthru
        _
    $region6: #{gcn_encoder_forward.5} parent=1 // loop_footer
      %s13 = sadd.s32 1, %s9
    $region7: #{gcn_encoder_forward.5} parent=1 // loop_footer_branch
      %8 = sbr.rel target = $region3
    $region8: #{gcn_encoder_forward.5} parent=1 // loop_exit
      _

// kernel: gcn_encoder_forward.7
$region0: #{gcn_encoder_forward.7}
  #allocation0 [shape = 'u32[]', space=smem, size = 0x4, offset = 0x4, fixed_abs, tag = 'smem constant byte address 0x4 - core index']
  #allocation1 [shape = 'u32[144,128]{1,0:T(1,128)}', space=vmem, size = 0x12000, scoped, tag = 'internal scratch']
  %s0 = inlined_call_operand.vmem [shape: bf16[768,16], index: 0, kind: input, shape index: {}, may-alias: {0,1}]
  %s1 = inlined_call_operand.vmem [shape: bf16[768,16], index: 1, kind: input, shape index: {}, may-alias: {0,1}]
  %s2 = inlined_call_operand.vmem [shape: f32[768,768], index: 2, kind: output, shape index: {}]
  %s3 = sld [smem:[#allocation0]]
  $region60: #{gcn_encoder_forward.7} parent=0
    _
  %s5 = ssub.s32 1, %s3
  %s6 = scalar_select 0, %s5, %s3
  $region1: #{gcn_encoder_forward.7} parent=0
    #allocation2 [shape = 'u8[524288]{0}', space=vmem, size = 0x80000, scoped, tag = 'output window, operand 0']
    loop: start=0, step=1, limit=11
    $region2: #{gcn_encoder_forward.7} parent=1 // loop_pre_header
      _
    $region3: #{gcn_encoder_forward.7} parent=1 // loop_header
      %s8 = sphi 0, %s12
      %p9 = scmp.ge.s32.totalorder %s8, 11
      %s15 = sphi 0, %s27
      %s16 = sphi 0, %s23
      %s17 = sphi 0, %s15
      %s18 = sphi 0, %s16
      %s19 = sphi 0, %s17
      %s20 = sphi 0, %s18
      %s30 = sphi 0, %s32
      %s33 = sphi 0, %s30
      %s34 = sphi 0, %s33
      %s50 = sphi 0, %s34
      %s56 = sphi 0, %s58
      %s59 = sphi 0, %s56
      %s60 = sphi 0, %s59
      %s76 = sphi 0, %s60
      %s84 = sphi 0, %s86
      %s87 = sphi 0, %s84
      %s88 = sphi 0, %s87
      %s104 = sphi 0, %s88
    $region4: #{gcn_encoder_forward.7} parent=1 // loop_header_branch
      %11 = sbr.rel (%p9) target = $region8
    $region5: #{gcn_encoder_forward.7} parent=1 // loop_body
      %s13 = ssub.s32 %s8, 1
      %s14 = ssub.s32 %s8, 2
      %s21 = sadd.s32 1, %s16
      %p22 = scmp.ge.s32.totalorder %s21, 3
      %s23 = scalar_select %p22, 0, %s21
      %s24 = sadd.s32 1, %s15
      %s25 = scalar_select %p22, %s24, %s15
      %p26 = scmp.ge.s32.totalorder %s25, 3
      %s27 = scalar_select %p26, 0, %s25
      %s28 = ssub.s32 %s15, %s27
      %p29 = scmp.eq.s32.totalorder %s28, 0
      %s31 = sadd.s32 %s30, 1
      %s32 = scalar_select %p29, %s30, %s31
      %p35 = pneg %p29
      %p36 = scmp.eq.s32.totalorder %s8, 8
      %p37 = por %p35, %p36
      %p38 = scmp.ne.s32.totalorder %s30, %s33
      %p39 = scmp.eq.s32.totalorder %s8, 0
      %p40 = por %p38, %p39
      %p41 = scmp.ne.s32.totalorder %s30, %s33
      %p42 = scmp.eq.s32.totalorder %s13, 8
      %p43 = por %p41, %p42
      %p44 = scmp.ne.s32.totalorder %s33, %s34
      %p45 = scmp.eq.s32.totalorder %s13, 0
      %p46 = por %p44, %p45
      %p47 = scmp.ne.s32.totalorder %s33, %s34
      %p48 = scmp.eq.s32.totalorder %s14, 8
      %p49 = por %p47, %p48
      %p51 = scmp.ne.s32.totalorder %s34, %s50
      %p52 = scmp.eq.s32.totalorder %s14, 0
      %p53 = por %p51, %p52
      %s54 = ssub.s32 %s16, %s23
      %p55 = scmp.eq.s32.totalorder %s54, 0
      %s57 = sadd.s32 %s56, 1
      %s58 = scalar_select %p55, %s56, %s57
      %p61 = pneg %p55
      %p62 = scmp.eq.s32.totalorder %s8, 8
      %p63 = por %p61, %p62
      %p64 = scmp.ne.s32.totalorder %s56, %s59
      %p65 = scmp.eq.s32.totalorder %s8, 0
      %p66 = por %p64, %p65
      %p67 = scmp.ne.s32.totalorder %s56, %s59
      %p68 = scmp.eq.s32.totalorder %s13, 8
      %p69 = por %p67, %p68
      %p70 = scmp.ne.s32.totalorder %s59, %s60
      %p71 = scmp.eq.s32.totalorder %s13, 0
      %p72 = por %p70, %p71
      %p73 = scmp.ne.s32.totalorder %s59, %s60
      %p74 = scmp.eq.s32.totalorder %s14, 8
      %p75 = por %p73, %p74
      %p77 = scmp.ne.s32.totalorder %s60, %s76
      %p78 = scmp.eq.s32.totalorder %s14, 0
      %p79 = por %p77, %p78
      %s80 = ssub.s32 %s15, %s27
      %s81 = ssub.s32 %s16, %s23
      %s82 = sor.u32 %s80, %s81
      %p83 = scmp.eq.s32.totalorder %s82, 0
      %s85 = sadd.s32 %s84, 1
      %s86 = scalar_select %p83, %s84, %s85
      %p89 = pneg %p83
      %p90 = scmp.eq.s32.totalorder %s8, 8
      %p91 = por %p89, %p90
      %p92 = scmp.ne.s32.totalorder %s84, %s87
      %p93 = scmp.eq.s32.totalorder %s8, 0
      %p94 = por %p92, %p93
      %p95 = scmp.ne.s32.totalorder %s84, %s87
      %p96 = scmp.eq.s32.totalorder %s13, 8
      %p97 = por %p95, %p96
      %p98 = scmp.ne.s32.totalorder %s87, %s88
      %p99 = scmp.eq.s32.totalorder %s13, 0
      %p100 = por %p98, %p99
      %p101 = scmp.ne.s32.totalorder %s87, %s88
      %p102 = scmp.eq.s32.totalorder %s14, 8
      %p103 = por %p101, %p102
      %p105 = scmp.ne.s32.totalorder %s88, %s104
      %p106 = scmp.eq.s32.totalorder %s14, 0
      %p107 = por %p105, %p106
      %p108 = scmp.le.s32.totalorder 1, %s8
      %p109 = scmp.lt.s32.totalorder %s8, 10
      %p110 = pnand %p108, %p109
      %p111 = pneg %p110
      // Predicated region
      $region9: #{gcn_encoder_forward.7} parent=5 // pred_check
        _
      $region10: #{gcn_encoder_forward.7} parent=5 // pred_check_branch
        %113 = sbr.rel (%p110) target = $region12
      $region11: #{gcn_encoder_forward.7} parent=5 // pred_region
        %s114 = ssub.s32 %s8, 1
      $region12: #{gcn_encoder_forward.7} parent=5 // pred_fallthru
        _
      %p115 = scmp.lt.s32.totalorder %s8, 9
      // Predicated region
      $region13: #{gcn_encoder_forward.7} parent=5 // pred_check
        %p116 = pneg %p115
      $region14: #{gcn_encoder_forward.7} parent=5 // pred_check_branch
        %118 = sbr.rel (%p116) target = $region16
      $region15: #{gcn_encoder_forward.7} parent=5 // pred_region
        // Predicated region
        $region17: #{gcn_encoder_forward.7} parent=15 // pred_check
          %p119 = pneg %p40
        $region18: #{gcn_encoder_forward.7} parent=15 // pred_check_branch
          %121 = sbr.rel (%p119) target = $region20
        $region19: #{gcn_encoder_forward.7} parent=15 // pred_region
          %s122 = smul.u32 32, %s15
          %p123 = scmp.lt.s32.totalorder %s122, 95
          %s124 = scalar_select %p123, %s122, 95
          %s125 = smul.addr %s124, 4
          %s126 = scalar_lea.vmem %s0, %s125
          %s127 = smul.u32 32, %s15
        $region20: #{gcn_encoder_forward.7} parent=15 // pred_fallthru
          _
        // Predicated region
        $region21: #{gcn_encoder_forward.7} parent=15 // pred_check
          %p128 = pneg %p66
        $region22: #{gcn_encoder_forward.7} parent=15 // pred_check_branch
          %130 = sbr.rel (%p128) target = $region24
        $region23: #{gcn_encoder_forward.7} parent=15 // pred_region
          %s131 = smul.u32 32, %s16
          %p132 = scmp.lt.s32.totalorder %s131, 95
          %s133 = scalar_select %p132, %s131, 95
          %s134 = smul.addr %s133, 4
          %s135 = scalar_lea.vmem %s1, %s134
          %s136 = smul.u32 32, %s16
        $region24: #{gcn_encoder_forward.7} parent=15 // pred_fallthru
          _
      $region16: #{gcn_encoder_forward.7} parent=5 // pred_fallthru
        _
      %p137 = scmp.le.s32.totalorder 1, %s8
      %p138 = scmp.lt.s32.totalorder %s8, 10
      %p139 = pnand %p137, %p138
      %p140 = pneg %p139
      // Predicated region
      $region25: #{gcn_encoder_forward.7} parent=5 // pred_check
        _
      $region26: #{gcn_encoder_forward.7} parent=5 // pred_check_branch
        %142 = sbr.rel (%p139) target = $region28
      $region27: #{gcn_encoder_forward.7} parent=5 // pred_region
        %s143 = ssub.s32 %s8, 1
        %s144 = smul.u32 32, %s17
        %p145 = scmp.lt.s32.totalorder %s144, 95
        %s146 = scalar_select %p145, %s144, 95
        %s147 = smul.addr %s146, 4
        %s148 = scalar_lea.vmem %s0, %s147
        %p149 = pneg %p46
        %p150 = pneg %p43
        %s151 = smul.u32 32, %s18
        %p152 = scmp.lt.s32.totalorder %s151, 95
        %s153 = scalar_select %p152, %s151, 95
        %s154 = smul.addr %s153, 4
        %s155 = scalar_lea.vmem %s1, %s154
        %p156 = pneg %p72
        %p157 = pneg %p69
        %p158 = pneg %p100
        %p159 = pneg %p97
        %s160 = sand.u32 %s87, 1
        %s161 = sand.u32 %s87, 1
        %s162 = smul.addr %s161, 512
        %s163 = scalar_lea.vmem [#allocation2], %s162
        %s164 = smul.u32 32, %s17
        %p165 = scmp.lt.s32.totalorder %s164, 95
        %s166 = scalar_select %p165, %s164, 95
        %s167 = smul.addr %s166, 4
        %s168 = scalar_lea.vmem %s0, %s167
        %s169 = smul.u32 32, %s17
        %s170 = smul.u32 32, %s18
        %p171 = scmp.lt.s32.totalorder %s170, 95
        %s172 = scalar_select %p171, %s170, 95
        %s173 = smul.addr %s172, 4
        %s174 = scalar_lea.vmem %s1, %s173
        %s175 = smul.u32 32, %s18
        %s176 = smul.u32 32, %s17
        %s177 = smul.u32 2, %s18
        %v179 = vld [vmem:[%s168] sm:$0xf]
        %v180 = vld [vmem:[%s168 + $0x4] sm:$0xf]
        %v181 = vld [vmem:[%s168 + $0x8] sm:$0xf]
        %v182 = vld [vmem:[%s168 + $0xc] sm:$0xf]
        %v183 = vld [vmem:[%s168 + $0x10] sm:$0xf]
        %v184 = vld [vmem:[%s168 + $0x14] sm:$0xf]
        %v185 = vld [vmem:[%s168 + $0x18] sm:$0xf]
        %v186 = vld [vmem:[%s168 + $0x1c] sm:$0xf]
        %v187 = vld [vmem:[%s168 + $0x20] sm:$0xf]
        %v188 = vld [vmem:[%s168 + $0x24] sm:$0xf]
        %v189 = vld [vmem:[%s168 + $0x28] sm:$0xf]
        %v190 = vld [vmem:[%s168 + $0x2c] sm:$0xf]
        %v191 = vld [vmem:[%s168 + $0x30] sm:$0xf]
        %v192 = vld [vmem:[%s168 + $0x34] sm:$0xf]
        %v193 = vld [vmem:[%s168 + $0x38] sm:$0xf]
        %v194 = vld [vmem:[%s168 + $0x3c] sm:$0xf]
        %v195 = vld [vmem:[%s168 + $0x40] sm:$0xf]
        %v196 = vld [vmem:[%s168 + $0x44] sm:$0xf]
        %v197 = vld [vmem:[%s168 + $0x48] sm:$0xf]
        %v198 = vld [vmem:[%s168 + $0x4c] sm:$0xf]
        %v199 = vld [vmem:[%s168 + $0x50] sm:$0xf]
        %v200 = vld [vmem:[%s168 + $0x54] sm:$0xf]
        %v201 = vld [vmem:[%s168 + $0x58] sm:$0xf]
        %v202 = vld [vmem:[%s168 + $0x5c] sm:$0xf]
        %v203 = vld [vmem:[%s168 + $0x60] sm:$0xf]
        %v204 = vld [vmem:[%s168 + $0x64] sm:$0xf]
        %v205 = vld [vmem:[%s168 + $0x68] sm:$0xf]
        %v206 = vld [vmem:[%s168 + $0x6c] sm:$0xf]
        %v207 = vld [vmem:[%s168 + $0x70] sm:$0xf]
        %v208 = vld [vmem:[%s168 + $0x74] sm:$0xf]
        %v209 = vld [vmem:[%s168 + $0x78] sm:$0xf]
        %v210 = vld [vmem:[%s168 + $0x7c] sm:$0xf]
        %v211 = vld [vmem:[%s174] sm:$0xf]
        %v212 = vld [vmem:[%s174 + $0x4] sm:$0xf]
        %v213 = vld [vmem:[%s174 + $0x8] sm:$0xf]
        %v214 = vld [vmem:[%s174 + $0xc] sm:$0xf]
        %v215 = vld [vmem:[%s174 + $0x10] sm:$0xf]
        %v216 = vld [vmem:[%s174 + $0x14] sm:$0xf]
        %v217 = vld [vmem:[%s174 + $0x18] sm:$0xf]
        %v218 = vld [vmem:[%s174 + $0x1c] sm:$0xf]
        %v219 = vld [vmem:[%s174 + $0x20] sm:$0xf]
        %v220 = vld [vmem:[%s174 + $0x24] sm:$0xf]
        %v221 = vld [vmem:[%s174 + $0x28] sm:$0xf]
        %v222 = vld [vmem:[%s174 + $0x2c] sm:$0xf]
        %v223 = vld [vmem:[%s174 + $0x30] sm:$0xf]
        %v224 = vld [vmem:[%s174 + $0x34] sm:$0xf]
        %v225 = vld [vmem:[%s174 + $0x38] sm:$0xf]
        %v226 = vld [vmem:[%s174 + $0x3c] sm:$0xf]
        %v227 = vld [vmem:[%s174 + $0x40] sm:$0xf]
        %v228 = vld [vmem:[%s174 + $0x44] sm:$0xf]
        %v229 = vld [vmem:[%s174 + $0x48] sm:$0xf]
        %v230 = vld [vmem:[%s174 + $0x4c] sm:$0xf]
        %v231 = vld [vmem:[%s174 + $0x50] sm:$0xf]
        %v232 = vld [vmem:[%s174 + $0x54] sm:$0xf]
        %v233 = vld [vmem:[%s174 + $0x58] sm:$0xf]
        %v234 = vld [vmem:[%s174 + $0x5c] sm:$0xf]
        %v235 = vld [vmem:[%s174 + $0x60] sm:$0xf]
        %v236 = vld [vmem:[%s174 + $0x64] sm:$0xf]
        %v237 = vld [vmem:[%s174 + $0x68] sm:$0xf]
        %v238 = vld [vmem:[%s174 + $0x6c] sm:$0xf]
        %v239 = vld [vmem:[%s174 + $0x70] sm:$0xf]
        %v240 = vld [vmem:[%s174 + $0x74] sm:$0xf]
        %v241 = vld [vmem:[%s174 + $0x78] sm:$0xf]
        %v242 = vld [vmem:[%s174 + $0x7c] sm:$0xf]
        %v275 = vunpack.c.l.b16 %v179
        %v276 = vunpack.c.l.b16 %v180
        %v277 = vunpack.c.l.b16 %v181
        %v278 = vunpack.c.l.b16 %v182
        %v279 = vunpack.c.l.b16 %v183
        %v280 = vunpack.c.l.b16 %v184
        %v281 = vunpack.c.l.b16 %v185
        %v282 = vunpack.c.l.b16 %v186
        %v283 = vunpack.c.l.b16 %v187
        %v284 = vunpack.c.l.b16 %v188
        %v285 = vunpack.c.l.b16 %v189
        %v286 = vunpack.c.l.b16 %v190
        %v287 = vunpack.c.l.b16 %v191
        %v288 = vunpack.c.l.b16 %v192
        %v289 = vunpack.c.l.b16 %v193
        %v290 = vunpack.c.l.b16 %v194
        %v291 = vunpack.c.l.b16 %v195
        %v292 = vunpack.c.l.b16 %v196
        %v293 = vunpack.c.l.b16 %v197
        %v294 = vunpack.c.l.b16 %v198
        %v295 = vunpack.c.l.b16 %v199
        %v296 = vunpack.c.l.b16 %v200
        %v297 = vunpack.c.l.b16 %v201
        %v298 = vunpack.c.l.b16 %v202
        %v299 = vunpack.c.l.b16 %v203
        %v300 = vunpack.c.l.b16 %v204
        %v301 = vunpack.c.l.b16 %v205
        %v302 = vunpack.c.l.b16 %v206
        %v303 = vunpack.c.l.b16 %v207
        %v304 = vunpack.c.l.b16 %v208
        %v305 = vunpack.c.l.b16 %v209
        %v306 = vunpack.c.l.b16 %v210
        %v307 = vpack.c.b16 %v276, %v275
        %v308 = vpack.c.b16 %v278, %v277
        %v309 = vpack.c.b16 %v280, %v279
        %v310 = vpack.c.b16 %v282, %v281
        %v311 = vpack.c.b16 %v284, %v283
        %v312 = vpack.c.b16 %v286, %v285
        %v313 = vpack.c.b16 %v288, %v287
        %v314 = vpack.c.b16 %v290, %v289
        %v315 = vpack.c.b16 %v292, %v291
        %v316 = vpack.c.b16 %v294, %v293
        %v317 = vpack.c.b16 %v296, %v295
        %v318 = vpack.c.b16 %v298, %v297
        %v319 = vpack.c.b16 %v300, %v299
        %v320 = vpack.c.b16 %v302, %v301
        %v321 = vpack.c.b16 %v304, %v303
        %v322 = vpack.c.b16 %v306, %v305
        %v355 = vunpack.c.l.b16 %v211
        %v356 = vunpack.c.l.b16 %v212
        %v357 = vunpack.c.l.b16 %v213
        %v358 = vunpack.c.l.b16 %v214
        %v359 = vunpack.c.l.b16 %v215
        %v360 = vunpack.c.l.b16 %v216
        %v361 = vunpack.c.l.b16 %v217
        %v362 = vunpack.c.l.b16 %v218
        %v363 = vunpack.c.l.b16 %v219
        %v364 = vunpack.c.l.b16 %v220
        %v365 = vunpack.c.l.b16 %v221
        %v366 = vunpack.c.l.b16 %v222
        %v367 = vunpack.c.l.b16 %v223
        %v368 = vunpack.c.l.b16 %v224
        %v369 = vunpack.c.l.b16 %v225
        %v370 = vunpack.c.l.b16 %v226
        %v371 = vunpack.c.l.b16 %v227
        %v372 = vunpack.c.l.b16 %v228
        %v373 = vunpack.c.l.b16 %v229
        %v374 = vunpack.c.l.b16 %v230
        %v375 = vunpack.c.l.b16 %v231
        %v376 = vunpack.c.l.b16 %v232
        %v377 = vunpack.c.l.b16 %v233
        %v378 = vunpack.c.l.b16 %v234
        %v379 = vunpack.c.l.b16 %v235
        %v380 = vunpack.c.l.b16 %v236
        %v381 = vunpack.c.l.b16 %v237
        %v382 = vunpack.c.l.b16 %v238
        %v383 = vunpack.c.l.b16 %v239
        %v384 = vunpack.c.l.b16 %v240
        %v385 = vunpack.c.l.b16 %v241
        %v386 = vunpack.c.l.b16 %v242
        %v387 = vpack.c.b16 %v356, %v355
        %v388 = vpack.c.b16 %v358, %v357
        %v389 = vpack.c.b16 %v360, %v359
        %v390 = vpack.c.b16 %v362, %v361
        %v391 = vpack.c.b16 %v364, %v363
        %v392 = vpack.c.b16 %v366, %v365
        %v393 = vpack.c.b16 %v368, %v367
        %v394 = vpack.c.b16 %v370, %v369
        %v395 = vpack.c.b16 %v372, %v371
        %v396 = vpack.c.b16 %v374, %v373
        %v397 = vpack.c.b16 %v376, %v375
        %v398 = vpack.c.b16 %v378, %v377
        %v399 = vpack.c.b16 %v380, %v379
        %v400 = vpack.c.b16 %v382, %v381
        %v401 = vpack.c.b16 %v384, %v383
        %v402 = vpack.c.b16 %v386, %v385
        %vm403 = vcmask 130048
        %v405 = vsel %vm403, %v307, 0
        %v408 = vsel %vm403, %v308, 0
        %v411 = vsel %vm403, %v309, 0
        %v414 = vsel %vm403, %v310, 0
        %v417 = vsel %vm403, %v311, 0
        %v420 = vsel %vm403, %v312, 0
        %v423 = vsel %vm403, %v313, 0
        %v426 = vsel %vm403, %v314, 0
        %v429 = vsel %vm403, %v315, 0
        %v432 = vsel %vm403, %v316, 0
        %v435 = vsel %vm403, %v317, 0
        %v438 = vsel %vm403, %v318, 0
        %v441 = vsel %vm403, %v319, 0
        %v444 = vsel %vm403, %v320, 0
        %v447 = vsel %vm403, %v321, 0
        %v450 = vsel %vm403, %v322, 0
        %v453 = vsel %vm403, %v387, 0
        %v456 = vsel %vm403, %v388, 0
        %v459 = vsel %vm403, %v389, 0
        %v462 = vsel %vm403, %v390, 0
        %v465 = vsel %vm403, %v391, 0
        %v468 = vsel %vm403, %v392, 0
        %v471 = vsel %vm403, %v393, 0
        %v474 = vsel %vm403, %v394, 0
        %v477 = vsel %vm403, %v395, 0
        %v480 = vsel %vm403, %v396, 0
        %v483 = vsel %vm403, %v397, 0
        %v486 = vsel %vm403, %v398, 0
        %v489 = vsel %vm403, %v399, 0
        %v492 = vsel %vm403, %v400, 0
        %v495 = vsel %vm403, %v401, 0
        %v498 = vsel %vm403, %v402, 0
        %500 = vmatprep.subr.bf16.mxu0 0
        %501 = vmatpush1.bf16.xpose.msra.mxu0 %v474
        %502 = vmatprep.subr.bf16.mxu0 0
        %503 = vmatpush1.bf16.xpose.msra.mxu0 %v471
        %504 = vmatprep.subr.bf16.mxu0 0
        %505 = vmatpush1.bf16.xpose.msra.mxu0 %v468
        %506 = vmatprep.subr.bf16.mxu0 0
        %507 = vmatpush1.bf16.xpose.msra.mxu0 %v465
        %508 = vmatprep.subr.bf16.mxu0 0
        %509 = vmatpush1.bf16.xpose.msra.mxu0 %v462
        %510 = vmatprep.subr.bf16.mxu0 0
        %511 = vmatpush1.bf16.xpose.msra.mxu0 %v459
        %512 = vmatprep.subr.bf16.mxu0 0
        %513 = vmatpush1.bf16.xpose.msra.mxu0 %v456
        %514 = vmatprep.subr.bf16.mxu0 0
        %515 = vmatpush1.bf16.xpose.msra.mxu0 %v453
        %516 = vmatprep.subr.bf16.mxu0 0
        %517 = vmatpush2.bf16.xpose.msra.mxu0 %v498
        %518 = vmatprep.subr.bf16.mxu0 0
        %519 = vmatpush2.bf16.xpose.msra.mxu0 %v495
        %520 = vmatprep.subr.bf16.mxu0 0
        %521 = vmatpush2.bf16.xpose.msra.mxu0 %v492
        %522 = vmatprep.subr.bf16.mxu0 0
        %523 = vmatpush2.bf16.xpose.msra.mxu0 %v489
        %524 = vmatprep.subr.bf16.mxu0 0
        %525 = vmatpush2.bf16.xpose.msra.mxu0 %v486
        %526 = vmatprep.subr.bf16.mxu0 0
        %527 = vmatpush2.bf16.xpose.msra.mxu0 %v483
        %528 = vmatprep.subr.bf16.mxu0 0
        %529 = vmatpush2.bf16.xpose.msra.mxu0 %v480
        %530 = vmatprep.subr.bf16.mxu0 0
        %531 = vmatpush2.bf16.xpose.msra.mxu0 %v477
        %532 = vmatprep.mubr.bf16.mxu0 0
        %533 = vmatmul.mubr.bf16.gmra.mxu0 %v405
        %v534 = vpop.f32.mrf.mxu0
        %v535 = vadd.f32 0.0, %v534
        %v536 = vpop.f32.mrf.mxu0
        %v537 = vadd.f32 0.0, %v536
        %v538 = vpop.f32.mrf.mxu0
        %v539 = vadd.f32 0.0, %v538
        %v540 = vpop.f32.mrf.mxu0
        %v541 = vadd.f32 0.0, %v540
        %542 = vmatprep.mubr.bf16.mxu0 0
        %543 = vmatmul.mubr.bf16.gmra.mxu0 %v408
        %v544 = vpop.f32.mrf.mxu0
        %v545 = vadd.f32 0.0, %v544
        %v546 = vpop.f32.mrf.mxu0
        %v547 = vadd.f32 0.0, %v546
        %v548 = vpop.f32.mrf.mxu0
        %v549 = vadd.f32 0.0, %v548
        %v550 = vpop.f32.mrf.mxu0
        %v551 = vadd.f32 0.0, %v550
        %552 = vmatprep.mubr.bf16.mxu0 0
        %553 = vmatmul.mubr.bf16.gmra.mxu0 %v411
        %v554 = vpop.f32.mrf.mxu0
        %v555 = vadd.f32 0.0, %v554
        %v556 = vpop.f32.mrf.mxu0
        %v557 = vadd.f32 0.0, %v556
        %v558 = vpop.f32.mrf.mxu0
        %v559 = vadd.f32 0.0, %v558
        %v560 = vpop.f32.mrf.mxu0
        %v561 = vadd.f32 0.0, %v560
        %562 = vmatprep.mubr.bf16.mxu0 0
        %563 = vmatmul.mubr.bf16.gmra.mxu0 %v414
        %v564 = vpop.f32.mrf.mxu0
        %v565 = vadd.f32 0.0, %v564
        %v566 = vpop.f32.mrf.mxu0
        %v567 = vadd.f32 0.0, %v566
        %v568 = vpop.f32.mrf.mxu0
        %v569 = vadd.f32 0.0, %v568
        %v570 = vpop.f32.mrf.mxu0
        %v571 = vadd.f32 0.0, %v570
        %572 = vmatprep.mubr.bf16.mxu0 0
        %573 = vmatmul.mubr.bf16.gmra.mxu0 %v417
        %v574 = vpop.f32.mrf.mxu0
        %v575 = vadd.f32 0.0, %v574
        %v576 = vpop.f32.mrf.mxu0
        %v577 = vadd.f32 0.0, %v576
        %v578 = vpop.f32.mrf.mxu0
        %v579 = vadd.f32 0.0, %v578
        %v580 = vpop.f32.mrf.mxu0
        %v581 = vadd.f32 0.0, %v580
        %582 = vmatprep.mubr.bf16.mxu0 0
        %583 = vmatmul.mubr.bf16.gmra.mxu0 %v420
        %v584 = vpop.f32.mrf.mxu0
        %v585 = vadd.f32 0.0, %v584
        %v586 = vpop.f32.mrf.mxu0
        %v587 = vadd.f32 0.0, %v586
        %v588 = vpop.f32.mrf.mxu0
        %v589 = vadd.f32 0.0, %v588
        %v590 = vpop.f32.mrf.mxu0
        %v591 = vadd.f32 0.0, %v590
        %592 = vmatprep.mubr.bf16.mxu0 0
        %593 = vmatmul.mubr.bf16.gmra.mxu0 %v423
        %v594 = vpop.f32.mrf.mxu0
        %v595 = vadd.f32 0.0, %v594
        %v596 = vpop.f32.mrf.mxu0
        %v597 = vadd.f32 0.0, %v596
        %v598 = vpop.f32.mrf.mxu0
        %v599 = vadd.f32 0.0, %v598
        %v600 = vpop.f32.mrf.mxu0
        %v601 = vadd.f32 0.0, %v600
        %602 = vmatprep.mubr.bf16.mxu0 0
        %603 = vmatmul.mubr.bf16.gmra.mxu0 %v426
        %v604 = vpop.f32.mrf.mxu0
        %v605 = vadd.f32 0.0, %v604
        %v606 = vpop.f32.mrf.mxu0
        %v607 = vadd.f32 0.0, %v606
        %v608 = vpop.f32.mrf.mxu0
        %v609 = vadd.f32 0.0, %v608
        %v610 = vpop.f32.mrf.mxu0
        %v611 = vadd.f32 0.0, %v610
        %612 = vmatprep.mubr.bf16.mxu0 0
        %613 = vmatmul.mubr.bf16.gmra.mxu0 %v429
        %v614 = vpop.f32.mrf.mxu0
        %v615 = vadd.f32 0.0, %v614
        %v616 = vpop.f32.mrf.mxu0
        %v617 = vadd.f32 0.0, %v616
        %v618 = vpop.f32.mrf.mxu0
        %v619 = vadd.f32 0.0, %v618
        %v620 = vpop.f32.mrf.mxu0
        %v621 = vadd.f32 0.0, %v620
        %622 = vmatprep.mubr.bf16.mxu0 0
        %623 = vmatmul.mubr.bf16.gmra.mxu0 %v432
        %v624 = vpop.f32.mrf.mxu0
        %v625 = vadd.f32 0.0, %v624
        %v626 = vpop.f32.mrf.mxu0
        %v627 = vadd.f32 0.0, %v626
        %v628 = vpop.f32.mrf.mxu0
        %v629 = vadd.f32 0.0, %v628
        %v630 = vpop.f32.mrf.mxu0
        %v631 = vadd.f32 0.0, %v630
        %632 = vmatprep.mubr.bf16.mxu0 0
        %633 = vmatmul.mubr.bf16.gmra.mxu0 %v435
        %v634 = vpop.f32.mrf.mxu0
        %v635 = vadd.f32 0.0, %v634
        %v636 = vpop.f32.mrf.mxu0
        %v637 = vadd.f32 0.0, %v636
        %v638 = vpop.f32.mrf.mxu0
        %v639 = vadd.f32 0.0, %v638
        %v640 = vpop.f32.mrf.mxu0
        %v641 = vadd.f32 0.0, %v640
        %642 = vmatprep.mubr.bf16.mxu0 0
        %643 = vmatmul.mubr.bf16.gmra.mxu0 %v438
        %v644 = vpop.f32.mrf.mxu0
        %v645 = vadd.f32 0.0, %v644
        %v646 = vpop.f32.mrf.mxu0
        %v647 = vadd.f32 0.0, %v646
        %v648 = vpop.f32.mrf.mxu0
        %v649 = vadd.f32 0.0, %v648
        %v650 = vpop.f32.mrf.mxu0
        %v651 = vadd.f32 0.0, %v650
        %652 = vmatprep.mubr.bf16.mxu0 0
        %653 = vmatmul.mubr.bf16.gmra.mxu0 %v441
        %v654 = vpop.f32.mrf.mxu0
        %v655 = vadd.f32 0.0, %v654
        %v656 = vpop.f32.mrf.mxu0
        %v657 = vadd.f32 0.0, %v656
        %v658 = vpop.f32.mrf.mxu0
        %v659 = vadd.f32 0.0, %v658
        %v660 = vpop.f32.mrf.mxu0
        %v661 = vadd.f32 0.0, %v660
        %662 = vmatprep.mubr.bf16.mxu0 0
        %663 = vmatmul.mubr.bf16.gmra.mxu0 %v444
        %v664 = vpop.f32.mrf.mxu0
        %v665 = vadd.f32 0.0, %v664
        %v666 = vpop.f32.mrf.mxu0
        %v667 = vadd.f32 0.0, %v666
        %v668 = vpop.f32.mrf.mxu0
        %v669 = vadd.f32 0.0, %v668
        %v670 = vpop.f32.mrf.mxu0
        %v671 = vadd.f32 0.0, %v670
        %672 = vmatprep.mubr.bf16.mxu0 0
        %673 = vmatmul.mubr.bf16.gmra.mxu0 %v447
        %v674 = vpop.f32.mrf.mxu0
        %v675 = vadd.f32 0.0, %v674
        %v676 = vpop.f32.mrf.mxu0
        %v677 = vadd.f32 0.0, %v676
        %v678 = vpop.f32.mrf.mxu0
        %v679 = vadd.f32 0.0, %v678
        %v680 = vpop.f32.mrf.mxu0
        %v681 = vadd.f32 0.0, %v680
        %682 = vmatprep.mubr.bf16.mxu0 0
        %683 = vmatmul.mubr.bf16.gmra.mxu0 %v450
        %v684 = vpop.f32.mrf.mxu0
        %v685 = vadd.f32 0.0, %v684
        %v686 = vpop.f32.mrf.mxu0
        %v687 = vadd.f32 0.0, %v686
        %v688 = vpop.f32.mrf.mxu0
        %v689 = vadd.f32 0.0, %v688
        %v690 = vpop.f32.mrf.mxu0
        %v691 = vadd.f32 0.0, %v690
        %692 = vdwg.mxu0
        %v693 = vmul.f32 %v535, 0.5
        %v694 = vmul.f32 %v537, 0.5
        %v695 = vmul.f32 %v539, 0.5
        %v696 = vmul.f32 %v541, 0.5
        %v697 = vmul.f32 %v545, 0.5
        %v698 = vmul.f32 %v547, 0.5
        %v699 = vmul.f32 %v549, 0.5
        %v700 = vmul.f32 %v551, 0.5
        %v701 = vmul.f32 %v555, 0.5
        %v702 = vmul.f32 %v557, 0.5
        %v703 = vmul.f32 %v559, 0.5
        %v704 = vmul.f32 %v561, 0.5
        %v705 = vmul.f32 %v565, 0.5
        %v706 = vmul.f32 %v567, 0.5
        %v707 = vmul.f32 %v569, 0.5
        %v708 = vmul.f32 %v571, 0.5
        %v709 = vmul.f32 %v575, 0.5
        %v710 = vmul.f32 %v577, 0.5
        %v711 = vmul.f32 %v579, 0.5
        %v712 = vmul.f32 %v581, 0.5
        %v713 = vmul.f32 %v585, 0.5
        %v714 = vmul.f32 %v587, 0.5
        %v715 = vmul.f32 %v589, 0.5
        %v716 = vmul.f32 %v591, 0.5
        %v717 = vmul.f32 %v595, 0.5
        %v718 = vmul.f32 %v597, 0.5
        %v719 = vmul.f32 %v599, 0.5
        %v720 = vmul.f32 %v601, 0.5
        %v721 = vmul.f32 %v605, 0.5
        %v722 = vmul.f32 %v607, 0.5
        %v723 = vmul.f32 %v609, 0.5
        %v724 = vmul.f32 %v611, 0.5
        %v725 = vmul.f32 %v615, 0.5
        %v726 = vmul.f32 %v617, 0.5
        %v727 = vmul.f32 %v619, 0.5
        %v728 = vmul.f32 %v621, 0.5
        %v729 = vmul.f32 %v625, 0.5
        %v730 = vmul.f32 %v627, 0.5
        %v731 = vmul.f32 %v629, 0.5
        %v732 = vmul.f32 %v631, 0.5
        %v733 = vmul.f32 %v635, 0.5
        %v734 = vmul.f32 %v637, 0.5
        %v735 = vmul.f32 %v639, 0.5
        %v736 = vmul.f32 %v641, 0.5
        %v737 = vmul.f32 %v645, 0.5
        %v738 = vmul.f32 %v647, 0.5
        %v739 = vmul.f32 %v649, 0.5
        %v740 = vmul.f32 %v651, 0.5
        %v741 = vmul.f32 %v655, 0.5
        %v742 = vmul.f32 %v657, 0.5
        %v743 = vmul.f32 %v659, 0.5
        %v744 = vmul.f32 %v661, 0.5
        %v745 = vmul.f32 %v665, 0.5
        %v746 = vmul.f32 %v667, 0.5
        %v747 = vmul.f32 %v669, 0.5
        %v748 = vmul.f32 %v671, 0.5
        %v749 = vmul.f32 %v675, 0.5
        %v750 = vmul.f32 %v677, 0.5
        %v751 = vmul.f32 %v679, 0.5
        %v752 = vmul.f32 %v681, 0.5
        %v753 = vmul.f32 %v685, 0.5
        %v754 = vmul.f32 %v687, 0.5
        %v755 = vmul.f32 %v689, 0.5
        %v756 = vmul.f32 %v691, 0.5
        %v757 = vtanh.pop %v693
        %v758 = vtanh.pop %v694
        %v759 = vtanh.pop %v695
        %v760 = vtanh.pop %v696
        %v761 = vtanh.pop %v697
        %v762 = vtanh.pop %v698
        %v763 = vtanh.pop %v699
        %v764 = vtanh.pop %v700
        %v765 = vtanh.pop %v701
        %v766 = vtanh.pop %v702
        %v767 = vtanh.pop %v703
        %v768 = vtanh.pop %v704
        %v769 = vtanh.pop %v705
        %v770 = vtanh.pop %v706
        %v771 = vtanh.pop %v707
        %v772 = vtanh.pop %v708
        %v773 = vtanh.pop %v709
        %v774 = vtanh.pop %v710
        %v775 = vtanh.pop %v711
        %v776 = vtanh.pop %v712
        %v777 = vtanh.pop %v713
        %v778 = vtanh.pop %v714
        %v779 = vtanh.pop %v715
        %v780 = vtanh.pop %v716
        %v781 = vtanh.pop %v717
        %v782 = vtanh.pop %v718
        %v783 = vtanh.pop %v719
        %v784 = vtanh.pop %v720
        %v785 = vtanh.pop %v721
        %v786 = vtanh.pop %v722
        %v787 = vtanh.pop %v723
        %v788 = vtanh.pop %v724
        %v789 = vtanh.pop %v725
        %v790 = vtanh.pop %v726
        %v791 = vtanh.pop %v727
        %v792 = vtanh.pop %v728
        %v793 = vtanh.pop %v729
        %v794 = vtanh.pop %v730
        %v795 = vtanh.pop %v731
        %v796 = vtanh.pop %v732
        %v797 = vtanh.pop %v733
        %v798 = vtanh.pop %v734
        %v799 = vtanh.pop %v735
        %v800 = vtanh.pop %v736
        %v801 = vtanh.pop %v737
        %v802 = vtanh.pop %v738
        %v803 = vtanh.pop %v739
        %v804 = vtanh.pop %v740
        %v805 = vtanh.pop %v741
        %v806 = vtanh.pop %v742
        %v807 = vtanh.pop %v743
        %v808 = vtanh.pop %v744
        %v809 = vtanh.pop %v745
        %v810 = vtanh.pop %v746
        %v811 = vtanh.pop %v747
        %v812 = vtanh.pop %v748
        %v813 = vtanh.pop %v749
        %v814 = vtanh.pop %v750
        %v815 = vtanh.pop %v751
        %v816 = vtanh.pop %v752
        %v817 = vtanh.pop %v753
        %v818 = vtanh.pop %v754
        %v819 = vtanh.pop %v755
        %v820 = vtanh.pop %v756
        %v821 = vadd.f32 %v757, 1.0
        %v822 = vadd.f32 %v758, 1.0
        %v823 = vadd.f32 %v759, 1.0
        %v824 = vadd.f32 %v760, 1.0
        %v825 = vadd.f32 %v761, 1.0
        %v826 = vadd.f32 %v762, 1.0
        %v827 = vadd.f32 %v763, 1.0
        %v828 = vadd.f32 %v764, 1.0
        %v829 = vadd.f32 %v765, 1.0
        %v830 = vadd.f32 %v766, 1.0
        %v831 = vadd.f32 %v767, 1.0
        %v832 = vadd.f32 %v768, 1.0
        %v833 = vadd.f32 %v769, 1.0
        %v834 = vadd.f32 %v770, 1.0
        %v835 = vadd.f32 %v771, 1.0
        %v836 = vadd.f32 %v772, 1.0
        %v837 = vadd.f32 %v773, 1.0
        %v838 = vadd.f32 %v774, 1.0
        %v839 = vadd.f32 %v775, 1.0
        %v840 = vadd.f32 %v776, 1.0
        %v841 = vadd.f32 %v777, 1.0
        %v842 = vadd.f32 %v778, 1.0
        %v843 = vadd.f32 %v779, 1.0
        %v844 = vadd.f32 %v780, 1.0
        %v845 = vadd.f32 %v781, 1.0
        %v846 = vadd.f32 %v782, 1.0
        %v847 = vadd.f32 %v783, 1.0
        %v848 = vadd.f32 %v784, 1.0
        %v849 = vadd.f32 %v785, 1.0
        %v850 = vadd.f32 %v786, 1.0
        %v851 = vadd.f32 %v787, 1.0
        %v852 = vadd.f32 %v788, 1.0
        %v853 = vadd.f32 %v789, 1.0
        %v854 = vadd.f32 %v790, 1.0
        %v855 = vadd.f32 %v791, 1.0
        %v856 = vadd.f32 %v792, 1.0
        %v857 = vadd.f32 %v793, 1.0
        %v858 = vadd.f32 %v794, 1.0
        %v859 = vadd.f32 %v795, 1.0
        %v860 = vadd.f32 %v796, 1.0
        %v861 = vadd.f32 %v797, 1.0
        %v862 = vadd.f32 %v798, 1.0
        %v863 = vadd.f32 %v799, 1.0
        %v864 = vadd.f32 %v800, 1.0
        %v865 = vadd.f32 %v801, 1.0
        %v866 = vadd.f32 %v802, 1.0
        %v867 = vadd.f32 %v803, 1.0
        %v868 = vadd.f32 %v804, 1.0
        %v869 = vadd.f32 %v805, 1.0
        %v870 = vadd.f32 %v806, 1.0
        %v871 = vadd.f32 %v807, 1.0
        %v872 = vadd.f32 %v808, 1.0
        %v873 = vadd.f32 %v809, 1.0
        %v874 = vadd.f32 %v810, 1.0
        %v875 = vadd.f32 %v811, 1.0
        %v876 = vadd.f32 %v812, 1.0
        %v877 = vadd.f32 %v813, 1.0
        %v878 = vadd.f32 %v814, 1.0
        %v879 = vadd.f32 %v815, 1.0
        %v880 = vadd.f32 %v816, 1.0
        %v881 = vadd.f32 %v817, 1.0
        %v882 = vadd.f32 %v818, 1.0
        %v883 = vadd.f32 %v819, 1.0
        %v884 = vadd.f32 %v820, 1.0
        %v885 = vmul.f32 %v821, 0.5
        %v886 = vmul.f32 %v822, 0.5
        %v887 = vmul.f32 %v823, 0.5
        %v888 = vmul.f32 %v824, 0.5
        %v889 = vmul.f32 %v825, 0.5
        %v890 = vmul.f32 %v826, 0.5
        %v891 = vmul.f32 %v827, 0.5
        %v892 = vmul.f32 %v828, 0.5
        %v893 = vmul.f32 %v829, 0.5
        %v894 = vmul.f32 %v830, 0.5
        %v895 = vmul.f32 %v831, 0.5
        %v896 = vmul.f32 %v832, 0.5
        %v897 = vmul.f32 %v833, 0.5
        %v898 = vmul.f32 %v834, 0.5
        %v899 = vmul.f32 %v835, 0.5
        %v900 = vmul.f32 %v836, 0.5
        %v901 = vmul.f32 %v837, 0.5
        %v902 = vmul.f32 %v838, 0.5
        %v903 = vmul.f32 %v839, 0.5
        %v904 = vmul.f32 %v840, 0.5
        %v905 = vmul.f32 %v841, 0.5
        %v906 = vmul.f32 %v842, 0.5
        %v907 = vmul.f32 %v843, 0.5
        %v908 = vmul.f32 %v844, 0.5
        %v909 = vmul.f32 %v845, 0.5
        %v910 = vmul.f32 %v846, 0.5
        %v911 = vmul.f32 %v847, 0.5
        %v912 = vmul.f32 %v848, 0.5
        %v913 = vmul.f32 %v849, 0.5
        %v914 = vmul.f32 %v850, 0.5
        %v915 = vmul.f32 %v851, 0.5
        %v916 = vmul.f32 %v852, 0.5
        %v917 = vmul.f32 %v853, 0.5
        %v918 = vmul.f32 %v854, 0.5
        %v919 = vmul.f32 %v855, 0.5
        %v920 = vmul.f32 %v856, 0.5
        %v921 = vmul.f32 %v857, 0.5
        %v922 = vmul.f32 %v858, 0.5
        %v923 = vmul.f32 %v859, 0.5
        %v924 = vmul.f32 %v860, 0.5
        %v925 = vmul.f32 %v861, 0.5
        %v926 = vmul.f32 %v862, 0.5
        %v927 = vmul.f32 %v863, 0.5
        %v928 = vmul.f32 %v864, 0.5
        %v929 = vmul.f32 %v865, 0.5
        %v930 = vmul.f32 %v866, 0.5
        %v931 = vmul.f32 %v867, 0.5
        %v932 = vmul.f32 %v868, 0.5
        %v933 = vmul.f32 %v869, 0.5
        %v934 = vmul.f32 %v870, 0.5
        %v935 = vmul.f32 %v871, 0.5
        %v936 = vmul.f32 %v872, 0.5
        %v937 = vmul.f32 %v873, 0.5
        %v938 = vmul.f32 %v874, 0.5
        %v939 = vmul.f32 %v875, 0.5
        %v940 = vmul.f32 %v876, 0.5
        %v941 = vmul.f32 %v877, 0.5
        %v942 = vmul.f32 %v878, 0.5
        %v943 = vmul.f32 %v879, 0.5
        %v944 = vmul.f32 %v880, 0.5
        %v945 = vmul.f32 %v881, 0.5
        %v946 = vmul.f32 %v882, 0.5
        %v947 = vmul.f32 %v883, 0.5
        %v948 = vmul.f32 %v884, 0.5
        %949 = vst [vmem:[%s163] sm:$0xff] %v885
        %950 = vst [vmem:[%s163 + $0x8] sm:$0xff] %v886
        %951 = vst [vmem:[%s163 + $0x10] sm:$0xff] %v887
        %952 = vst [vmem:[%s163 + $0x18] sm:$0xff] %v888
        %953 = vst [vmem:[%s163 + $0x20] sm:$0xff] %v889
        %954 = vst [vmem:[%s163 + $0x28] sm:$0xff] %v890
        %955 = vst [vmem:[%s163 + $0x30] sm:$0xff] %v891
        %956 = vst [vmem:[%s163 + $0x38] sm:$0xff] %v892
        %957 = vst [vmem:[%s163 + $0x40] sm:$0xff] %v893
        %958 = vst [vmem:[%s163 + $0x48] sm:$0xff] %v894
        %959 = vst [vmem:[%s163 + $0x50] sm:$0xff] %v895
        %960 = vst [vmem:[%s163 + $0x58] sm:$0xff] %v896
        %961 = vst [vmem:[%s163 + $0x60] sm:$0xff] %v897
        %962 = vst [vmem:[%s163 + $0x68] sm:$0xff] %v898
        %963 = vst [vmem:[%s163 + $0x70] sm:$0xff] %v899
        %964 = vst [vmem:[%s163 + $0x78] sm:$0xff] %v900
        %965 = vst [vmem:[%s163 + $0x80] sm:$0xff] %v901
        %966 = vst [vmem:[%s163 + $0x88] sm:$0xff] %v902
        %967 = vst [vmem:[%s163 + $0x90] sm:$0xff] %v903
        %968 = vst [vmem:[%s163 + $0x98] sm:$0xff] %v904
        %969 = vst [vmem:[%s163 + $0xa0] sm:$0xff] %v905
        %970 = vst [vmem:[%s163 + $0xa8] sm:$0xff] %v906
        %971 = vst [vmem:[%s163 + $0xb0] sm:$0xff] %v907
        %972 = vst [vmem:[%s163 + $0xb8] sm:$0xff] %v908
        %973 = vst [vmem:[%s163 + $0xc0] sm:$0xff] %v909
        %974 = vst [vmem:[%s163 + $0xc8] sm:$0xff] %v910
        %975 = vst [vmem:[%s163 + $0xd0] sm:$0xff] %v911
        %976 = vst [vmem:[%s163 + $0xd8] sm:$0xff] %v912
        %977 = vst [vmem:[%s163 + $0xe0] sm:$0xff] %v913
        %978 = vst [vmem:[%s163 + $0xe8] sm:$0xff] %v914
        %979 = vst [vmem:[%s163 + $0xf0] sm:$0xff] %v915
        %980 = vst [vmem:[%s163 + $0xf8] sm:$0xff] %v916
        %981 = vst [vmem:[%s163 + $0x100] sm:$0xff] %v917
        %982 = vst [vmem:[%s163 + $0x108] sm:$0xff] %v918
        %983 = vst [vmem:[%s163 + $0x110] sm:$0xff] %v919
        %984 = vst [vmem:[%s163 + $0x118] sm:$0xff] %v920
        %985 = vst [vmem:[%s163 + $0x120] sm:$0xff] %v921
        %986 = vst [vmem:[%s163 + $0x128] sm:$0xff] %v922
        %987 = vst [vmem:[%s163 + $0x130] sm:$0xff] %v923
        %988 = vst [vmem:[%s163 + $0x138] sm:$0xff] %v924
        %989 = vst [vmem:[%s163 + $0x140] sm:$0xff] %v925
        %990 = vst [vmem:[%s163 + $0x148] sm:$0xff] %v926
        %991 = vst [vmem:[%s163 + $0x150] sm:$0xff] %v927
        %992 = vst [vmem:[%s163 + $0x158] sm:$0xff] %v928
        %993 = vst [vmem:[%s163 + $0x160] sm:$0xff] %v929
        %994 = vst [vmem:[%s163 + $0x168] sm:$0xff] %v930
        %995 = vst [vmem:[%s163 + $0x170] sm:$0xff] %v931
        %996 = vst [vmem:[%s163 + $0x178] sm:$0xff] %v932
        %997 = vst [vmem:[%s163 + $0x180] sm:$0xff] %v933
        %998 = vst [vmem:[%s163 + $0x188] sm:$0xff] %v934
        %999 = vst [vmem:[%s163 + $0x190] sm:$0xff] %v935
        %1000 = vst [vmem:[%s163 + $0x198] sm:$0xff] %v936
        %1001 = vst [vmem:[%s163 + $0x1a0] sm:$0xff] %v937
        %1002 = vst [vmem:[%s163 + $0x1a8] sm:$0xff] %v938
        %1003 = vst [vmem:[%s163 + $0x1b0] sm:$0xff] %v939
        %1004 = vst [vmem:[%s163 + $0x1b8] sm:$0xff] %v940
        %1005 = vst [vmem:[%s163 + $0x1c0] sm:$0xff] %v941
        %1006 = vst [vmem:[%s163 + $0x1c8] sm:$0xff] %v942
        %1007 = vst [vmem:[%s163 + $0x1d0] sm:$0xff] %v943
        %1008 = vst [vmem:[%s163 + $0x1d8] sm:$0xff] %v944
        %1009 = vst [vmem:[%s163 + $0x1e0] sm:$0xff] %v945
        %1010 = vst [vmem:[%s163 + $0x1e8] sm:$0xff] %v946
        %1011 = vst [vmem:[%s163 + $0x1f0] sm:$0xff] %v947
        %1012 = vst [vmem:[%s163 + $0x1f8] sm:$0xff] %v948
        %s1013 = sand.u32 %s87, 1
        %s1014 = sand.u32 %s87, 1
        %s1015 = smul.addr %s1014, 512
        %s1016 = scalar_lea.vmem [#allocation2], %s1015
        // Predicated region
        $region29: #{gcn_encoder_forward.7} parent=27 // pred_check
          %p1017 = pneg %p97
        $region30: #{gcn_encoder_forward.7} parent=27 // pred_check_branch
          %1019 = sbr.rel (%p1017) target = $region32
        $region31: #{gcn_encoder_forward.7} parent=27 // pred_region
          %s1020 = smul.u32 32, %s17
          %s1021 = smul.u32 2, %s18
          %s1022 = smul.addr %s1020, 6
          %s1023 = sadd.s32 %s1021, %s1022
          %s1024 = smul.addr %s1023, 8
          %s1025 = scalar_lea.vmem %s2, %s1024
          // Predicated region
          $region33: #{gcn_encoder_forward.7} parent=31 // pred_check
            _
          $region34: #{gcn_encoder_forward.7} parent=31 // pred_check_branch
            %1027 = sbr.rel (0) target = $region36
          $region35: #{gcn_encoder_forward.7} parent=31 // pred_region
            // Predicated region
            $region37: #{gcn_encoder_forward.7} parent=35 // pred_check
              _
            $region38: #{gcn_encoder_forward.7} parent=35 // pred_check_branch
              %1029 = sbr.rel (0) target = $region40
            $region39: #{gcn_encoder_forward.7} parent=35 // pred_region
              loop: start=0, step=1, limit=1
              $region41: #{gcn_encoder_forward.7} parent=39 // loop_pre_header
                _
              $region42: #{gcn_encoder_forward.7} parent=39 // loop_header
                %s1031 = sphi 0, %s1035
                %p1032 = scmp.ge.s32.totalorder %s1031, 1
                %s1036 = sphi %s1016, %s1016
                %s1037 = sphi %s1025, %s1025
              $region43: #{gcn_encoder_forward.7} parent=39 // loop_header_branch
                %1034 = sbr.rel (%p1032) target = $region47
              $region44: #{gcn_encoder_forward.7} parent=39 // loop_body
                %v1038 = vld [vmem:[%s1036] sm:$0xff]
                %1039 = vst [vmem:[%s1037] sm:$0xff] %v1038
                %v1040 = vld [vmem:[%s1036 + $0x8] sm:$0xff]
                %1041 = vst [vmem:[%s1037 + $0x8] sm:$0xff] %v1040
                %v1042 = vld [vmem:[%s1036 + $0x10] sm:$0xff]
                %1043 = vst [vmem:[%s1037 + $0x30] sm:$0xff] %v1042
                %v1044 = vld [vmem:[%s1036 + $0x18] sm:$0xff]
                %1045 = vst [vmem:[%s1037 + $0x38] sm:$0xff] %v1044
                %v1046 = vld [vmem:[%s1036 + $0x20] sm:$0xff]
                %1047 = vst [vmem:[%s1037 + $0x60] sm:$0xff] %v1046
                %v1048 = vld [vmem:[%s1036 + $0x28] sm:$0xff]
                %1049 = vst [vmem:[%s1037 + $0x68] sm:$0xff] %v1048
                %v1050 = vld [vmem:[%s1036 + $0x30] sm:$0xff]
                %1051 = vst [vmem:[%s1037 + $0x90] sm:$0xff] %v1050
                %v1052 = vld [vmem:[%s1036 + $0x38] sm:$0xff]
                %1053 = vst [vmem:[%s1037 + $0x98] sm:$0xff] %v1052
                %v1054 = vld [vmem:[%s1036 + $0x40] sm:$0xff]
                %1055 = vst [vmem:[%s1037 + $0xc0] sm:$0xff] %v1054
                %v1056 = vld [vmem:[%s1036 + $0x48] sm:$0xff]
                %1057 = vst [vmem:[%s1037 + $0xc8] sm:$0xff] %v1056
                %v1058 = vld [vmem:[%s1036 + $0x50] sm:$0xff]
                %1059 = vst [vmem:[%s1037 + $0xf0] sm:$0xff] %v1058
                %v1060 = vld [vmem:[%s1036 + $0x58] sm:$0xff]
                %1061 = vst [vmem:[%s1037 + $0xf8] sm:$0xff] %v1060
                %v1062 = vld [vmem:[%s1036 + $0x60] sm:$0xff]
                %1063 = vst [vmem:[%s1037 + $0x120] sm:$0xff] %v1062
                %v1064 = vld [vmem:[%s1036 + $0x68] sm:$0xff]
                %1065 = vst [vmem:[%s1037 + $0x128] sm:$0xff] %v1064
                %v1066 = vld [vmem:[%s1036 + $0x70] sm:$0xff]
                %1067 = vst [vmem:[%s1037 + $0x150] sm:$0xff] %v1066
                %v1068 = vld [vmem:[%s1036 + $0x78] sm:$0xff]
                %1069 = vst [vmem:[%s1037 + $0x158] sm:$0xff] %v1068
                %v1070 = vld [vmem:[%s1036 + $0x80] sm:$0xff]
                %1071 = vst [vmem:[%s1037 + $0x180] sm:$0xff] %v1070
                %v1072 = vld [vmem:[%s1036 + $0x88] sm:$0xff]
                %1073 = vst [vmem:[%s1037 + $0x188] sm:$0xff] %v1072
                %v1074 = vld [vmem:[%s1036 + $0x90] sm:$0xff]
                %1075 = vst [vmem:[%s1037 + $0x1b0] sm:$0xff] %v1074
                %v1076 = vld [vmem:[%s1036 + $0x98] sm:$0xff]
                %1077 = vst [vmem:[%s1037 + $0x1b8] sm:$0xff] %v1076
                %v1078 = vld [vmem:[%s1036 + $0xa0] sm:$0xff]
                %1079 = vst [vmem:[%s1037 + $0x1e0] sm:$0xff] %v1078
                %v1080 = vld [vmem:[%s1036 + $0xa8] sm:$0xff]
                %1081 = vst [vmem:[%s1037 + $0x1e8] sm:$0xff] %v1080
                %v1082 = vld [vmem:[%s1036 + $0xb0] sm:$0xff]
                %1083 = vst [vmem:[%s1037 + $0x210] sm:$0xff] %v1082
                %v1084 = vld [vmem:[%s1036 + $0xb8] sm:$0xff]
                %1085 = vst [vmem:[%s1037 + $0x218] sm:$0xff] %v1084
                %v1086 = vld [vmem:[%s1036 + $0xc0] sm:$0xff]
                %1087 = vst [vmem:[%s1037 + $0x240] sm:$0xff] %v1086
                %v1088 = vld [vmem:[%s1036 + $0xc8] sm:$0xff]
                %1089 = vst [vmem:[%s1037 + $0x248] sm:$0xff] %v1088
                %v1090 = vld [vmem:[%s1036 + $0xd0] sm:$0xff]
                %1091 = vst [vmem:[%s1037 + $0x270] sm:$0xff] %v1090
                %v1092 = vld [vmem:[%s1036 + $0xd8] sm:$0xff]
                %1093 = vst [vmem:[%s1037 + $0x278] sm:$0xff] %v1092
                %v1094 = vld [vmem:[%s1036 + $0xe0] sm:$0xff]
                %1095 = vst [vmem:[%s1037 + $0x2a0] sm:$0xff] %v1094
                %v1096 = vld [vmem:[%s1036 + $0xe8] sm:$0xff]
                %1097 = vst [vmem:[%s1037 + $0x2a8] sm:$0xff] %v1096
                %v1098 = vld [vmem:[%s1036 + $0xf0] sm:$0xff]
                %1099 = vst [vmem:[%s1037 + $0x2d0] sm:$0xff] %v1098
                %v1100 = vld [vmem:[%s1036 + $0xf8] sm:$0xff]
                %1101 = vst [vmem:[%s1037 + $0x2d8] sm:$0xff] %v1100
                %v1102 = vld [vmem:[%s1036 + $0x100] sm:$0xff]
                %1103 = vst [vmem:[%s1037 + $0x300] sm:$0xff] %v1102
                %v1104 = vld [vmem:[%s1036 + $0x108] sm:$0xff]
                %1105 = vst [vmem:[%s1037 + $0x308] sm:$0xff] %v1104
                %v1106 = vld [vmem:[%s1036 + $0x110] sm:$0xff]
                %1107 = vst [vmem:[%s1037 + $0x330] sm:$0xff] %v1106
                %v1108 = vld [vmem:[%s1036 + $0x118] sm:$0xff]
                %1109 = vst [vmem:[%s1037 + $0x338] sm:$0xff] %v1108
                %v1110 = vld [vmem:[%s1036 + $0x120] sm:$0xff]
                %1111 = vst [vmem:[%s1037 + $0x360] sm:$0xff] %v1110
                %v1112 = vld [vmem:[%s1036 + $0x128] sm:$0xff]
                %1113 = vst [vmem:[%s1037 + $0x368] sm:$0xff] %v1112
                %v1114 = vld [vmem:[%s1036 + $0x130] sm:$0xff]
                %1115 = vst [vmem:[%s1037 + $0x390] sm:$0xff] %v1114
                %v1116 = vld [vmem:[%s1036 + $0x138] sm:$0xff]
                %1117 = vst [vmem:[%s1037 + $0x398] sm:$0xff] %v1116
                %v1118 = vld [vmem:[%s1036 + $0x140] sm:$0xff]
                %1119 = vst [vmem:[%s1037 + $0x3c0] sm:$0xff] %v1118
                %v1120 = vld [vmem:[%s1036 + $0x148] sm:$0xff]
                %1121 = vst [vmem:[%s1037 + $0x3c8] sm:$0xff] %v1120
                %v1122 = vld [vmem:[%s1036 + $0x150] sm:$0xff]
                %1123 = vst [vmem:[%s1037 + $0x3f0] sm:$0xff] %v1122
                %v1124 = vld [vmem:[%s1036 + $0x158] sm:$0xff]
                %1125 = vst [vmem:[%s1037 + $0x3f8] sm:$0xff] %v1124
                %v1126 = vld [vmem:[%s1036 + $0x160] sm:$0xff]
                %1127 = vst [vmem:[%s1037 + $0x420] sm:$0xff] %v1126
                %v1128 = vld [vmem:[%s1036 + $0x168] sm:$0xff]
                %1129 = vst [vmem:[%s1037 + $0x428] sm:$0xff] %v1128
                %v1130 = vld [vmem:[%s1036 + $0x170] sm:$0xff]
                %1131 = vst [vmem:[%s1037 + $0x450] sm:$0xff] %v1130
                %v1132 = vld [vmem:[%s1036 + $0x178] sm:$0xff]
                %1133 = vst [vmem:[%s1037 + $0x458] sm:$0xff] %v1132
                %v1134 = vld [vmem:[%s1036 + $0x180] sm:$0xff]
                %1135 = vst [vmem:[%s1037 + $0x480] sm:$0xff] %v1134
                %v1136 = vld [vmem:[%s1036 + $0x188] sm:$0xff]
                %1137 = vst [vmem:[%s1037 + $0x488] sm:$0xff] %v1136
                %v1138 = vld [vmem:[%s1036 + $0x190] sm:$0xff]
                %1139 = vst [vmem:[%s1037 + $0x4b0] sm:$0xff] %v1138
                %v1140 = vld [vmem:[%s1036 + $0x198] sm:$0xff]
                %1141 = vst [vmem:[%s1037 + $0x4b8] sm:$0xff] %v1140
                %v1142 = vld [vmem:[%s1036 + $0x1a0] sm:$0xff]
                %1143 = vst [vmem:[%s1037 + $0x4e0] sm:$0xff] %v1142
                %v1144 = vld [vmem:[%s1036 + $0x1a8] sm:$0xff]
                %1145 = vst [vmem:[%s1037 + $0x4e8] sm:$0xff] %v1144
                %v1146 = vld [vmem:[%s1036 + $0x1b0] sm:$0xff]
                %1147 = vst [vmem:[%s1037 + $0x510] sm:$0xff] %v1146
                %v1148 = vld [vmem:[%s1036 + $0x1b8] sm:$0xff]
                %1149 = vst [vmem:[%s1037 + $0x518] sm:$0xff] %v1148
                %v1150 = vld [vmem:[%s1036 + $0x1c0] sm:$0xff]
                %1151 = vst [vmem:[%s1037 + $0x540] sm:$0xff] %v1150
                %v1152 = vld [vmem:[%s1036 + $0x1c8] sm:$0xff]
                %1153 = vst [vmem:[%s1037 + $0x548] sm:$0xff] %v1152
                %v1154 = vld [vmem:[%s1036 + $0x1d0] sm:$0xff]
                %1155 = vst [vmem:[%s1037 + $0x570] sm:$0xff] %v1154
                %v1156 = vld [vmem:[%s1036 + $0x1d8] sm:$0xff]
                %1157 = vst [vmem:[%s1037 + $0x578] sm:$0xff] %v1156
                %v1158 = vld [vmem:[%s1036 + $0x1e0] sm:$0xff]
                %1159 = vst [vmem:[%s1037 + $0x5a0] sm:$0xff] %v1158
                %v1160 = vld [vmem:[%s1036 + $0x1e8] sm:$0xff]
                %1161 = vst [vmem:[%s1037 + $0x5a8] sm:$0xff] %v1160
                %v1162 = vld [vmem:[%s1036 + $0x1f0] sm:$0xff]
                %1163 = vst [vmem:[%s1037 + $0x5d0] sm:$0xff] %v1162
                %v1164 = vld [vmem:[%s1036 + $0x1f8] sm:$0xff]
                %1165 = vst [vmem:[%s1037 + $0x5d8] sm:$0xff] %v1164
              $region45: #{gcn_encoder_forward.7} parent=39 // loop_footer
                %s1035 = sadd.s32 1, %s1031
              $region46: #{gcn_encoder_forward.7} parent=39 // loop_footer_branch
                %1030 = sbr.rel target = $region42
              $region47: #{gcn_encoder_forward.7} parent=39 // loop_exit
                _
            $region40: #{gcn_encoder_forward.7} parent=35 // pred_fallthru
              _
            // Predicated region
            $region48: #{gcn_encoder_forward.7} parent=35 // pred_check
              _
            $region49: #{gcn_encoder_forward.7} parent=35 // pred_check_branch
              %1167 = sbr.rel target = $region51
            $region50: #{gcn_encoder_forward.7} parent=35 // pred_region
              _
            $region51: #{gcn_encoder_forward.7} parent=35 // pred_fallthru
              _
          $region36: #{gcn_encoder_forward.7} parent=31 // pred_fallthru
            _
          %1168 = vnop
        $region32: #{gcn_encoder_forward.7} parent=27 // pred_fallthru
          _
      $region28: #{gcn_encoder_forward.7} parent=5 // pred_fallthru
        _
      %p1169 = scmp.le.s32.totalorder 2, %s8
      // Predicated region
      $region52: #{gcn_encoder_forward.7} parent=5 // pred_check
        %p1170 = pneg %p1169
      $region53: #{gcn_encoder_forward.7} parent=5 // pred_check_branch
        %1172 = sbr.rel (%p1170) target = $region55
      $region54: #{gcn_encoder_forward.7} parent=5 // pred_region
        %s1173 = ssub.s32 %s8, 2
        // Predicated region
        $region56: #{gcn_encoder_forward.7} parent=54 // pred_check
          %p1174 = pneg %p103
        $region57: #{gcn_encoder_forward.7} parent=54 // pred_check_branch
          %1176 = sbr.rel (%p1174) target = $region59
        $region58: #{gcn_encoder_forward.7} parent=54 // pred_region
          %s1177 = sand.u32 %s88, 1
          %s1178 = sand.u32 %s88, 1
          %s1179 = smul.addr %s1178, 512
          %s1180 = scalar_lea.vmem [#allocation2], %s1179
        $region59: #{gcn_encoder_forward.7} parent=54 // pred_fallthru
          _
      $region55: #{gcn_encoder_forward.7} parent=5 // pred_fallthru
        _
    $region6: #{gcn_encoder_forward.7} parent=1 // loop_footer
      %s12 = sadd.s32 1, %s8
    $region7: #{gcn_encoder_forward.7} parent=1 // loop_footer_branch
      %7 = sbr.rel target = $region3
    $region8: #{gcn_encoder_forward.7} parent=1 // loop_exit
      _

</llo_original>
